<compile_context>
chip_gen: v7x
topology: tpu7x:2x2x1
jax: 0.10.0
libtpu: 0.0.40
codegen_flags: <defaults>
</compile_context>

<pallas_src>
import functools
import sys

import jax
import jax.numpy as jnp
import numpy as np
from jax import lax
from jax.experimental import pallas as pl
from jax.experimental.pallas import tpu as pltpu


# ----------------------------------------------------------------------------
# Kernel: one batch image per grid step, lane-packed (H, W*C) layout.
# ----------------------------------------------------------------------------
def _inverted_residual_kernel(x_ref, w1_ref, b1_ref, wd_ref, b2_ref, w2_ref,
                              b3_ref, o_ref, *, H, W, Cexp, use_res_connect,
                              use_hw_roll):
    WC = W * Cexp
    roll = pltpu.roll if use_hw_roll else jnp.roll   # identical semantics

    # ---- 1x1 expand conv (+ folded BN1) + ReLU6: bf16 operands on the MXU ----
    x2d = x_ref[0]                                           # (H, W*Cin) f32
    h1 = jnp.dot(x2d.astype(jnp.bfloat16), w1_ref[...],
                 preferred_element_type=jnp.float32)
    h1 = jnp.clip(h1 + b1_ref[...], 0.0, 6.0)                # (H, W*Cexp) f32

    # ---- 3x3 depthwise conv (pad=1, stride=1), register-resident ----
    # Wrap-validity masks: built ONCE (hoisted out of the tap loop).
    row_idx = lax.broadcasted_iota(jnp.int32, (H, WC), 0)
    lane_idx = lax.broadcasted_iota(jnp.int32, (H, WC), 1)
    left_ok = lane_idx >= Cexp          # tap w-1: wrapped data lands in lanes [0, Cexp)
    right_ok = lane_idx < WC - Cexp     # tap w+1: wrapped data lands in last Cexp lanes
    top_ok = row_idx >= 1               # tap h-1: wrapped data lands in row 0
    bot_ok = row_idx <= H - 2           # tap h+1: wrapped data lands in row H-1

    partials = []
    for dj in range(3):
        # Column (w) shift: lane rotation by Cexp, masked once per variant.
        if dj == 0:
            c = jnp.where(left_ok, roll(h1, Cexp, axis=1), 0.0)        # h1[:, w-1]
        elif dj == 1:
            c = h1
        else:
            c = jnp.where(right_ok, roll(h1, WC - Cexp, axis=1), 0.0)  # h1[:, w+1]
        # Row (h) shifts: sublane rotation by +/-1 (positive shift amounts).
        t0 = jnp.where(top_ok, roll(c, 1, axis=0), 0.0)                # h1[h-1]
        t2 = jnp.where(bot_ok, roll(c, H - 1, axis=0), 0.0)            # h1[h+1]
        # Per-tap weights are pre-tiled W times across lanes (BN2 folded in).
        partials.append(t0 * wd_ref[dj:dj + 1, :]
                        + c * wd_ref[3 + dj:4 + dj, :]
                        + t2 * wd_ref[6 + dj:7 + dj, :])
    acc = (partials[0] + partials[1]) + partials[2]          # tree accumulation

    h2 = jnp.clip(acc + b2_ref[...], 0.0, 6.0)               # (H, W*Cexp) f32

    # ---- 1x1 project conv (+ folded BN3): MXU emits the packed layout ----
    out = jnp.dot(h2.astype(jnp.bfloat16), w2_ref[...],
                  preferred_element_type=jnp.float32)        # (H, W*Cout) f32
    out = out + b3_ref[...]
    if use_res_connect:
        out = out + x2d                                      # same packing
    # Lane-dense store: W*Cout == 128 -> full unmasked vst rows.
    o_ref[...] = out[None].astype(o_ref.dtype)


# ----------------------------------------------------------------------------
# Wrapper
# ----------------------------------------------------------------------------
def _fold_and_pack_params(params, W):
    """Fold eval-mode BN scales into conv weights and pack everything for the
    lane-dense (H, W*C) layout: 1x1 weights become block-diagonal (W blocks),
    depthwise weights / biases are tiled W times across lanes."""
    w1, s1, b1, wd, s2, b2, w2, s3, b3 = params
    eye_w = jnp.eye(W, dtype=jnp.float32)
    w1p = jnp.kron(eye_w, w1 * s1).astype(jnp.bfloat16)            # (W*Cin, W*Cexp)
    w2p = jnp.kron(eye_w, w2 * s3).astype(jnp.bfloat16)            # (W*Cexp, W*Cout)
    wdp = jnp.tile((wd * s2.reshape(1, 1, -1)).reshape(9, -1),
                   (1, W)).astype(jnp.float32)                     # (9, W*Cexp)
    b1p = jnp.tile(b1, (1, W))                                     # (1, W*Cexp)
    b2p = jnp.tile(b2, (1, W))                                     # (1, W*Cexp)
    b3p = jnp.tile(b3, (1, W))                                     # (1, W*Cout)
    return w1p, b1p, wdp, b2p, w2p, b3p


def inverted_residual_nhwc(x_nhwc, params, *, stride, use_hw_roll=True):
    """x_nhwc: (N, H, W, Cin) float32 -> (N, H, W, Cout) float32 (stride=1)."""
    N, H, W, Cin = x_nhwc.shape
    if stride != 1:
        # TODO(synk): stride=2 path (strided output packing) not implemented.
        raise NotImplementedError("Pallas InvertedResidual kernel: stride=1 only.")
    Cexp = params[0].shape[1]
    Cout = params[6].shape[1]
    use_res_connect = (stride == 1) and (Cin == Cout)
    WCin, WCexp, WCout = W * Cin, W * Cexp, W * Cout

    w1p, b1p, wdp, b2p, w2p, b3p = _fold_and_pack_params(params, W)
    x_packed = x_nhwc.reshape(N, H, WCin)                    # free XLA reshape

    kernel = functools.partial(_inverted_residual_kernel, H=H, W=W, Cexp=Cexp,
                               use_res_connect=use_res_connect,
                               use_hw_roll=use_hw_roll)

    flops = int(N * (2 * H * WCin * WCexp + 2 * H * WCexp * WCout
                     + 18 * H * WCexp))
    bytes_accessed = int(4 * (x_packed.size + N * H * WCout)
                         + 2 * (w1p.size + w2p.size)
                         + 4 * (wdp.size + b1p.size + b2p.size + b3p.size))

    out_packed = pl.pallas_call(
        kernel,
        out_shape=jax.ShapeDtypeStruct((N, H, WCout), jnp.float32),
        grid_spec=pltpu.PrefetchScalarGridSpec(
            num_scalar_prefetch=0,
            grid=(N,),
            in_specs=[
                pl.BlockSpec((1, H, WCin), lambda n: (n, 0, 0)),
                # Constant index maps: Pallas skips the re-DMA when the block
                # index is unchanged between grid steps, so weights/biases are
                # fetched once and stay VMEM-resident across the batch.
                pl.BlockSpec((WCin, WCexp), lambda n: (0, 0)),
                pl.BlockSpec((1, WCexp), lambda n: (0, 0)),
                pl.BlockSpec((9, WCexp), lambda n: (0, 0)),
                pl.BlockSpec((1, WCexp), lambda n: (0, 0)),
                pl.BlockSpec((WCexp, WCout), lambda n: (0, 0)),
                pl.BlockSpec((1, WCout), lambda n: (0, 0)),
            ],
            out_specs=pl.BlockSpec((1, H, WCout), lambda n: (n, 0, 0)),
        ),
        compiler_params=pltpu.CompilerParams(
            dimension_semantics=("parallel",),   # 2 steps -> both v7x TCs busy
            vmem_limit_bytes=32 * 1024 * 1024,
        ),
        cost_estimate=pl.CostEstimate(flops=flops, transcendentals=0,
                                      bytes_accessed=bytes_accessed),
    )(x_packed, w1p, b1p, wdp, b2p, w2p, b3p)

    return out_packed.reshape(N, H, W, Cout)


# ----------------------------------------------------------------------------
# Synthetic params (eval-mode BN folded to scale/bias) and pure-JAX reference
# ----------------------------------------------------------------------------
def make_params(key, inp, oup, expand_ratio):
    cexp = inp * expand_ratio
    ks = jax.random.split(key, 12)
    eps = 1e-5

    def fold_bn(kg, kb, km, kv, c):
        gamma = 0.5 + jax.random.uniform(kg, (c,), jnp.float32)
        beta = 0.1 * jax.random.normal(kb, (c,), jnp.float32)
        mean = 0.1 * jax.random.normal(km, (c,), jnp.float32)
        var = 0.5 + jax.random.uniform(kv, (c,), jnp.float32)
        scale = gamma / jnp.sqrt(var + eps)
        bias = beta - mean * scale
        return scale.reshape(1, c), bias.reshape(1, c)

    w1 = 0.1 * jax.random.normal(ks[0], (inp, cexp), jnp.float32)
    s1, b1 = fold_bn(ks[1], ks[2], ks[3], ks[4], cexp)
    wd = 0.1 * jax.random.normal(ks[5], (3, 3, cexp), jnp.float32)
    s2, b2 = fold_bn(ks[6], ks[7], ks[8], ks[9], cexp)
    w2 = 0.1 * jax.random.normal(ks[10], (cexp, oup), jnp.float32)
    s3, b3 = fold_bn(*jax.random.split(ks[11], 4), oup)
    return (w1, s1, b1, wd, s2, b2, w2, s3, b3)


def reference_nhwc(x, params, *, stride):
    """Pure-JAX f32 reference (same math, plain XLA ops) for validation."""
    w1, s1, b1, wd, s2, b2, w2, s3, b3 = params
    N, H, W, Cin = x.shape
    Cexp = w1.shape[1]
    h1 = jnp.clip(jnp.einsum("nhwc,ce->nhwe", x, w1) * s1[0] + b1[0], 0.0, 6.0)
    hp = jnp.pad(h1, ((0, 0), (1, 1), (1, 1), (0, 0)))
    Ho = (H + 2 - 3) // stride + 1
    Wo = (W + 2 - 3) // stride + 1
    acc = jnp.zeros((N, Ho, Wo, Cexp), jnp.float32)
    for di in range(3):
        for dj in range(3):
            patch = hp[:, di:di + H:1, dj:dj + W:1, :]
            if stride == 2:
                patch = patch[:, ::2, ::2, :]
            acc = acc + patch * wd[di, dj][None, None, None, :]
    h2 = jnp.clip(acc * s2[0] + b2[0], 0.0, 6.0)
    out = jnp.einsum("nhwe,eo->nhwo", h2, w2) * s3[0] + b3[0]
    if stride == 1 and Cin == w2.shape[1]:
        out = out + x
    return out


if __name__ == "__main__":
    # Module config: InvertedResidual(inp=8, oup=8, stride=1, expand_ratio=4)
    # -> use_res_connect = True, hidden channels = 32.  W*Cout = 128 lanes.
    N, Cin, H, W = 2, 8, 16, 16
    Cout, stride, expand_ratio = 8, 1, 4

    key = jax.random.PRNGKey(0)
    kx, kp = jax.random.split(key)
    # PyTorch forward takes NCHW; convert to the kernel's NHWC layout.
    x_nchw = jax.random.normal(kx, (N, Cin, H, W), jnp.float32)
    x_nhwc = jnp.transpose(x_nchw, (0, 2, 3, 1))

    params = make_params(kp, Cin, Cout, expand_ratio)
    ref = np.asarray(reference_nhwc(x_nhwc, params, stride=stride))

    # Primary path: pltpu.roll (XLU) shifts.  Fallback: identical kernel with
    # jnp.roll shifts -- and the fallback is logged (no silent masking).
    out_nhwc = None
    try:
        cand = jax.block_until_ready(
            inverted_residual_nhwc(x_nhwc, params, stride=stride,
                                   use_hw_roll=True))
        if np.allclose(np.asarray(cand), ref, rtol=2e-2, atol=2e-2):
            out_nhwc = cand
        else:
            print("WARNING: pltpu.roll path mismatched reference; "
                  "falling back to jnp.roll shifts", file=sys.stderr)
    except Exception as e:  # noqa: BLE001 - fallback is logged, not silent
        print(f"WARNING: pltpu.roll path failed ({type(e).__name__}: {e}); "
              "falling back to jnp.roll shifts", file=sys.stderr)
    if out_nhwc is None:
        out_nhwc = jax.block_until_ready(
            inverted_residual_nhwc(x_nhwc, params, stride=stride,
                                   use_hw_roll=False))

    out_nchw = jnp.transpose(out_nhwc, (0, 3, 1, 2))  # back to PyTorch NCHW

    np.testing.assert_allclose(np.asarray(out_nhwc), ref, rtol=2e-2, atol=2e-2)
    assert out_nchw.shape == (N, Cout, H, W)
    print("KERNEL_OK")
</pallas_src>

<mosaic_0001>
module attributes {stable_mosaic.version = 11 : i64} {
  func.func @_inverted_residual_kernel(%arg0: i32, %arg1: memref<1x16x128xf32, #tpu.memory_space<vmem>>, %arg2: memref<128x512xbf16, #tpu.memory_space<vmem>>, %arg3: memref<1x512xf32, #tpu.memory_space<vmem>>, %arg4: memref<9x512xf32, #tpu.memory_space<vmem>>, %arg5: memref<1x512xf32, #tpu.memory_space<vmem>>, %arg6: memref<512x128xbf16, #tpu.memory_space<vmem>>, %arg7: memref<1x128xf32, #tpu.memory_space<vmem>>, %arg8: memref<1x16x128xf32, #tpu.memory_space<vmem>>) attributes {dimension_semantics = [#tpu.dimension_semantics<parallel>], iteration_bounds = array<i64: 2>, scalar_prefetch = 0 : i64, scratch_operands = 0 : i64, tpu.core_type = #tpu.core_type<tc>, window_params = [{transform_indices = @transform_0, window_bounds = array<i64: 1, 16, 128>}, {pipeline_mode = #tpu.pipeline_mode<synchronous>, transform_indices = @transform_1, window_bounds = array<i64: 128, 512>}, {pipeline_mode = #tpu.pipeline_mode<synchronous>, transform_indices = @transform_2, window_bounds = array<i64: 1, 512>}, {pipeline_mode = #tpu.pipeline_mode<synchronous>, transform_indices = @transform_3, window_bounds = array<i64: 9, 512>}, {pipeline_mode = #tpu.pipeline_mode<synchronous>, transform_indices = @transform_4, window_bounds = array<i64: 1, 512>}, {pipeline_mode = #tpu.pipeline_mode<synchronous>, transform_indices = @transform_5, window_bounds = array<i64: 512, 128>}, {pipeline_mode = #tpu.pipeline_mode<synchronous>, transform_indices = @transform_6, window_bounds = array<i64: 1, 128>}, {transform_indices = @transform_7, window_bounds = array<i64: 1, 16, 128>}]} {
    %c0 = arith.constant 0 : index
    %c0_0 = arith.constant 0 : index
    %c0_1 = arith.constant 0 : index
    %0 = vector.load %arg1[%c0, %c0_0, %c0_1] : memref<1x16x128xf32, #tpu.memory_space<vmem>>, vector<1x16x128xf32>
    %1 = vector.shape_cast %0 : vector<1x16x128xf32> to vector<16x128xf32>
    %2 = arith.truncf %1 : vector<16x128xf32> to vector<16x128xbf16>
    %c0_2 = arith.constant 0 : index
    %c0_3 = arith.constant 0 : index
    %3 = vector.load %arg2[%c0_2, %c0_3] : memref<128x512xbf16, #tpu.memory_space<vmem>>, vector<128x512xbf16>
    %cst = arith.constant dense<0.000000e+00> : vector<16x512xf32>
    %4 = tpu.matmul %2, %3, %cst {dimension_numbers = #tpu.dot_dimension_numbers<[1], [0], [0], [1], [0, 0, 1, 1], [], []>} : vector<16x128xbf16>, vector<128x512xbf16>, vector<16x512xf32> -> vector<16x512xf32>
    %c0_4 = arith.constant 0 : index
    %c0_5 = arith.constant 0 : index
    %5 = vector.load %arg3[%c0_4, %c0_5] : memref<1x512xf32, #tpu.memory_space<vmem>>, vector<1x512xf32>
    %6 = vector.broadcast %5 : vector<1x512xf32> to vector<16x512xf32>
    %7 = arith.addf %4, %6 : vector<16x512xf32>
    %cst_6 = arith.constant 0.000000e+00 : f32
    %cst_7 = arith.constant 6.000000e+00 : f32
    %8 = vector.broadcast %cst_6 : f32 to vector<16x512xf32>
    %9 = arith.maximumf %8, %7 : vector<16x512xf32>
    %10 = vector.broadcast %cst_7 : f32 to vector<16x512xf32>
    %11 = arith.minimumf %10, %9 : vector<16x512xf32>
    %12 = tpu.iota {dimensions = array<i32: 0>} : vector<16x512xi32>
    %13 = tpu.iota {dimensions = array<i32: 1>} : vector<16x512xi32>
    %c32_i32 = arith.constant 32 : i32
    %14 = vector.broadcast %c32_i32 : i32 to vector<16x512xi32>
    %15 = arith.cmpi sge, %13, %14 : vector<16x512xi32>
    %c480_i32 = arith.constant 480 : i32
    %16 = vector.broadcast %c480_i32 : i32 to vector<16x512xi32>
    %17 = arith.cmpi slt, %13, %16 : vector<16x512xi32>
    %c1_i32 = arith.constant 1 : i32
    %18 = vector.broadcast %c1_i32 : i32 to vector<16x512xi32>
    %19 = arith.cmpi sge, %12, %18 : vector<16x512xi32>
    %c14_i32 = arith.constant 14 : i32
    %20 = vector.broadcast %c14_i32 : i32 to vector<16x512xi32>
    %21 = arith.cmpi sle, %12, %20 : vector<16x512xi32>
    %c32_i32_8 = arith.constant 32 : i32
    %22 = tpu.dynamic_rotate %11 by %c32_i32_8 dim 1 : vector<16x512xf32>, i32 -> vector<16x512xf32>
    %cst_9 = arith.constant 0.000000e+00 : f32
    %23 = vector.broadcast %cst_9 : f32 to vector<16x512xf32>
    %24 = arith.select %15, %22, %23 : vector<16x512xi1>, vector<16x512xf32>
    %c1_i32_10 = arith.constant 1 : i32
    %25 = tpu.dynamic_rotate %24 by %c1_i32_10 dim 0 : vector<16x512xf32>, i32 -> vector<16x512xf32>
    %cst_11 = arith.constant 0.000000e+00 : f32
    %26 = vector.broadcast %cst_11 : f32 to vector<16x512xf32>
    %27 = arith.select %19, %25, %26 : vector<16x512xi1>, vector<16x512xf32>
    %c15_i32 = arith.constant 15 : i32
    %28 = tpu.dynamic_rotate %24 by %c15_i32 dim 0 : vector<16x512xf32>, i32 -> vector<16x512xf32>
    %cst_12 = arith.constant 0.000000e+00 : f32
    %29 = vector.broadcast %cst_12 : f32 to vector<16x512xf32>
    %30 = arith.select %21, %28, %29 : vector<16x512xi1>, vector<16x512xf32>
    %c0_13 = arith.constant 0 : index
    %c0_14 = arith.constant 0 : index
    %31 = vector.load %arg4[%c0_13, %c0_14] : memref<9x512xf32, #tpu.memory_space<vmem>>, vector<1x512xf32>
    %32 = vector.broadcast %31 : vector<1x512xf32> to vector<16x512xf32>
    %33 = arith.mulf %27, %32 : vector<16x512xf32>
    %c3 = arith.constant 3 : index
    %c0_15 = arith.constant 0 : index
    %34 = vector.load %arg4[%c3, %c0_15] : memref<9x512xf32, #tpu.memory_space<vmem>>, vector<1x512xf32>
    %35 = vector.broadcast %34 : vector<1x512xf32> to vector<16x512xf32>
    %36 = arith.mulf %24, %35 : vector<16x512xf32>
    %37 = arith.addf %33, %36 : vector<16x512xf32>
    %c6 = arith.constant 6 : index
    %c0_16 = arith.constant 0 : index
    %38 = vector.load %arg4[%c6, %c0_16] : memref<9x512xf32, #tpu.memory_space<vmem>>, vector<1x512xf32>
    %39 = vector.broadcast %38 : vector<1x512xf32> to vector<16x512xf32>
    %40 = arith.mulf %30, %39 : vector<16x512xf32>
    %41 = arith.addf %37, %40 : vector<16x512xf32>
    %c1_i32_17 = arith.constant 1 : i32
    %42 = tpu.dynamic_rotate %11 by %c1_i32_17 dim 0 : vector<16x512xf32>, i32 -> vector<16x512xf32>
    %cst_18 = arith.constant 0.000000e+00 : f32
    %43 = vector.broadcast %cst_18 : f32 to vector<16x512xf32>
    %44 = arith.select %19, %42, %43 : vector<16x512xi1>, vector<16x512xf32>
    %c15_i32_19 = arith.constant 15 : i32
    %45 = tpu.dynamic_rotate %11 by %c15_i32_19 dim 0 : vector<16x512xf32>, i32 -> vector<16x512xf32>
    %cst_20 = arith.constant 0.000000e+00 : f32
    %46 = vector.broadcast %cst_20 : f32 to vector<16x512xf32>
    %47 = arith.select %21, %45, %46 : vector<16x512xi1>, vector<16x512xf32>
    %c1 = arith.constant 1 : index
    %c0_21 = arith.constant 0 : index
    %48 = vector.load %arg4[%c1, %c0_21] : memref<9x512xf32, #tpu.memory_space<vmem>>, vector<1x512xf32>
    %49 = vector.broadcast %48 : vector<1x512xf32> to vector<16x512xf32>
    %50 = arith.mulf %44, %49 : vector<16x512xf32>
    %c4 = arith.constant 4 : index
    %c0_22 = arith.constant 0 : index
    %51 = vector.load %arg4[%c4, %c0_22] : memref<9x512xf32, #tpu.memory_space<vmem>>, vector<1x512xf32>
    %52 = vector.broadcast %51 : vector<1x512xf32> to vector<16x512xf32>
    %53 = arith.mulf %11, %52 : vector<16x512xf32>
    %54 = arith.addf %50, %53 : vector<16x512xf32>
    %c7 = arith.constant 7 : index
    %c0_23 = arith.constant 0 : index
    %55 = vector.load %arg4[%c7, %c0_23] : memref<9x512xf32, #tpu.memory_space<vmem>>, vector<1x512xf32>
    %56 = vector.broadcast %55 : vector<1x512xf32> to vector<16x512xf32>
    %57 = arith.mulf %47, %56 : vector<16x512xf32>
    %58 = arith.addf %54, %57 : vector<16x512xf32>
    %c480_i32_24 = arith.constant 480 : i32
    %59 = tpu.dynamic_rotate %11 by %c480_i32_24 dim 1 : vector<16x512xf32>, i32 -> vector<16x512xf32>
    %cst_25 = arith.constant 0.000000e+00 : f32
    %60 = vector.broadcast %cst_25 : f32 to vector<16x512xf32>
    %61 = arith.select %17, %59, %60 : vector<16x512xi1>, vector<16x512xf32>
    %c1_i32_26 = arith.constant 1 : i32
    %62 = tpu.dynamic_rotate %61 by %c1_i32_26 dim 0 : vector<16x512xf32>, i32 -> vector<16x512xf32>
    %cst_27 = arith.constant 0.000000e+00 : f32
    %63 = vector.broadcast %cst_27 : f32 to vector<16x512xf32>
    %64 = arith.select %19, %62, %63 : vector<16x512xi1>, vector<16x512xf32>
    %c15_i32_28 = arith.constant 15 : i32
    %65 = tpu.dynamic_rotate %61 by %c15_i32_28 dim 0 : vector<16x512xf32>, i32 -> vector<16x512xf32>
    %cst_29 = arith.constant 0.000000e+00 : f32
    %66 = vector.broadcast %cst_29 : f32 to vector<16x512xf32>
    %67 = arith.select %21, %65, %66 : vector<16x512xi1>, vector<16x512xf32>
    %c2 = arith.constant 2 : index
    %c0_30 = arith.constant 0 : index
    %68 = vector.load %arg4[%c2, %c0_30] : memref<9x512xf32, #tpu.memory_space<vmem>>, vector<1x512xf32>
    %69 = vector.broadcast %68 : vector<1x512xf32> to vector<16x512xf32>
    %70 = arith.mulf %64, %69 : vector<16x512xf32>
    %c5 = arith.constant 5 : index
    %c0_31 = arith.constant 0 : index
    %71 = vector.load %arg4[%c5, %c0_31] : memref<9x512xf32, #tpu.memory_space<vmem>>, vector<1x512xf32>
    %72 = vector.broadcast %71 : vector<1x512xf32> to vector<16x512xf32>
    %73 = arith.mulf %61, %72 : vector<16x512xf32>
    %74 = arith.addf %70, %73 : vector<16x512xf32>
    %c8 = arith.constant 8 : index
    %c0_32 = arith.constant 0 : index
    %75 = vector.load %arg4[%c8, %c0_32] : memref<9x512xf32, #tpu.memory_space<vmem>>, vector<1x512xf32>
    %76 = vector.broadcast %75 : vector<1x512xf32> to vector<16x512xf32>
    %77 = arith.mulf %67, %76 : vector<16x512xf32>
    %78 = arith.addf %74, %77 : vector<16x512xf32>
    %79 = arith.addf %41, %58 : vector<16x512xf32>
    %80 = arith.addf %79, %78 : vector<16x512xf32>
    %c0_33 = arith.constant 0 : index
    %c0_34 = arith.constant 0 : index
    %81 = vector.load %arg5[%c0_33, %c0_34] : memref<1x512xf32, #tpu.memory_space<vmem>>, vector<1x512xf32>
    %82 = vector.broadcast %81 : vector<1x512xf32> to vector<16x512xf32>
    %83 = arith.addf %80, %82 : vector<16x512xf32>
    %cst_35 = arith.constant 0.000000e+00 : f32
    %cst_36 = arith.constant 6.000000e+00 : f32
    %84 = vector.broadcast %cst_35 : f32 to vector<16x512xf32>
    %85 = arith.maximumf %84, %83 : vector<16x512xf32>
    %86 = vector.broadcast %cst_36 : f32 to vector<16x512xf32>
    %87 = arith.minimumf %86, %85 : vector<16x512xf32>
    %88 = arith.truncf %87 : vector<16x512xf32> to vector<16x512xbf16>
    %c0_37 = arith.constant 0 : index
    %c0_38 = arith.constant 0 : index
    %89 = vector.load %arg6[%c0_37, %c0_38] : memref<512x128xbf16, #tpu.memory_space<vmem>>, vector<512x128xbf16>
    %cst_39 = arith.constant dense<0.000000e+00> : vector<16x128xf32>
    %90 = tpu.matmul %88, %89, %cst_39 {dimension_numbers = #tpu.dot_dimension_numbers<[1], [0], [0], [1], [0, 0, 1, 1], [], []>} : vector<16x512xbf16>, vector<512x128xbf16>, vector<16x128xf32> -> vector<16x128xf32>
    %c0_40 = arith.constant 0 : index
    %c0_41 = arith.constant 0 : index
    %91 = vector.load %arg7[%c0_40, %c0_41] : memref<1x128xf32, #tpu.memory_space<vmem>>, vector<1x128xf32>
    %92 = vector.broadcast %91 : vector<1x128xf32> to vector<16x128xf32>
    %93 = arith.addf %90, %92 : vector<16x128xf32>
    %94 = arith.addf %93, %1 : vector<16x128xf32>
    %95 = vector.shape_cast %94 : vector<16x128xf32> to vector<1x16x128xf32>
    %c0_42 = arith.constant 0 : index
    %c0_43 = arith.constant 0 : index
    %c0_44 = arith.constant 0 : index
    %96 = vector.load %arg8[%c0_42, %c0_43, %c0_44] : memref<1x16x128xf32, #tpu.memory_space<vmem>>, vector<1x16x128xf32>
    tpu.vector_store %arg8[%c0_42, %c0_43, %c0_44], %95 {strides = array<i32>} : memref<1x16x128xf32, #tpu.memory_space<vmem>>, vector<1x16x128xf32>,
    return
  }
  func.func @transform_0(%arg0: i32) -> (i32, i32, i32) {
    %c0_i32 = arith.constant 0 : i32
    %c0_i32_0 = arith.constant 0 : i32
    %c0_i32_1 = arith.constant 0 : i32
    return %arg0, %c0_i32, %c0_i32_0 : i32, i32, i32
  }
  func.func @transform_1(%arg0: i32) -> (i32, i32) {
    %c0_i32 = arith.constant 0 : i32
    %c0_i32_0 = arith.constant 0 : i32
    %c0_i32_1 = arith.constant 0 : i32
    return %c0_i32, %c0_i32_0 : i32, i32
  }
  func.func @transform_2(%arg0: i32) -> (i32, i32) {
    %c0_i32 = arith.constant 0 : i32
    %c0_i32_0 = arith.constant 0 : i32
    %c0_i32_1 = arith.constant 0 : i32
    return %c0_i32, %c0_i32_0 : i32, i32
  }
  func.func @transform_3(%arg0: i32) -> (i32, i32) {
    %c0_i32 = arith.constant 0 : i32
    %c0_i32_0 = arith.constant 0 : i32
    %c0_i32_1 = arith.constant 0 : i32
    return %c0_i32, %c0_i32_0 : i32, i32
  }
  func.func @transform_4(%arg0: i32) -> (i32, i32) {
    %c0_i32 = arith.constant 0 : i32
    %c0_i32_0 = arith.constant 0 : i32
    %c0_i32_1 = arith.constant 0 : i32
    return %c0_i32, %c0_i32_0 : i32, i32
  }
  func.func @transform_5(%arg0: i32) -> (i32, i32) {
    %c0_i32 = arith.constant 0 : i32
    %c0_i32_0 = arith.constant 0 : i32
    %c0_i32_1 = arith.constant 0 : i32
    return %c0_i32, %c0_i32_0 : i32, i32
  }
  func.func @transform_6(%arg0: i32) -> (i32, i32) {
    %c0_i32 = arith.constant 0 : i32
    %c0_i32_0 = arith.constant 0 : i32
    %c0_i32_1 = arith.constant 0 : i32
    return %c0_i32, %c0_i32_0 : i32, i32
  }
  func.func @transform_7(%arg0: i32) -> (i32, i32, i32) {
    %c0_i32 = arith.constant 0 : i32
    %c0_i32_0 = arith.constant 0 : i32
    %c0_i32_1 = arith.constant 0 : i32
    return %arg0, %c0_i32, %c0_i32_0 : i32, i32, i32
  }
}

module attributes {stable_mosaic.version = 11 : i64} {
  func.func @_inverted_residual_kernel(%arg0: i32, %arg1: memref<1x16x128xf32, #tpu.memory_space<vmem>>, %arg2: memref<128x512xbf16, #tpu.memory_space<vmem>>, %arg3: memref<1x512xf32, #tpu.memory_space<vmem>>, %arg4: memref<9x512xf32, #tpu.memory_space<vmem>>, %arg5: memref<1x512xf32, #tpu.memory_space<vmem>>, %arg6: memref<512x128xbf16, #tpu.memory_space<vmem>>, %arg7: memref<1x128xf32, #tpu.memory_space<vmem>>, %arg8: memref<1x16x128xf32, #tpu.memory_space<vmem>>) attributes {dimension_semantics = [#tpu.dimension_semantics<parallel>], iteration_bounds = array<i64: 2>, scalar_prefetch = 0 : i64, scratch_operands = 0 : i64, tpu.core_type = #tpu.core_type<tc>, window_params = [{transform_indices = @transform_0, window_bounds = array<i64: 1, 16, 128>}, {pipeline_mode = #tpu.pipeline_mode<synchronous>, transform_indices = @transform_1, window_bounds = array<i64: 128, 512>}, {pipeline_mode = #tpu.pipeline_mode<synchronous>, transform_indices = @transform_2, window_bounds = array<i64: 1, 512>}, {pipeline_mode = #tpu.pipeline_mode<synchronous>, transform_indices = @transform_3, window_bounds = array<i64: 9, 512>}, {pipeline_mode = #tpu.pipeline_mode<synchronous>, transform_indices = @transform_4, window_bounds = array<i64: 1, 512>}, {pipeline_mode = #tpu.pipeline_mode<synchronous>, transform_indices = @transform_5, window_bounds = array<i64: 512, 128>}, {pipeline_mode = #tpu.pipeline_mode<synchronous>, transform_indices = @transform_6, window_bounds = array<i64: 1, 128>}, {transform_indices = @transform_7, window_bounds = array<i64: 1, 16, 128>}]} {
    %c0 = arith.constant 0 : index
    %c0_0 = arith.constant 0 : index
    %c0_1 = arith.constant 0 : index
    %0 = vector.load %arg1[%c0, %c0_0, %c0_1] : memref<1x16x128xf32, #tpu.memory_space<vmem>>, vector<1x16x128xf32>
    %1 = vector.shape_cast %0 : vector<1x16x128xf32> to vector<16x128xf32>
    %2 = arith.truncf %1 : vector<16x128xf32> to vector<16x128xbf16>
    %c0_2 = arith.constant 0 : index
    %c0_3 = arith.constant 0 : index
    %3 = vector.load %arg2[%c0_2, %c0_3] : memref<128x512xbf16, #tpu.memory_space<vmem>>, vector<128x512xbf16>
    %cst = arith.constant dense<0.000000e+00> : vector<16x512xf32>
    %4 = tpu.matmul %2, %3, %cst {dimension_numbers = #tpu.dot_dimension_numbers<[1], [0], [0], [1], [0, 0, 1, 1], [], []>} : vector<16x128xbf16>, vector<128x512xbf16>, vector<16x512xf32> -> vector<16x512xf32>
    %c0_4 = arith.constant 0 : index
    %c0_5 = arith.constant 0 : index
    %5 = vector.load %arg3[%c0_4, %c0_5] : memref<1x512xf32, #tpu.memory_space<vmem>>, vector<1x512xf32>
    %6 = vector.broadcast %5 : vector<1x512xf32> to vector<16x512xf32>
    %7 = arith.addf %4, %6 : vector<16x512xf32>
    %cst_6 = arith.constant 0.000000e+00 : f32
    %cst_7 = arith.constant 6.000000e+00 : f32
    %8 = vector.broadcast %cst_6 : f32 to vector<16x512xf32>
    %9 = arith.maximumf %8, %7 : vector<16x512xf32>
    %10 = vector.broadcast %cst_7 : f32 to vector<16x512xf32>
    %11 = arith.minimumf %10, %9 : vector<16x512xf32>
    %12 = tpu.iota {dimensions = array<i32: 0>} : vector<16x512xi32>
    %13 = tpu.iota {dimensions = array<i32: 1>} : vector<16x512xi32>
    %c32_i32 = arith.constant 32 : i32
    %14 = vector.broadcast %c32_i32 : i32 to vector<16x512xi32>
    %15 = arith.cmpi sge, %13, %14 : vector<16x512xi32>
    %c480_i32 = arith.constant 480 : i32
    %16 = vector.broadcast %c480_i32 : i32 to vector<16x512xi32>
    %17 = arith.cmpi slt, %13, %16 : vector<16x512xi32>
    %c1_i32 = arith.constant 1 : i32
    %18 = vector.broadcast %c1_i32 : i32 to vector<16x512xi32>
    %19 = arith.cmpi sge, %12, %18 : vector<16x512xi32>
    %c14_i32 = arith.constant 14 : i32
    %20 = vector.broadcast %c14_i32 : i32 to vector<16x512xi32>
    %21 = arith.cmpi sle, %12, %20 : vector<16x512xi32>
    %22 = vector.extract_strided_slice %11 {offsets = [0, 480], sizes = [16, 32], strides = [1, 1]} : vector<16x512xf32> to vector<16x32xf32>
    %23 = vector.extract_strided_slice %11 {offsets = [0, 0], sizes = [16, 480], strides = [1, 1]} : vector<16x512xf32> to vector<16x480xf32>
    %24 = tpu.concatenate %22, %23 in 1 : vector<16x32xf32>, vector<16x480xf32> -> vector<16x512xf32>
    %cst_8 = arith.constant 0.000000e+00 : f32
    %25 = vector.broadcast %cst_8 : f32 to vector<16x512xf32>
    %26 = arith.select %15, %24, %25 : vector<16x512xi1>, vector<16x512xf32>
    %27 = vector.extract_strided_slice %26 {offsets = [15, 0], sizes = [1, 512], strides = [1, 1]} : vector<16x512xf32> to vector<1x512xf32>
    %28 = vector.extract_strided_slice %26 {offsets = [0, 0], sizes = [15, 512], strides = [1, 1]} : vector<16x512xf32> to vector<15x512xf32>
    %29 = tpu.concatenate %27, %28 in 0 : vector<1x512xf32>, vector<15x512xf32> -> vector<16x512xf32>
    %cst_9 = arith.constant 0.000000e+00 : f32
    %30 = vector.broadcast %cst_9 : f32 to vector<16x512xf32>
    %31 = arith.select %19, %29, %30 : vector<16x512xi1>, vector<16x512xf32>
    %32 = vector.extract_strided_slice %26 {offsets = [1, 0], sizes = [15, 512], strides = [1, 1]} : vector<16x512xf32> to vector<15x512xf32>
    %33 = vector.extract_strided_slice %26 {offsets = [0, 0], sizes = [1, 512], strides = [1, 1]} : vector<16x512xf32> to vector<1x512xf32>
    %34 = tpu.concatenate %32, %33 in 0 : vector<15x512xf32>, vector<1x512xf32> -> vector<16x512xf32>
    %cst_10 = arith.constant 0.000000e+00 : f32
    %35 = vector.broadcast %cst_10 : f32 to vector<16x512xf32>
    %36 = arith.select %21, %34, %35 : vector<16x512xi1>, vector<16x512xf32>
    %c0_11 = arith.constant 0 : index
    %c0_12 = arith.constant 0 : index
    %37 = vector.load %arg4[%c0_11, %c0_12] : memref<9x512xf32, #tpu.memory_space<vmem>>, vector<1x512xf32>
    %38 = vector.broadcast %37 : vector<1x512xf32> to vector<16x512xf32>
    %39 = arith.mulf %31, %38 : vector<16x512xf32>
    %c3 = arith.constant 3 : index
    %c0_13 = arith.constant 0 : index
    %40 = vector.load %arg4[%c3, %c0_13] : memref<9x512xf32, #tpu.memory_space<vmem>>, vector<1x512xf32>
    %41 = vector.broadcast %40 : vector<1x512xf32> to vector<16x512xf32>
    %42 = arith.mulf %26, %41 : vector<16x512xf32>
    %43 = arith.addf %39, %42 : vector<16x512xf32>
    %c6 = arith.constant 6 : index
    %c0_14 = arith.constant 0 : index
    %44 = vector.load %arg4[%c6, %c0_14] : memref<9x512xf32, #tpu.memory_space<vmem>>, vector<1x512xf32>
    %45 = vector.broadcast %44 : vector<1x512xf32> to vector<16x512xf32>
    %46 = arith.mulf %36, %45 : vector<16x512xf32>
    %47 = arith.addf %43, %46 : vector<16x512xf32>
    %48 = vector.extract_strided_slice %11 {offsets = [15, 0], sizes = [1, 512], strides = [1, 1]} : vector<16x512xf32> to vector<1x512xf32>
    %49 = vector.extract_strided_slice %11 {offsets = [0, 0], sizes = [15, 512], strides = [1, 1]} : vector<16x512xf32> to vector<15x512xf32>
    %50 = tpu.concatenate %48, %49 in 0 : vector<1x512xf32>, vector<15x512xf32> -> vector<16x512xf32>
    %cst_15 = arith.constant 0.000000e+00 : f32
    %51 = vector.broadcast %cst_15 : f32 to vector<16x512xf32>
    %52 = arith.select %19, %50, %51 : vector<16x512xi1>, vector<16x512xf32>
    %53 = vector.extract_strided_slice %11 {offsets = [1, 0], sizes = [15, 512], strides = [1, 1]} : vector<16x512xf32> to vector<15x512xf32>
    %54 = vector.extract_strided_slice %11 {offsets = [0, 0], sizes = [1, 512], strides = [1, 1]} : vector<16x512xf32> to vector<1x512xf32>
    %55 = tpu.concatenate %53, %54 in 0 : vector<15x512xf32>, vector<1x512xf32> -> vector<16x512xf32>
    %cst_16 = arith.constant 0.000000e+00 : f32
    %56 = vector.broadcast %cst_16 : f32 to vector<16x512xf32>
    %57 = arith.select %21, %55, %56 : vector<16x512xi1>, vector<16x512xf32>
    %c1 = arith.constant 1 : index
    %c0_17 = arith.constant 0 : index
    %58 = vector.load %arg4[%c1, %c0_17] : memref<9x512xf32, #tpu.memory_space<vmem>>, vector<1x512xf32>
    %59 = vector.broadcast %58 : vector<1x512xf32> to vector<16x512xf32>
    %60 = arith.mulf %52, %59 : vector<16x512xf32>
    %c4 = arith.constant 4 : index
    %c0_18 = arith.constant 0 : index
    %61 = vector.load %arg4[%c4, %c0_18] : memref<9x512xf32, #tpu.memory_space<vmem>>, vector<1x512xf32>
    %62 = vector.broadcast %61 : vector<1x512xf32> to vector<16x512xf32>
    %63 = arith.mulf %11, %62 : vector<16x512xf32>
    %64 = arith.addf %60, %63 : vector<16x512xf32>
    %c7 = arith.constant 7 : index
    %c0_19 = arith.constant 0 : index
    %65 = vector.load %arg4[%c7, %c0_19] : memref<9x512xf32, #tpu.memory_space<vmem>>, vector<1x512xf32>
    %66 = vector.broadcast %65 : vector<1x512xf32> to vector<16x512xf32>
    %67 = arith.mulf %57, %66 : vector<16x512xf32>
    %68 = arith.addf %64, %67 : vector<16x512xf32>
    %69 = vector.extract_strided_slice %11 {offsets = [0, 32], sizes = [16, 480], strides = [1, 1]} : vector<16x512xf32> to vector<16x480xf32>
    %70 = vector.extract_strided_slice %11 {offsets = [0, 0], sizes = [16, 32], strides = [1, 1]} : vector<16x512xf32> to vector<16x32xf32>
    %71 = tpu.concatenate %69, %70 in 1 : vector<16x480xf32>, vector<16x32xf32> -> vector<16x512xf32>
    %cst_20 = arith.constant 0.000000e+00 : f32
    %72 = vector.broadcast %cst_20 : f32 to vector<16x512xf32>
    %73 = arith.select %17, %71, %72 : vector<16x512xi1>, vector<16x512xf32>
    %74 = vector.extract_strided_slice %73 {offsets = [15, 0], sizes = [1, 512], strides = [1, 1]} : vector<16x512xf32> to vector<1x512xf32>
    %75 = vector.extract_strided_slice %73 {offsets = [0, 0], sizes = [15, 512], strides = [1, 1]} : vector<16x512xf32> to vector<15x512xf32>
    %76 = tpu.concatenate %74, %75 in 0 : vector<1x512xf32>, vector<15x512xf32> -> vector<16x512xf32>
    %cst_21 = arith.constant 0.000000e+00 : f32
    %77 = vector.broadcast %cst_21 : f32 to vector<16x512xf32>
    %78 = arith.select %19, %76, %77 : vector<16x512xi1>, vector<16x512xf32>
    %79 = vector.extract_strided_slice %73 {offsets = [1, 0], sizes = [15, 512], strides = [1, 1]} : vector<16x512xf32> to vector<15x512xf32>
    %80 = vector.extract_strided_slice %73 {offsets = [0, 0], sizes = [1, 512], strides = [1, 1]} : vector<16x512xf32> to vector<1x512xf32>
    %81 = tpu.concatenate %79, %80 in 0 : vector<15x512xf32>, vector<1x512xf32> -> vector<16x512xf32>
    %cst_22 = arith.constant 0.000000e+00 : f32
    %82 = vector.broadcast %cst_22 : f32 to vector<16x512xf32>
    %83 = arith.select %21, %81, %82 : vector<16x512xi1>, vector<16x512xf32>
    %c2 = arith.constant 2 : index
    %c0_23 = arith.constant 0 : index
    %84 = vector.load %arg4[%c2, %c0_23] : memref<9x512xf32, #tpu.memory_space<vmem>>, vector<1x512xf32>
    %85 = vector.broadcast %84 : vector<1x512xf32> to vector<16x512xf32>
    %86 = arith.mulf %78, %85 : vector<16x512xf32>
    %c5 = arith.constant 5 : index
    %c0_24 = arith.constant 0 : index
    %87 = vector.load %arg4[%c5, %c0_24] : memref<9x512xf32, #tpu.memory_space<vmem>>, vector<1x512xf32>
    %88 = vector.broadcast %87 : vector<1x512xf32> to vector<16x512xf32>
    %89 = arith.mulf %73, %88 : vector<16x512xf32>
    %90 = arith.addf %86, %89 : vector<16x512xf32>
    %c8 = arith.constant 8 : index
    %c0_25 = arith.constant 0 : index
    %91 = vector.load %arg4[%c8, %c0_25] : memref<9x512xf32, #tpu.memory_space<vmem>>, vector<1x512xf32>
    %92 = vector.broadcast %91 : vector<1x512xf32> to vector<16x512xf32>
    %93 = arith.mulf %83, %92 : vector<16x512xf32>
    %94 = arith.addf %90, %93 : vector<16x512xf32>
    %95 = arith.addf %47, %68 : vector<16x512xf32>
    %96 = arith.addf %95, %94 : vector<16x512xf32>
    %c0_26 = arith.constant 0 : index
    %c0_27 = arith.constant 0 : index
    %97 = vector.load %arg5[%c0_26, %c0_27] : memref<1x512xf32, #tpu.memory_space<vmem>>, vector<1x512xf32>
    %98 = vector.broadcast %97 : vector<1x512xf32> to vector<16x512xf32>
    %99 = arith.addf %96, %98 : vector<16x512xf32>
    %cst_28 = arith.constant 0.000000e+00 : f32
    %cst_29 = arith.constant 6.000000e+00 : f32
    %100 = vector.broadcast %cst_28 : f32 to vector<16x512xf32>
    %101 = arith.maximumf %100, %99 : vector<16x512xf32>
    %102 = vector.broadcast %cst_29 : f32 to vector<16x512xf32>
    %103 = arith.minimumf %102, %101 : vector<16x512xf32>
    %104 = arith.truncf %103 : vector<16x512xf32> to vector<16x512xbf16>
    %c0_30 = arith.constant 0 : index
    %c0_31 = arith.constant 0 : index
    %105 = vector.load %arg6[%c0_30, %c0_31] : memref<512x128xbf16, #tpu.memory_space<vmem>>, vector<512x128xbf16>
    %cst_32 = arith.constant dense<0.000000e+00> : vector<16x128xf32>
    %106 = tpu.matmul %104, %105, %cst_32 {dimension_numbers = #tpu.dot_dimension_numbers<[1], [0], [0], [1], [0, 0, 1, 1], [], []>} : vector<16x512xbf16>, vector<512x128xbf16>, vector<16x128xf32> -> vector<16x128xf32>
    %c0_33 = arith.constant 0 : index
    %c0_34 = arith.constant 0 : index
    %107 = vector.load %arg7[%c0_33, %c0_34] : memref<1x128xf32, #tpu.memory_space<vmem>>, vector<1x128xf32>
    %108 = vector.broadcast %107 : vector<1x128xf32> to vector<16x128xf32>
    %109 = arith.addf %106, %108 : vector<16x128xf32>
    %110 = arith.addf %109, %1 : vector<16x128xf32>
    %111 = vector.shape_cast %110 : vector<16x128xf32> to vector<1x16x128xf32>
    %c0_35 = arith.constant 0 : index
    %c0_36 = arith.constant 0 : index
    %c0_37 = arith.constant 0 : index
    %112 = vector.load %arg8[%c0_35, %c0_36, %c0_37] : memref<1x16x128xf32, #tpu.memory_space<vmem>>, vector<1x16x128xf32>
    tpu.vector_store %arg8[%c0_35, %c0_36, %c0_37], %111 {strides = array<i32>} : memref<1x16x128xf32, #tpu.memory_space<vmem>>, vector<1x16x128xf32>,
    return
  }
  func.func @transform_0(%arg0: i32) -> (i32, i32, i32) {
    %c0_i32 = arith.constant 0 : i32
    %c0_i32_0 = arith.constant 0 : i32
    %c0_i32_1 = arith.constant 0 : i32
    return %arg0, %c0_i32, %c0_i32_0 : i32, i32, i32
  }
  func.func @transform_1(%arg0: i32) -> (i32, i32) {
    %c0_i32 = arith.constant 0 : i32
    %c0_i32_0 = arith.constant 0 : i32
    %c0_i32_1 = arith.constant 0 : i32
    return %c0_i32, %c0_i32_0 : i32, i32
  }
  func.func @transform_2(%arg0: i32) -> (i32, i32) {
    %c0_i32 = arith.constant 0 : i32
    %c0_i32_0 = arith.constant 0 : i32
    %c0_i32_1 = arith.constant 0 : i32
    return %c0_i32, %c0_i32_0 : i32, i32
  }
  func.func @transform_3(%arg0: i32) -> (i32, i32) {
    %c0_i32 = arith.constant 0 : i32
    %c0_i32_0 = arith.constant 0 : i32
    %c0_i32_1 = arith.constant 0 : i32
    return %c0_i32, %c0_i32_0 : i32, i32
  }
  func.func @transform_4(%arg0: i32) -> (i32, i32) {
    %c0_i32 = arith.constant 0 : i32
    %c0_i32_0 = arith.constant 0 : i32
    %c0_i32_1 = arith.constant 0 : i32
    return %c0_i32, %c0_i32_0 : i32, i32
  }
  func.func @transform_5(%arg0: i32) -> (i32, i32) {
    %c0_i32 = arith.constant 0 : i32
    %c0_i32_0 = arith.constant 0 : i32
    %c0_i32_1 = arith.constant 0 : i32
    return %c0_i32, %c0_i32_0 : i32, i32
  }
  func.func @transform_6(%arg0: i32) -> (i32, i32) {
    %c0_i32 = arith.constant 0 : i32
    %c0_i32_0 = arith.constant 0 : i32
    %c0_i32_1 = arith.constant 0 : i32
    return %c0_i32, %c0_i32_0 : i32, i32
  }
  func.func @transform_7(%arg0: i32) -> (i32, i32, i32) {
    %c0_i32 = arith.constant 0 : i32
    %c0_i32_0 = arith.constant 0 : i32
    %c0_i32_1 = arith.constant 0 : i32
    return %arg0, %c0_i32, %c0_i32_0 : i32, i32, i32
  }
}

</mosaic_0001>

<llo_original>
// kernel: tpu_custom_call.1
$region0: #{tpu_custom_call.1}
  #allocation0 [shape = 'u32[]', space=smem, size = 0x4, offset = 0x4, fixed_abs, tag = 'smem constant byte address 0x4 - core index']
  #allocation1 [shape = 'u32[144,128]{1,0:T(1,128)}', space=vmem, size = 0x12000, scoped, tag = 'internal scratch']
  %s0 = inlined_call_operand.hbm [shape: f32[2,16,128], index: 0, kind: input, shape index: {}]
  %s1 = inlined_call_operand.hbm [shape: bf16[128,512], index: 1, kind: input, shape index: {}]
  %s2 = inlined_call_operand.vmem [shape: f32[1,512], index: 2, kind: input, shape index: {}]
  %s3 = inlined_call_operand.hbm [shape: f32[9,512], index: 3, kind: input, shape index: {}]
  %s4 = inlined_call_operand.vmem [shape: f32[1,512], index: 4, kind: input, shape index: {}]
  %s5 = inlined_call_operand.hbm [shape: bf16[512,128], index: 5, kind: input, shape index: {}]
  %s6 = inlined_call_operand.vmem [shape: f32[1,128], index: 6, kind: input, shape index: {}]
  %s7 = inlined_call_operand.hbm [shape: f32[2,16,128], index: 7, kind: output, shape index: {}]
  %s8 = sld [smem:[#allocation0]]
  $region77: #{tpu_custom_call.1} parent=0
    _
  %s10 = ssub.s32 1, %s8
  %s11 = scalar_select 0, %s10, %s8
  $region1: #{tpu_custom_call.1} parent=0
    #allocation2 [shape = 'u8[16384]{0}', space=vmem, size = 0x4000, scoped, tag = 'input window, operand 0']
    #allocation3 [shape = 's32[2]{0}', space=sflag, size = 0x8, scoped, tag = 'scoped memory for tpu_custom_call.1']
    #allocation4 [shape = 's32[2]{0}', space=sflag, size = 0x8, scoped, tag = 'scoped memory for tpu_custom_call.1']
    #allocation5 [shape = 'u8[131072]{0}', space=vmem, size = 0x20000, scoped, tag = 'input window, operand 1, single buffered']
    #allocation6 [shape = 's32[1]{0}', space=sflag, size = 0x4, scoped, tag = 'scoped memory for tpu_custom_call.1']
    #allocation7 [shape = 'u8[32768]{0}', space=vmem, size = 0x8000, scoped, tag = 'input window, operand 3, single buffered']
    #allocation8 [shape = 'u8[131072]{0}', space=vmem, size = 0x20000, scoped, tag = 'input window, operand 5, single buffered']
    #allocation9 [shape = 's32[1]{0}', space=sflag, size = 0x4, scoped, tag = 'scoped memory for tpu_custom_call.1']
    #allocation10 [shape = 'u8[16384]{0}', space=vmem, size = 0x4000, scoped, tag = 'output window, operand 0']
    %12 = vsyncpa [#allocation3], 0
    %s13 = scalar_lea.sflag [#allocation3], 1
    %14 = vsyncpa %s13, 0
    %15 = vsyncpa [#allocation6], 0
    %16 = vsyncpa [#allocation9], 0
    %17 = vsyncpa [#allocation4], 0
    %s18 = scalar_lea.sflag [#allocation4], 1
    %19 = vsyncpa %s18, 0
    loop: start=0, step=1, limit=4
    $region2: #{tpu_custom_call.1} parent=1 // loop_pre_header
      _
    $region3: #{tpu_custom_call.1} parent=1 // loop_header
      %s21 = sphi 0, %s25
      %p22 = scmp.ge.s32.totalorder %s21, 4
      %s31 = sphi 0, %s33
      %s34 = sphi 0, %s31
      %s35 = sphi 0, %s34
      %s51 = sphi 0, %s35
      %s55 = sphi 0, %s55
      %s57 = sphi 0, %s55
      %s58 = sphi 0, %s57
      %s72 = sphi 0, %s58
      %s76 = sphi 0, %s76
      %s78 = sphi 0, %s76
      %s79 = sphi 0, %s78
      %s93 = sphi 0, %s79
      %s97 = sphi 0, %s97
      %s99 = sphi 0, %s97
      %s100 = sphi 0, %s99
      %s114 = sphi 0, %s100
      %s118 = sphi 0, %s118
      %s120 = sphi 0, %s118
      %s121 = sphi 0, %s120
      %s135 = sphi 0, %s121
      %s139 = sphi 0, %s139
      %s141 = sphi 0, %s139
      %s142 = sphi 0, %s141
      %s156 = sphi 0, %s142
      %s160 = sphi 0, %s160
      %s162 = sphi 0, %s160
      %s163 = sphi 0, %s162
      %s177 = sphi 0, %s163
      %s183 = sphi 0, %s185
      %s186 = sphi 0, %s183
      %s187 = sphi 0, %s186
      %s203 = sphi 0, %s187
    $region4: #{tpu_custom_call.1} parent=1 // loop_header_branch
      %24 = sbr.rel (%p22) target = $region8
    $region5: #{tpu_custom_call.1} parent=1 // loop_body
      %s26 = ssub.s32 %s21, 1
      %s27 = ssub.s32 %s21, 2
      %s28 = sadd.s32 %s21, 1
      %s29 = ssub.s32 %s21, %s28
      %p30 = scmp.eq.s32.totalorder %s29, 0
      %s32 = sadd.s32 %s31, 1
      %s33 = scalar_select %p30, %s31, %s32
      %p36 = pneg %p30
      %p37 = scmp.eq.s32.totalorder %s21, 1
      %p38 = por %p36, %p37
      %p39 = scmp.ne.s32.totalorder %s31, %s34
      %p40 = scmp.eq.s32.totalorder %s21, 0
      %p41 = por %p39, %p40
      %p42 = scmp.ne.s32.totalorder %s31, %s34
      %p43 = scmp.eq.s32.totalorder %s26, 1
      %p44 = por %p42, %p43
      %p45 = scmp.ne.s32.totalorder %s34, %s35
      %p46 = scmp.eq.s32.totalorder %s26, 0
      %p47 = por %p45, %p46
      %p48 = scmp.ne.s32.totalorder %s34, %s35
      %p49 = scmp.eq.s32.totalorder %s27, 1
      %p50 = por %p48, %p49
      %p52 = scmp.ne.s32.totalorder %s35, %s51
      %p53 = scmp.eq.s32.totalorder %s27, 0
      %p54 = por %p52, %p53
      %s56 = sadd.s32 %s55, 1
      %p59 = scmp.eq.s32.totalorder %s21, 1
      %p60 = scmp.ne.s32.totalorder %s55, %s57
      %p61 = scmp.eq.s32.totalorder %s21, 0
      %p62 = por %p60, %p61
      %p63 = scmp.ne.s32.totalorder %s55, %s57
      %p64 = scmp.eq.s32.totalorder %s26, 1
      %p65 = por %p63, %p64
      %p66 = scmp.ne.s32.totalorder %s57, %s58
      %p67 = scmp.eq.s32.totalorder %s26, 0
      %p68 = por %p66, %p67
      %p69 = scmp.ne.s32.totalorder %s57, %s58
      %p70 = scmp.eq.s32.totalorder %s27, 1
      %p71 = por %p69, %p70
      %p73 = scmp.ne.s32.totalorder %s58, %s72
      %p74 = scmp.eq.s32.totalorder %s27, 0
      %p75 = por %p73, %p74
      %s77 = sadd.s32 %s76, 1
      %p80 = scmp.eq.s32.totalorder %s21, 1
      %p81 = scmp.ne.s32.totalorder %s76, %s78
      %p82 = scmp.eq.s32.totalorder %s21, 0
      %p83 = por %p81, %p82
      %p84 = scmp.ne.s32.totalorder %s76, %s78
      %p85 = scmp.eq.s32.totalorder %s26, 1
      %p86 = por %p84, %p85
      %p87 = scmp.ne.s32.totalorder %s78, %s79
      %p88 = scmp.eq.s32.totalorder %s26, 0
      %p89 = por %p87, %p88
      %p90 = scmp.ne.s32.totalorder %s78, %s79
      %p91 = scmp.eq.s32.totalorder %s27, 1
      %p92 = por %p90, %p91
      %p94 = scmp.ne.s32.totalorder %s79, %s93
      %p95 = scmp.eq.s32.totalorder %s27, 0
      %p96 = por %p94, %p95
      %s98 = sadd.s32 %s97, 1
      %p101 = scmp.eq.s32.totalorder %s21, 1
      %p102 = scmp.ne.s32.totalorder %s97, %s99
      %p103 = scmp.eq.s32.totalorder %s21, 0
      %p104 = por %p102, %p103
      %p105 = scmp.ne.s32.totalorder %s97, %s99
      %p106 = scmp.eq.s32.totalorder %s26, 1
      %p107 = por %p105, %p106
      %p108 = scmp.ne.s32.totalorder %s99, %s100
      %p109 = scmp.eq.s32.totalorder %s26, 0
      %p110 = por %p108, %p109
      %p111 = scmp.ne.s32.totalorder %s99, %s100
      %p112 = scmp.eq.s32.totalorder %s27, 1
      %p113 = por %p111, %p112
      %p115 = scmp.ne.s32.totalorder %s100, %s114
      %p116 = scmp.eq.s32.totalorder %s27, 0
      %p117 = por %p115, %p116
      %s119 = sadd.s32 %s118, 1
      %p122 = scmp.eq.s32.totalorder %s21, 1
      %p123 = scmp.ne.s32.totalorder %s118, %s120
      %p124 = scmp.eq.s32.totalorder %s21, 0
      %p125 = por %p123, %p124
      %p126 = scmp.ne.s32.totalorder %s118, %s120
      %p127 = scmp.eq.s32.totalorder %s26, 1
      %p128 = por %p126, %p127
      %p129 = scmp.ne.s32.totalorder %s120, %s121
      %p130 = scmp.eq.s32.totalorder %s26, 0
      %p131 = por %p129, %p130
      %p132 = scmp.ne.s32.totalorder %s120, %s121
      %p133 = scmp.eq.s32.totalorder %s27, 1
      %p134 = por %p132, %p133
      %p136 = scmp.ne.s32.totalorder %s121, %s135
      %p137 = scmp.eq.s32.totalorder %s27, 0
      %p138 = por %p136, %p137
      %s140 = sadd.s32 %s139, 1
      %p143 = scmp.eq.s32.totalorder %s21, 1
      %p144 = scmp.ne.s32.totalorder %s139, %s141
      %p145 = scmp.eq.s32.totalorder %s21, 0
      %p146 = por %p144, %p145
      %p147 = scmp.ne.s32.totalorder %s139, %s141
      %p148 = scmp.eq.s32.totalorder %s26, 1
      %p149 = por %p147, %p148
      %p150 = scmp.ne.s32.totalorder %s141, %s142
      %p151 = scmp.eq.s32.totalorder %s26, 0
      %p152 = por %p150, %p151
      %p153 = scmp.ne.s32.totalorder %s141, %s142
      %p154 = scmp.eq.s32.totalorder %s27, 1
      %p155 = por %p153, %p154
      %p157 = scmp.ne.s32.totalorder %s142, %s156
      %p158 = scmp.eq.s32.totalorder %s27, 0
      %p159 = por %p157, %p158
      %s161 = sadd.s32 %s160, 1
      %p164 = scmp.eq.s32.totalorder %s21, 1
      %p165 = scmp.ne.s32.totalorder %s160, %s162
      %p166 = scmp.eq.s32.totalorder %s21, 0
      %p167 = por %p165, %p166
      %p168 = scmp.ne.s32.totalorder %s160, %s162
      %p169 = scmp.eq.s32.totalorder %s26, 1
      %p170 = por %p168, %p169
      %p171 = scmp.ne.s32.totalorder %s162, %s163
      %p172 = scmp.eq.s32.totalorder %s26, 0
      %p173 = por %p171, %p172
      %p174 = scmp.ne.s32.totalorder %s162, %s163
      %p175 = scmp.eq.s32.totalorder %s27, 1
      %p176 = por %p174, %p175
      %p178 = scmp.ne.s32.totalorder %s163, %s177
      %p179 = scmp.eq.s32.totalorder %s27, 0
      %p180 = por %p178, %p179
      %s181 = ssub.s32 %s21, %s28
      %p182 = scmp.eq.s32.totalorder %s181, 0
      %s184 = sadd.s32 %s183, 1
      %s185 = scalar_select %p182, %s183, %s184
      %p188 = pneg %p182
      %p189 = scmp.eq.s32.totalorder %s21, 1
      %p190 = por %p188, %p189
      %p191 = scmp.ne.s32.totalorder %s183, %s186
      %p192 = scmp.eq.s32.totalorder %s21, 0
      %p193 = por %p191, %p192
      %p194 = scmp.ne.s32.totalorder %s183, %s186
      %p195 = scmp.eq.s32.totalorder %s26, 1
      %p196 = por %p194, %p195
      %p197 = scmp.ne.s32.totalorder %s186, %s187
      %p198 = scmp.eq.s32.totalorder %s26, 0
      %p199 = por %p197, %p198
      %p200 = scmp.ne.s32.totalorder %s186, %s187
      %p201 = scmp.eq.s32.totalorder %s27, 1
      %p202 = por %p200, %p201
      %p204 = scmp.ne.s32.totalorder %s187, %s203
      %p205 = scmp.eq.s32.totalorder %s27, 0
      %p206 = por %p204, %p205
      %p207 = scmp.le.s32.totalorder 1, %s21
      %p208 = scmp.lt.s32.totalorder %s21, 3
      %p209 = pnand %p207, %p208
      %p210 = pneg %p209
      // Predicated region
      $region9: #{tpu_custom_call.1} parent=5 // pred_check
        _
      $region10: #{tpu_custom_call.1} parent=5 // pred_check_branch
        %212 = sbr.rel (%p209) target = $region12
      $region11: #{tpu_custom_call.1} parent=5 // pred_region
        %s213 = ssub.s32 %s21, 1
        // Predicated region
        $region13: #{tpu_custom_call.1} parent=11 // pred_check
          %p214 = pneg %p68
        $region14: #{tpu_custom_call.1} parent=11 // pred_check_branch
          %216 = sbr.rel (%p214) target = $region16
        $region15: #{tpu_custom_call.1} parent=11 // pred_region
          %s218 = ssub.s32 4096, 4096
          %219 = vsyncadd [#allocation6], %s218
          %s220 = sshll.u32 [#allocation5], 4
          %s221 = int_to_ptr.vmem [resolvable:$true] %s220
          %226 = dma.hbm_to_vmem [thread:$0]  %s1, 4096, %s221, [#allocation6], 256, 256, 16
        $region16: #{tpu_custom_call.1} parent=11 // pred_fallthru
          _
        // Predicated region
        $region17: #{tpu_custom_call.1} parent=11 // pred_check
          %p227 = pneg %p89
        $region18: #{tpu_custom_call.1} parent=11 // pred_check_branch
          %229 = sbr.rel (%p227) target = $region20
        $region19: #{tpu_custom_call.1} parent=11 // pred_region
          _
        $region20: #{tpu_custom_call.1} parent=11 // pred_fallthru
          _
        // Predicated region
        $region21: #{tpu_custom_call.1} parent=11 // pred_check
          %p230 = pneg %p110
        $region22: #{tpu_custom_call.1} parent=11 // pred_check_branch
          %232 = sbr.rel (%p230) target = $region24
        $region23: #{tpu_custom_call.1} parent=11 // pred_region
          %s234 = ssub.s32 1024, 1024
          %235 = vsyncadd [#allocation6], %s234
          %s236 = sshll.u32 [#allocation7], 4
          %s237 = int_to_ptr.vmem [resolvable:$true] %s236
          %242 = dma.hbm_to_vmem [thread:$0]  %s3, 1024, %s237, [#allocation6], 512, 512, 32
        $region24: #{tpu_custom_call.1} parent=11 // pred_fallthru
          _
        // Predicated region
        $region25: #{tpu_custom_call.1} parent=11 // pred_check
          %p243 = pneg %p131
        $region26: #{tpu_custom_call.1} parent=11 // pred_check_branch
          %245 = sbr.rel (%p243) target = $region28
        $region27: #{tpu_custom_call.1} parent=11 // pred_region
          _
        $region28: #{tpu_custom_call.1} parent=11 // pred_fallthru
          _
        // Predicated region
        $region29: #{tpu_custom_call.1} parent=11 // pred_check
          %p246 = pneg %p152
        $region30: #{tpu_custom_call.1} parent=11 // pred_check_branch
          %248 = sbr.rel (%p246) target = $region32
        $region31: #{tpu_custom_call.1} parent=11 // pred_region
          %s250 = ssub.s32 4096, 4096
          %251 = vsyncadd [#allocation9], %s250
          %s252 = sshll.u32 [#allocation8], 4
          %s253 = int_to_ptr.vmem [resolvable:$true] %s252
          %258 = dma.hbm_to_vmem [thread:$0]  %s5, 4096, %s253, [#allocation9], 64, 64, 4
        $region32: #{tpu_custom_call.1} parent=11 // pred_fallthru
          _
        // Predicated region
        $region33: #{tpu_custom_call.1} parent=11 // pred_check
          %p259 = pneg %p173
        $region34: #{tpu_custom_call.1} parent=11 // pred_check_branch
          %261 = sbr.rel (%p259) target = $region36
        $region35: #{tpu_custom_call.1} parent=11 // pred_region
          _
        $region36: #{tpu_custom_call.1} parent=11 // pred_fallthru
          _
      $region12: #{tpu_custom_call.1} parent=5 // pred_fallthru
        _
      %p262 = scmp.lt.s32.totalorder %s21, 2
      // Predicated region
      $region37: #{tpu_custom_call.1} parent=5 // pred_check
        %p263 = pneg %p262
      $region38: #{tpu_custom_call.1} parent=5 // pred_check_branch
        %265 = sbr.rel (%p263) target = $region40
      $region39: #{tpu_custom_call.1} parent=5 // pred_region
        // Predicated region
        $region41: #{tpu_custom_call.1} parent=39 // pred_check
          %p266 = pneg %p41
        $region42: #{tpu_custom_call.1} parent=39 // pred_check_branch
          %268 = sbr.rel (%p266) target = $region44
        $region43: #{tpu_custom_call.1} parent=39 // pred_region
          %s269 = sand.u32 %s31, 1
          %s270 = scalar_lea.sflag [#allocation3], %s269
          %s271 = sand.u32 %s31, 1
          %s272 = smul.addr %s271, 16
          %s273 = scalar_lea.vmem [#allocation2], %s272
          %s275 = ssub.s32 256, 256
          %276 = vsyncadd %s270, %s275
          %s277 = smul.addr %s21, 2
          %s278 = smul.addr %s277, 128
          %s279 = scalar_lea.hbm %s0, %s278
          %s280 = sshll.u32 %s273, 4
          %s281 = int_to_ptr.vmem [resolvable:$true] %s280
          %286 = dma.hbm_to_vmem [thread:$0]  %s279, 256, %s281, %s270, 128, 128, 8
        $region44: #{tpu_custom_call.1} parent=39 // pred_fallthru
          _
      $region40: #{tpu_custom_call.1} parent=5 // pred_fallthru
        _
      %p287 = scmp.le.s32.totalorder 1, %s21
      %p288 = scmp.lt.s32.totalorder %s21, 3
      %p289 = pnand %p287, %p288
      %p290 = pneg %p289
      // Predicated region
      $region45: #{tpu_custom_call.1} parent=5 // pred_check
        _
      $region46: #{tpu_custom_call.1} parent=5 // pred_check_branch
        %292 = sbr.rel (%p289) target = $region48
      $region47: #{tpu_custom_call.1} parent=5 // pred_region
        %s293 = ssub.s32 %s21, 1
        %s294 = sand.u32 %s34, 1
        %s295 = scalar_lea.sflag [#allocation3], %s294
        %s296 = sand.u32 %s34, 1
        %s297 = smul.addr %s296, 16
        %s298 = scalar_lea.vmem [#allocation2], %s297
        // Predicated region
        $region49: #{tpu_custom_call.1} parent=47 // pred_check
          %p299 = pneg %p47
        $region50: #{tpu_custom_call.1} parent=47 // pred_check_branch
          %301 = sbr.rel (%p299) target = $region52
        $region51: #{tpu_custom_call.1} parent=47 // pred_region
          %302 = dma.done %s295, 256
        $region52: #{tpu_custom_call.1} parent=47 // pred_fallthru
          _
        // Predicated region
        $region53: #{tpu_custom_call.1} parent=47 // pred_check
          %p303 = pneg %p68
        $region54: #{tpu_custom_call.1} parent=47 // pred_check_branch
          %305 = sbr.rel (%p303) target = $region56
        $region55: #{tpu_custom_call.1} parent=47 // pred_region
          %306 = dma.done [#allocation6], 4096
        $region56: #{tpu_custom_call.1} parent=47 // pred_fallthru
          _
        // Predicated region
        $region57: #{tpu_custom_call.1} parent=47 // pred_check
          %p307 = pneg %p110
        $region58: #{tpu_custom_call.1} parent=47 // pred_check_branch
          %309 = sbr.rel (%p307) target = $region60
        $region59: #{tpu_custom_call.1} parent=47 // pred_region
          %310 = dma.done [#allocation6], 1024
        $region60: #{tpu_custom_call.1} parent=47 // pred_fallthru
          _
        // Predicated region
        $region61: #{tpu_custom_call.1} parent=47 // pred_check
          %p311 = pneg %p152
        $region62: #{tpu_custom_call.1} parent=47 // pred_check_branch
          %313 = sbr.rel (%p311) target = $region64
        $region63: #{tpu_custom_call.1} parent=47 // pred_region
          %314 = dma.done [#allocation9], 4096
        $region64: #{tpu_custom_call.1} parent=47 // pred_fallthru
          _
        %s315 = sand.u32 %s34, 1
        %s316 = scalar_lea.sflag [#allocation3], %s315
        %s317 = sand.u32 %s34, 1
        %s318 = smul.addr %s317, 16
        %s319 = scalar_lea.vmem [#allocation2], %s318
        %p320 = pneg %p47
        %p321 = pneg %p44
        %p322 = pneg %p68
        %p323 = pneg %p65
        %p324 = pneg %p89
        %p325 = pneg %p86
        %p326 = pneg %p110
        %p327 = pneg %p107
        %p328 = pneg %p131
        %p329 = pneg %p128
        %p330 = pneg %p152
        %p331 = pneg %p149
        %p332 = pneg %p173
        %p333 = pneg %p170
        %p334 = pneg %p199
        %p335 = pneg %p196
        %s336 = sand.u32 %s186, 1
        %s337 = scalar_lea.sflag [#allocation4], %s336
        %s338 = sand.u32 %s186, 1
        %s339 = smul.addr %s338, 16
        %s340 = scalar_lea.vmem [#allocation10], %s339
        %v342 = vld [vmem:[%s298] sm:$0xff]
        %v343 = vld [vmem:[%s298 + $0x8] sm:$0xff]
        %v344 = vpack.c.bf16 %v343, %v342
        %v345 = vld [vmem:[#allocation5] sm:$0xff]
        %v346 = vld [vmem:[#allocation5 + $0x8] sm:$0xff]
        %v347 = vld [vmem:[#allocation5 + $0x10] sm:$0xff]
        %v348 = vld [vmem:[#allocation5 + $0x18] sm:$0xff]
        %v349 = vld [vmem:[#allocation5 + $0x20] sm:$0xff]
        %v350 = vld [vmem:[#allocation5 + $0x28] sm:$0xff]
        %v351 = vld [vmem:[#allocation5 + $0x30] sm:$0xff]
        %v352 = vld [vmem:[#allocation5 + $0x38] sm:$0xff]
        %v353 = vld [vmem:[#allocation5 + $0x40] sm:$0xff]
        %v354 = vld [vmem:[#allocation5 + $0x48] sm:$0xff]
        %v355 = vld [vmem:[#allocation5 + $0x50] sm:$0xff]
        %v356 = vld [vmem:[#allocation5 + $0x58] sm:$0xff]
        %v357 = vld [vmem:[#allocation5 + $0x60] sm:$0xff]
        %v358 = vld [vmem:[#allocation5 + $0x68] sm:$0xff]
        %v359 = vld [vmem:[#allocation5 + $0x70] sm:$0xff]
        %v360 = vld [vmem:[#allocation5 + $0x78] sm:$0xff]
        %v361 = vld [vmem:[#allocation5 + $0x80] sm:$0xff]
        %v362 = vld [vmem:[#allocation5 + $0x88] sm:$0xff]
        %v363 = vld [vmem:[#allocation5 + $0x90] sm:$0xff]
        %v364 = vld [vmem:[#allocation5 + $0x98] sm:$0xff]
        %v365 = vld [vmem:[#allocation5 + $0xa0] sm:$0xff]
        %v366 = vld [vmem:[#allocation5 + $0xa8] sm:$0xff]
        %v367 = vld [vmem:[#allocation5 + $0xb0] sm:$0xff]
        %v368 = vld [vmem:[#allocation5 + $0xb8] sm:$0xff]
        %v369 = vld [vmem:[#allocation5 + $0xc0] sm:$0xff]
        %v370 = vld [vmem:[#allocation5 + $0xc8] sm:$0xff]
        %v371 = vld [vmem:[#allocation5 + $0xd0] sm:$0xff]
        %v372 = vld [vmem:[#allocation5 + $0xd8] sm:$0xff]
        %v373 = vld [vmem:[#allocation5 + $0xe0] sm:$0xff]
        %v374 = vld [vmem:[#allocation5 + $0xe8] sm:$0xff]
        %v375 = vld [vmem:[#allocation5 + $0xf0] sm:$0xff]
        %v376 = vld [vmem:[#allocation5 + $0xf8] sm:$0xff]
        %v377 = vld [vmem:[%s2] sm:$0xf]
        %v379 = vlaneseq
        %v380 = vshrl.u32 %v379, 7
        %v381 = vsub.s32 0, %v380
        %v382 = vrot.slane %v377, %v381
        %v383 = vlaneseq
        %v384 = vshrl.u32 %v383, 7
        %v385 = vsub.s32 1, %v384
        %v386 = vrot.slane %v377, %v385
        %v387 = vlaneseq
        %v388 = vshrl.u32 %v387, 7
        %v389 = vsub.s32 2, %v388
        %v390 = vrot.slane %v377, %v389
        %v391 = vlaneseq
        %v392 = vshrl.u32 %v391, 7
        %v393 = vsub.s32 3, %v392
        %v394 = vrot.slane %v377, %v393
        %v431 = vunpack.c.l.b16 %v345
        %v432 = vunpack.c.h.b16 %v345
        %v433 = vunpack.c.l.b16 %v346
        %v434 = vunpack.c.h.b16 %v346
        %v435 = vunpack.c.l.b16 %v347
        %v436 = vunpack.c.h.b16 %v347
        %v437 = vunpack.c.l.b16 %v348
        %v438 = vunpack.c.h.b16 %v348
        %v439 = vunpack.c.l.b16 %v349
        %v440 = vunpack.c.h.b16 %v349
        %v441 = vunpack.c.l.b16 %v350
        %v442 = vunpack.c.h.b16 %v350
        %v443 = vunpack.c.l.b16 %v351
        %v444 = vunpack.c.h.b16 %v351
        %v445 = vunpack.c.l.b16 %v352
        %v446 = vunpack.c.h.b16 %v352
        %v447 = vunpack.c.l.b16 %v353
        %v448 = vunpack.c.h.b16 %v353
        %v449 = vunpack.c.l.b16 %v354
        %v450 = vunpack.c.h.b16 %v354
        %v451 = vunpack.c.l.b16 %v355
        %v452 = vunpack.c.h.b16 %v355
        %v453 = vunpack.c.l.b16 %v356
        %v454 = vunpack.c.h.b16 %v356
        %v455 = vunpack.c.l.b16 %v357
        %v456 = vunpack.c.h.b16 %v357
        %v457 = vunpack.c.l.b16 %v358
        %v458 = vunpack.c.h.b16 %v358
        %v459 = vunpack.c.l.b16 %v359
        %v460 = vunpack.c.h.b16 %v359
        %v461 = vunpack.c.l.b16 %v360
        %v462 = vunpack.c.h.b16 %v360
        %v463 = vunpack.c.l.b16 %v361
        %v464 = vunpack.c.h.b16 %v361
        %v465 = vunpack.c.l.b16 %v362
        %v466 = vunpack.c.h.b16 %v362
        %v467 = vunpack.c.l.b16 %v363
        %v468 = vunpack.c.h.b16 %v363
        %v469 = vunpack.c.l.b16 %v364
        %v470 = vunpack.c.h.b16 %v364
        %v471 = vunpack.c.l.b16 %v365
        %v472 = vunpack.c.h.b16 %v365
        %v473 = vunpack.c.l.b16 %v366
        %v474 = vunpack.c.h.b16 %v366
        %v475 = vunpack.c.l.b16 %v367
        %v476 = vunpack.c.h.b16 %v367
        %v477 = vunpack.c.l.b16 %v368
        %v478 = vunpack.c.h.b16 %v368
        %v479 = vunpack.c.l.b16 %v369
        %v480 = vunpack.c.h.b16 %v369
        %v481 = vunpack.c.l.b16 %v370
        %v482 = vunpack.c.h.b16 %v370
        %v483 = vunpack.c.l.b16 %v371
        %v484 = vunpack.c.h.b16 %v371
        %v485 = vunpack.c.l.b16 %v372
        %v486 = vunpack.c.h.b16 %v372
        %v487 = vunpack.c.l.b16 %v373
        %v488 = vunpack.c.h.b16 %v373
        %v489 = vunpack.c.l.b16 %v374
        %v490 = vunpack.c.h.b16 %v374
        %v491 = vunpack.c.l.b16 %v375
        %v492 = vunpack.c.h.b16 %v375
        %v493 = vunpack.c.l.b16 %v376
        %v494 = vunpack.c.h.b16 %v376
        %v495 = vpack.c.b16 %v435, %v431
        %v496 = vpack.c.b16 %v436, %v432
        %v497 = vpack.c.b16 %v437, %v433
        %v498 = vpack.c.b16 %v438, %v434
        %v499 = vpack.c.b16 %v443, %v439
        %v500 = vpack.c.b16 %v444, %v440
        %v501 = vpack.c.b16 %v445, %v441
        %v502 = vpack.c.b16 %v446, %v442
        %v503 = vpack.c.b16 %v451, %v447
        %v504 = vpack.c.b16 %v452, %v448
        %v505 = vpack.c.b16 %v453, %v449
        %v506 = vpack.c.b16 %v454, %v450
        %v507 = vpack.c.b16 %v459, %v455
        %v508 = vpack.c.b16 %v460, %v456
        %v509 = vpack.c.b16 %v461, %v457
        %v510 = vpack.c.b16 %v462, %v458
        %v511 = vpack.c.b16 %v467, %v463
        %v512 = vpack.c.b16 %v468, %v464
        %v513 = vpack.c.b16 %v469, %v465
        %v514 = vpack.c.b16 %v470, %v466
        %v515 = vpack.c.b16 %v475, %v471
        %v516 = vpack.c.b16 %v476, %v472
        %v517 = vpack.c.b16 %v477, %v473
        %v518 = vpack.c.b16 %v478, %v474
        %v519 = vpack.c.b16 %v483, %v479
        %v520 = vpack.c.b16 %v484, %v480
        %v521 = vpack.c.b16 %v485, %v481
        %v522 = vpack.c.b16 %v486, %v482
        %v523 = vpack.c.b16 %v491, %v487
        %v524 = vpack.c.b16 %v492, %v488
        %v525 = vpack.c.b16 %v493, %v489
        %v526 = vpack.c.b16 %v494, %v490
        %559 = vmatprep.subr.bf16.mxu0 %v496
        %560 = vmatpush1.bf16.msra.mxu0 %v495
        %561 = vmatprep.subr.bf16.mxu0 %v500
        %562 = vmatpush1.bf16.msra.mxu0 %v499
        %563 = vmatprep.subr.bf16.mxu0 %v504
        %564 = vmatpush1.bf16.msra.mxu0 %v503
        %565 = vmatprep.subr.bf16.mxu0 %v508
        %566 = vmatpush1.bf16.msra.mxu0 %v507
        %567 = vmatprep.subr.bf16.mxu0 %v512
        %568 = vmatpush1.bf16.msra.mxu0 %v511
        %569 = vmatprep.subr.bf16.mxu0 %v516
        %570 = vmatpush1.bf16.msra.mxu0 %v515
        %571 = vmatprep.subr.bf16.mxu0 %v520
        %572 = vmatpush1.bf16.msra.mxu0 %v519
        %573 = vmatprep.subr.bf16.mxu0 %v524
        %574 = vmatpush1.bf16.msra.mxu0 %v523
        %575 = vmatprep.subr.bf16.mxu0 0
        %576 = vmatpush1.bf16.msra.mxu0 0
        %577 = vmatprep.subr.bf16.mxu0 0
        %578 = vmatpush1.bf16.msra.mxu0 0
        %579 = vmatprep.subr.bf16.mxu0 0
        %580 = vmatpush1.bf16.msra.mxu0 0
        %581 = vmatprep.subr.bf16.mxu0 0
        %582 = vmatpush1.bf16.msra.mxu0 0
        %583 = vmatprep.subr.bf16.mxu0 0
        %584 = vmatpush1.bf16.msra.mxu0 0
        %585 = vmatprep.subr.bf16.mxu0 0
        %586 = vmatpush1.bf16.msra.mxu0 0
        %587 = vmatprep.subr.bf16.mxu0 0
        %588 = vmatpush1.bf16.msra.mxu0 0
        %589 = vmatprep.subr.bf16.mxu0 0
        %590 = vmatpush1.bf16.msra.mxu0 0
        %591 = vmatprep.mubr.bf16.mxu0 0
        %592 = vmatmul.mubr.bf16.gmra.mrb[0].mxu0 %v344
        %v593 = vpop.f32.mrb[0].mxu0
        %v594 = vadd.f32 %v382, %v593
        %v595 = vpop.f32.mrb[0].mxu0
        %v596 = vadd.f32 %v386, %v595
        %v597 = vpop.f32.mrb[0].mxu0
        %v598 = vadd.f32 %v382, %v597
        %v599 = vpop.f32.mrb[0].mxu0
        %v600 = vadd.f32 %v386, %v599
        %601 = vdwg.mxu0
        %602 = vmatprep.subr.bf16.mxu0 %v498
        %603 = vmatpush1.bf16.msra.mxu0 %v497
        %604 = vmatprep.subr.bf16.mxu0 %v502
        %605 = vmatpush1.bf16.msra.mxu0 %v501
        %606 = vmatprep.subr.bf16.mxu0 %v506
        %607 = vmatpush1.bf16.msra.mxu0 %v505
        %608 = vmatprep.subr.bf16.mxu0 %v510
        %609 = vmatpush1.bf16.msra.mxu0 %v509
        %610 = vmatprep.subr.bf16.mxu0 %v514
        %611 = vmatpush1.bf16.msra.mxu0 %v513
        %612 = vmatprep.subr.bf16.mxu0 %v518
        %613 = vmatpush1.bf16.msra.mxu0 %v517
        %614 = vmatprep.subr.bf16.mxu0 %v522
        %615 = vmatpush1.bf16.msra.mxu0 %v521
        %616 = vmatprep.subr.bf16.mxu0 %v526
        %617 = vmatpush1.bf16.msra.mxu0 %v525
        %618 = vmatprep.subr.bf16.mxu0 0
        %619 = vmatpush1.bf16.msra.mxu0 0
        %620 = vmatprep.subr.bf16.mxu0 0
        %621 = vmatpush1.bf16.msra.mxu0 0
        %622 = vmatprep.subr.bf16.mxu0 0
        %623 = vmatpush1.bf16.msra.mxu0 0
        %624 = vmatprep.subr.bf16.mxu0 0
        %625 = vmatpush1.bf16.msra.mxu0 0
        %626 = vmatprep.subr.bf16.mxu0 0
        %627 = vmatpush1.bf16.msra.mxu0 0
        %628 = vmatprep.subr.bf16.mxu0 0
        %629 = vmatpush1.bf16.msra.mxu0 0
        %630 = vmatprep.subr.bf16.mxu0 0
        %631 = vmatpush1.bf16.msra.mxu0 0
        %632 = vmatprep.subr.bf16.mxu0 0
        %633 = vmatpush1.bf16.msra.mxu0 0
        %634 = vmatprep.mubr.bf16.mxu0 0
        %635 = vmatmul.mubr.bf16.gmra.mrb[0].mxu0 %v344
        %v636 = vpop.f32.mrb[0].mxu0
        %v637 = vadd.f32 %v390, %v636
        %v638 = vpop.f32.mrb[0].mxu0
        %v639 = vadd.f32 %v394, %v638
        %v640 = vpop.f32.mrb[0].mxu0
        %v641 = vadd.f32 %v390, %v640
        %v642 = vpop.f32.mrb[0].mxu0
        %v643 = vadd.f32 %v394, %v642
        %644 = vdwg.mxu0
        %v645 = vmax.f32 %v594, 0.0
        %v646 = vmax.f32 %v596, 0.0
        %v647 = vmax.f32 %v637, 0.0
        %v648 = vmax.f32 %v639, 0.0
        %v649 = vmax.f32 %v598, 0.0
        %v650 = vmax.f32 %v600, 0.0
        %v651 = vmax.f32 %v641, 0.0
        %v652 = vmax.f32 %v643, 0.0
        %v653 = vmin.f32 %v645, 6.0
        %v654 = vmin.f32 %v646, 6.0
        %v655 = vmin.f32 %v647, 6.0
        %v656 = vmin.f32 %v648, 6.0
        %v657 = vmin.f32 %v649, 6.0
        %v658 = vmin.f32 %v650, 6.0
        %v659 = vmin.f32 %v651, 6.0
        %v660 = vmin.f32 %v652, 6.0
        %v661 = vlaneseq
        %v662 = vshrl.u32 %v661, 7
        %v663 = vadd.s32 %v662, 8
        %v664 = vlaneseq
        %v665 = vand.u32 %v664, 127
        %v666 = vadd.s32 %v665, 128
        %v667 = vadd.s32 %v665, 256
        %v668 = vadd.s32 %v665, 384
        %vm669 = vcmp.ge.s32.totalorder %v665, 32
        %vm670 = vcmp.ge.s32.totalorder %v666, 32
        %vm671 = vcmp.ge.s32.totalorder %v667, 32
        %vm672 = vcmp.ge.s32.totalorder %v668, 32
        %vm673 = vcmp.lt.s32.totalorder %v665, 480
        %vm674 = vcmp.lt.s32.totalorder %v666, 480
        %vm675 = vcmp.lt.s32.totalorder %v667, 480
        %vm676 = vcmp.lt.s32.totalorder %v668, 480
        %vm677 = vcmp.ge.s32.totalorder %v662, 1
        %vm678 = vcmp.ge.s32.totalorder %v663, 1
        %vm679 = vcmp.le.s32.totalorder %v662, 14
        %vm680 = vcmp.le.s32.totalorder %v663, 14
        %681 = vrot.lane.b32.xlu0 %v653, 32
        %v682 = vpop.permute.xlu0 %681
        %683 = vrot.lane.b32.xlu0 %v657, 32
        %v684 = vpop.permute.xlu0 %683
        %685 = vrot.lane.b32.xlu0 %v654, 32
        %v686 = vpop.permute.xlu0 %685
        %687 = vrot.lane.b32.xlu0 %v658, 32
        %v688 = vpop.permute.xlu0 %687
        %689 = vrot.lane.b32.xlu0 %v655, 32
        %v690 = vpop.permute.xlu0 %689
        %691 = vrot.lane.b32.xlu0 %v659, 32
        %v692 = vpop.permute.xlu0 %691
        %693 = vrot.lane.b32.xlu0 %v656, 32
        %v694 = vpop.permute.xlu0 %693
        %695 = vrot.lane.b32.xlu0 %v660, 32
        %v696 = vpop.permute.xlu0 %695
        %vm697 = vcmp.lt.s32.totalorder %v665, 32
        %v698 = vsel %vm697, %v690, %v694
        %v699 = vsel %vm697, %v692, %v696
        %v700 = vsel %vm697, %v686, %v690
        %v701 = vsel %vm697, %v688, %v692
        %v702 = vsel %vm697, %v682, %v686
        %v703 = vsel %vm697, %v684, %v688
        %v704 = vsel %vm697, %v694, %v682
        %v705 = vsel %vm697, %v696, %v684
        %v706 = vsel %vm669, %v704, 0.0
        %v707 = vsel %vm670, %v702, 0.0
        %v708 = vsel %vm671, %v700, 0.0
        %v709 = vsel %vm672, %v698, 0.0
        %v710 = vsel %vm669, %v705, 0.0
        %v711 = vsel %vm670, %v703, 0.0
        %v712 = vsel %vm671, %v701, 0.0
        %v713 = vsel %vm672, %v699, 0.0
        %v714 = vrot.slane %v706, 7
        %v715 = vrot.slane %v707, 7
        %v716 = vrot.slane %v708, 7
        %v717 = vrot.slane %v709, 7
        %v718 = vrot.slane %v710, 7
        %v719 = vrot.slane %v711, 7
        %v720 = vrot.slane %v712, 7
        %v721 = vrot.slane %v713, 7
        %vm722 = vcmp.lt.s32.totalorder %v662, 1
        %v723 = vsel %vm722, %v714, %v718
        %v724 = vsel %vm722, %v715, %v719
        %v725 = vsel %vm722, %v716, %v720
        %v726 = vsel %vm722, %v717, %v721
        %v727 = vsel %vm722, %v718, %v714
        %v728 = vsel %vm722, %v719, %v715
        %v729 = vsel %vm722, %v720, %v716
        %v730 = vsel %vm722, %v721, %v717
        %v731 = vsel %vm677, %v727, 0.0
        %v732 = vsel %vm677, %v728, 0.0
        %v733 = vsel %vm677, %v729, 0.0
        %v734 = vsel %vm677, %v730, 0.0
        %v735 = vsel %vm678, %v723, 0.0
        %v736 = vsel %vm678, %v724, 0.0
        %v737 = vsel %vm678, %v725, 0.0
        %v738 = vsel %vm678, %v726, 0.0
        %v739 = vrot.slane %v706, 1
        %v740 = vrot.slane %v707, 1
        %v741 = vrot.slane %v708, 1
        %v742 = vrot.slane %v709, 1
        %v743 = vrot.slane %v710, 1
        %v744 = vrot.slane %v711, 1
        %v745 = vrot.slane %v712, 1
        %v746 = vrot.slane %v713, 1
        %vm747 = vcmp.lt.s32.totalorder %v662, 7
        %v748 = vsel %vm747, %v739, %v743
        %v749 = vsel %vm747, %v740, %v744
        %v750 = vsel %vm747, %v741, %v745
        %v751 = vsel %vm747, %v742, %v746
        %v752 = vsel %vm747, %v743, %v739
        %v753 = vsel %vm747, %v744, %v740
        %v754 = vsel %vm747, %v745, %v741
        %v755 = vsel %vm747, %v746, %v742
        %v756 = vsel %vm679, %v748, 0.0
        %v757 = vsel %vm679, %v749, 0.0
        %v758 = vsel %vm679, %v750, 0.0
        %v759 = vsel %vm679, %v751, 0.0
        %v760 = vsel %vm680, %v752, 0.0
        %v761 = vsel %vm680, %v753, 0.0
        %v762 = vsel %vm680, %v754, 0.0
        %v763 = vsel %vm680, %v755, 0.0
        %v764 = vld [vmem:[#allocation7] ss:$8 sm:$0xf]
        %v766 = vlaneseq
        %v767 = vshrl.u32 %v766, 7
        %v768 = vsub.s32 0, %v767
        %v769 = vrot.slane %v764, %v768
        %v770 = vlaneseq
        %v771 = vshrl.u32 %v770, 7
        %v772 = vsub.s32 1, %v771
        %v773 = vrot.slane %v764, %v772
        %v774 = vlaneseq
        %v775 = vshrl.u32 %v774, 7
        %v776 = vsub.s32 2, %v775
        %v777 = vrot.slane %v764, %v776
        %v778 = vlaneseq
        %v779 = vshrl.u32 %v778, 7
        %v780 = vsub.s32 3, %v779
        %v781 = vrot.slane %v764, %v780
        %v786 = vmul.f32 %v731, %v769
        %v787 = vmul.f32 %v732, %v773
        %v788 = vmul.f32 %v733, %v777
        %v789 = vmul.f32 %v734, %v781
        %v790 = vmul.f32 %v735, %v769
        %v791 = vmul.f32 %v736, %v773
        %v792 = vmul.f32 %v737, %v777
        %v793 = vmul.f32 %v738, %v781
        %s794 = scalar_lea.vmem [#allocation7], 3
        %v795 = vld [vmem:[%s794] ss:$8 sm:$0xf]
        %v797 = vlaneseq
        %v798 = vshrl.u32 %v797, 7
        %v799 = vsub.s32 0, %v798
        %v800 = vrot.slane %v795, %v799
        %v801 = vlaneseq
        %v802 = vshrl.u32 %v801, 7
        %v803 = vsub.s32 1, %v802
        %v804 = vrot.slane %v795, %v803
        %v805 = vlaneseq
        %v806 = vshrl.u32 %v805, 7
        %v807 = vsub.s32 2, %v806
        %v808 = vrot.slane %v795, %v807
        %v809 = vlaneseq
        %v810 = vshrl.u32 %v809, 7
        %v811 = vsub.s32 3, %v810
        %v812 = vrot.slane %v795, %v811
        %v817 = vmul.f32 %v706, %v800
        %v818 = vmul.f32 %v707, %v804
        %v819 = vmul.f32 %v708, %v808
        %v820 = vmul.f32 %v709, %v812
        %v821 = vmul.f32 %v710, %v800
        %v822 = vmul.f32 %v711, %v804
        %v823 = vmul.f32 %v712, %v808
        %v824 = vmul.f32 %v713, %v812
        %v825 = vadd.f32 %v786, %v817
        %v826 = vadd.f32 %v787, %v818
        %v827 = vadd.f32 %v788, %v819
        %v828 = vadd.f32 %v789, %v820
        %v829 = vadd.f32 %v790, %v821
        %v830 = vadd.f32 %v791, %v822
        %v831 = vadd.f32 %v792, %v823
        %v832 = vadd.f32 %v793, %v824
        %s833 = scalar_lea.vmem [#allocation7], 6
        %v834 = vld [vmem:[%s833] ss:$8 sm:$0xf]
        %v836 = vlaneseq
        %v837 = vshrl.u32 %v836, 7
        %v838 = vsub.s32 0, %v837
        %v839 = vrot.slane %v834, %v838
        %v840 = vlaneseq
        %v841 = vshrl.u32 %v840, 7
        %v842 = vsub.s32 1, %v841
        %v843 = vrot.slane %v834, %v842
        %v844 = vlaneseq
        %v845 = vshrl.u32 %v844, 7
        %v846 = vsub.s32 2, %v845
        %v847 = vrot.slane %v834, %v846
        %v848 = vlaneseq
        %v849 = vshrl.u32 %v848, 7
        %v850 = vsub.s32 3, %v849
        %v851 = vrot.slane %v834, %v850
        %v856 = vmul.f32 %v756, %v839
        %v857 = vmul.f32 %v757, %v843
        %v858 = vmul.f32 %v758, %v847
        %v859 = vmul.f32 %v759, %v851
        %v860 = vmul.f32 %v760, %v839
        %v861 = vmul.f32 %v761, %v843
        %v862 = vmul.f32 %v762, %v847
        %v863 = vmul.f32 %v763, %v851
        %v864 = vadd.f32 %v825, %v856
        %v865 = vadd.f32 %v826, %v857
        %v866 = vadd.f32 %v827, %v858
        %v867 = vadd.f32 %v828, %v859
        %v868 = vadd.f32 %v829, %v860
        %v869 = vadd.f32 %v830, %v861
        %v870 = vadd.f32 %v831, %v862
        %v871 = vadd.f32 %v832, %v863
        %v872 = vrot.slane %v653, 7
        %v873 = vrot.slane %v654, 7
        %v874 = vrot.slane %v655, 7
        %v875 = vrot.slane %v656, 7
        %v876 = vrot.slane %v657, 7
        %v877 = vrot.slane %v658, 7
        %v878 = vrot.slane %v659, 7
        %v879 = vrot.slane %v660, 7
        %v880 = vsel %vm722, %v872, %v876
        %v881 = vsel %vm722, %v873, %v877
        %v882 = vsel %vm722, %v874, %v878
        %v883 = vsel %vm722, %v875, %v879
        %v884 = vsel %vm722, %v876, %v872
        %v885 = vsel %vm722, %v877, %v873
        %v886 = vsel %vm722, %v878, %v874
        %v887 = vsel %vm722, %v879, %v875
        %v888 = vsel %vm677, %v884, 0.0
        %v889 = vsel %vm677, %v885, 0.0
        %v890 = vsel %vm677, %v886, 0.0
        %v891 = vsel %vm677, %v887, 0.0
        %v892 = vsel %vm678, %v880, 0.0
        %v893 = vsel %vm678, %v881, 0.0
        %v894 = vsel %vm678, %v882, 0.0
        %v895 = vsel %vm678, %v883, 0.0
        %v896 = vrot.slane %v653, 1
        %v897 = vrot.slane %v654, 1
        %v898 = vrot.slane %v655, 1
        %v899 = vrot.slane %v656, 1
        %v900 = vrot.slane %v657, 1
        %v901 = vrot.slane %v658, 1
        %v902 = vrot.slane %v659, 1
        %v903 = vrot.slane %v660, 1
        %v904 = vsel %vm747, %v896, %v900
        %v905 = vsel %vm747, %v897, %v901
        %v906 = vsel %vm747, %v898, %v902
        %v907 = vsel %vm747, %v899, %v903
        %v908 = vsel %vm747, %v900, %v896
        %v909 = vsel %vm747, %v901, %v897
        %v910 = vsel %vm747, %v902, %v898
        %v911 = vsel %vm747, %v903, %v899
        %v912 = vsel %vm679, %v904, 0.0
        %v913 = vsel %vm679, %v905, 0.0
        %v914 = vsel %vm679, %v906, 0.0
        %v915 = vsel %vm679, %v907, 0.0
        %v916 = vsel %vm680, %v908, 0.0
        %v917 = vsel %vm680, %v909, 0.0
        %v918 = vsel %vm680, %v910, 0.0
        %v919 = vsel %vm680, %v911, 0.0
        %s920 = scalar_lea.vmem [#allocation7], 1
        %v921 = vld [vmem:[%s920] ss:$8 sm:$0xf]
        %v923 = vlaneseq
        %v924 = vshrl.u32 %v923, 7
        %v925 = vsub.s32 0, %v924
        %v926 = vrot.slane %v921, %v925
        %v927 = vlaneseq
        %v928 = vshrl.u32 %v927, 7
        %v929 = vsub.s32 1, %v928
        %v930 = vrot.slane %v921, %v929
        %v931 = vlaneseq
        %v932 = vshrl.u32 %v931, 7
        %v933 = vsub.s32 2, %v932
        %v934 = vrot.slane %v921, %v933
        %v935 = vlaneseq
        %v936 = vshrl.u32 %v935, 7
        %v937 = vsub.s32 3, %v936
        %v938 = vrot.slane %v921, %v937
        %v943 = vmul.f32 %v888, %v926
        %v944 = vmul.f32 %v889, %v930
        %v945 = vmul.f32 %v890, %v934
        %v946 = vmul.f32 %v891, %v938
        %v947 = vmul.f32 %v892, %v926
        %v948 = vmul.f32 %v893, %v930
        %v949 = vmul.f32 %v894, %v934
        %v950 = vmul.f32 %v895, %v938
        %s951 = scalar_lea.vmem [#allocation7], 4
        %v952 = vld [vmem:[%s951] ss:$8 sm:$0xf]
        %v954 = vlaneseq
        %v955 = vshrl.u32 %v954, 7
        %v956 = vsub.s32 0, %v955
        %v957 = vrot.slane %v952, %v956
        %v958 = vlaneseq
        %v959 = vshrl.u32 %v958, 7
        %v960 = vsub.s32 1, %v959
        %v961 = vrot.slane %v952, %v960
        %v962 = vlaneseq
        %v963 = vshrl.u32 %v962, 7
        %v964 = vsub.s32 2, %v963
        %v965 = vrot.slane %v952, %v964
        %v966 = vlaneseq
        %v967 = vshrl.u32 %v966, 7
        %v968 = vsub.s32 3, %v967
        %v969 = vrot.slane %v952, %v968
        %v974 = vmul.f32 %v653, %v957
        %v975 = vmul.f32 %v654, %v961
        %v976 = vmul.f32 %v655, %v965
        %v977 = vmul.f32 %v656, %v969
        %v978 = vmul.f32 %v657, %v957
        %v979 = vmul.f32 %v658, %v961
        %v980 = vmul.f32 %v659, %v965
        %v981 = vmul.f32 %v660, %v969
        %v982 = vadd.f32 %v943, %v974
        %v983 = vadd.f32 %v944, %v975
        %v984 = vadd.f32 %v945, %v976
        %v985 = vadd.f32 %v946, %v977
        %v986 = vadd.f32 %v947, %v978
        %v987 = vadd.f32 %v948, %v979
        %v988 = vadd.f32 %v949, %v980
        %v989 = vadd.f32 %v950, %v981
        %s990 = scalar_lea.vmem [#allocation7], 7
        %v991 = vld [vmem:[%s990] ss:$8 sm:$0xf]
        %v993 = vlaneseq
        %v994 = vshrl.u32 %v993, 7
        %v995 = vsub.s32 0, %v994
        %v996 = vrot.slane %v991, %v995
        %v997 = vlaneseq
        %v998 = vshrl.u32 %v997, 7
        %v999 = vsub.s32 1, %v998
        %v1000 = vrot.slane %v991, %v999
        %v1001 = vlaneseq
        %v1002 = vshrl.u32 %v1001, 7
        %v1003 = vsub.s32 2, %v1002
        %v1004 = vrot.slane %v991, %v1003
        %v1005 = vlaneseq
        %v1006 = vshrl.u32 %v1005, 7
        %v1007 = vsub.s32 3, %v1006
        %v1008 = vrot.slane %v991, %v1007
        %v1013 = vmul.f32 %v912, %v996
        %v1014 = vmul.f32 %v913, %v1000
        %v1015 = vmul.f32 %v914, %v1004
        %v1016 = vmul.f32 %v915, %v1008
        %v1017 = vmul.f32 %v916, %v996
        %v1018 = vmul.f32 %v917, %v1000
        %v1019 = vmul.f32 %v918, %v1004
        %v1020 = vmul.f32 %v919, %v1008
        %v1021 = vadd.f32 %v982, %v1013
        %v1022 = vadd.f32 %v983, %v1014
        %v1023 = vadd.f32 %v984, %v1015
        %v1024 = vadd.f32 %v985, %v1016
        %v1025 = vadd.f32 %v986, %v1017
        %v1026 = vadd.f32 %v987, %v1018
        %v1027 = vadd.f32 %v988, %v1019
        %v1028 = vadd.f32 %v989, %v1020
        %1029 = vrot.lane.b32.xlu0 %v653, 96
        %v1030 = vpop.permute.xlu0 %1029
        %1031 = vrot.lane.b32.xlu0 %v657, 96
        %v1032 = vpop.permute.xlu0 %1031
        %1033 = vrot.lane.b32.xlu0 %v654, 96
        %v1034 = vpop.permute.xlu0 %1033
        %1035 = vrot.lane.b32.xlu0 %v658, 96
        %v1036 = vpop.permute.xlu0 %1035
        %1037 = vrot.lane.b32.xlu0 %v655, 96
        %v1038 = vpop.permute.xlu0 %1037
        %1039 = vrot.lane.b32.xlu0 %v659, 96
        %v1040 = vpop.permute.xlu0 %1039
        %1041 = vrot.lane.b32.xlu0 %v656, 96
        %v1042 = vpop.permute.xlu0 %1041
        %1043 = vrot.lane.b32.xlu0 %v660, 96
        %v1044 = vpop.permute.xlu0 %1043
        %vm1045 = vcmp.lt.s32.totalorder %v665, 96
        %v1046 = vsel %vm1045, %v1038, %v1042
        %v1047 = vsel %vm1045, %v1040, %v1044
        %v1048 = vsel %vm1045, %v1034, %v1038
        %v1049 = vsel %vm1045, %v1036, %v1040
        %v1050 = vsel %vm1045, %v1030, %v1034
        %v1051 = vsel %vm1045, %v1032, %v1036
        %v1052 = vsel %vm1045, %v1042, %v1030
        %v1053 = vsel %vm1045, %v1044, %v1032
        %v1054 = vsel %vm673, %v1050, 0.0
        %v1055 = vsel %vm674, %v1048, 0.0
        %v1056 = vsel %vm675, %v1046, 0.0
        %v1057 = vsel %vm676, %v1052, 0.0
        %v1058 = vsel %vm673, %v1051, 0.0
        %v1059 = vsel %vm674, %v1049, 0.0
        %v1060 = vsel %vm675, %v1047, 0.0
        %v1061 = vsel %vm676, %v1053, 0.0
        %v1062 = vrot.slane %v1054, 7
        %v1063 = vrot.slane %v1055, 7
        %v1064 = vrot.slane %v1056, 7
        %v1065 = vrot.slane %v1057, 7
        %v1066 = vrot.slane %v1058, 7
        %v1067 = vrot.slane %v1059, 7
        %v1068 = vrot.slane %v1060, 7
        %v1069 = vrot.slane %v1061, 7
        %v1070 = vsel %vm722, %v1062, %v1066
        %v1071 = vsel %vm722, %v1063, %v1067
        %v1072 = vsel %vm722, %v1064, %v1068
        %v1073 = vsel %vm722, %v1065, %v1069
        %v1074 = vsel %vm722, %v1066, %v1062
        %v1075 = vsel %vm722, %v1067, %v1063
        %v1076 = vsel %vm722, %v1068, %v1064
        %v1077 = vsel %vm722, %v1069, %v1065
        %v1078 = vsel %vm677, %v1074, 0.0
        %v1079 = vsel %vm677, %v1075, 0.0
        %v1080 = vsel %vm677, %v1076, 0.0
        %v1081 = vsel %vm677, %v1077, 0.0
        %v1082 = vsel %vm678, %v1070, 0.0
        %v1083 = vsel %vm678, %v1071, 0.0
        %v1084 = vsel %vm678, %v1072, 0.0
        %v1085 = vsel %vm678, %v1073, 0.0
        %v1086 = vrot.slane %v1054, 1
        %v1087 = vrot.slane %v1055, 1
        %v1088 = vrot.slane %v1056, 1
        %v1089 = vrot.slane %v1057, 1
        %v1090 = vrot.slane %v1058, 1
        %v1091 = vrot.slane %v1059, 1
        %v1092 = vrot.slane %v1060, 1
        %v1093 = vrot.slane %v1061, 1
        %v1094 = vsel %vm747, %v1086, %v1090
        %v1095 = vsel %vm747, %v1087, %v1091
        %v1096 = vsel %vm747, %v1088, %v1092
        %v1097 = vsel %vm747, %v1089, %v1093
        %v1098 = vsel %vm747, %v1090, %v1086
        %v1099 = vsel %vm747, %v1091, %v1087
        %v1100 = vsel %vm747, %v1092, %v1088
        %v1101 = vsel %vm747, %v1093, %v1089
        %v1102 = vsel %vm679, %v1094, 0.0
        %v1103 = vsel %vm679, %v1095, 0.0
        %v1104 = vsel %vm679, %v1096, 0.0
        %v1105 = vsel %vm679, %v1097, 0.0
        %v1106 = vsel %vm680, %v1098, 0.0
        %v1107 = vsel %vm680, %v1099, 0.0
        %v1108 = vsel %vm680, %v1100, 0.0
        %v1109 = vsel %vm680, %v1101, 0.0
        %s1110 = scalar_lea.vmem [#allocation7], 2
        %v1111 = vld [vmem:[%s1110] ss:$8 sm:$0xf]
        %v1113 = vlaneseq
        %v1114 = vshrl.u32 %v1113, 7
        %v1115 = vsub.s32 0, %v1114
        %v1116 = vrot.slane %v1111, %v1115
        %v1117 = vlaneseq
        %v1118 = vshrl.u32 %v1117, 7
        %v1119 = vsub.s32 1, %v1118
        %v1120 = vrot.slane %v1111, %v1119
        %v1121 = vlaneseq
        %v1122 = vshrl.u32 %v1121, 7
        %v1123 = vsub.s32 2, %v1122
        %v1124 = vrot.slane %v1111, %v1123
        %v1125 = vlaneseq
        %v1126 = vshrl.u32 %v1125, 7
        %v1127 = vsub.s32 3, %v1126
        %v1128 = vrot.slane %v1111, %v1127
        %v1133 = vmul.f32 %v1078, %v1116
        %v1134 = vmul.f32 %v1079, %v1120
        %v1135 = vmul.f32 %v1080, %v1124
        %v1136 = vmul.f32 %v1081, %v1128
        %v1137 = vmul.f32 %v1082, %v1116
        %v1138 = vmul.f32 %v1083, %v1120
        %v1139 = vmul.f32 %v1084, %v1124
        %v1140 = vmul.f32 %v1085, %v1128
        %s1141 = scalar_lea.vmem [#allocation7], 5
        %v1142 = vld [vmem:[%s1141] ss:$8 sm:$0xf]
        %v1144 = vlaneseq
        %v1145 = vshrl.u32 %v1144, 7
        %v1146 = vsub.s32 0, %v1145
        %v1147 = vrot.slane %v1142, %v1146
        %v1148 = vlaneseq
        %v1149 = vshrl.u32 %v1148, 7
        %v1150 = vsub.s32 1, %v1149
        %v1151 = vrot.slane %v1142, %v1150
        %v1152 = vlaneseq
        %v1153 = vshrl.u32 %v1152, 7
        %v1154 = vsub.s32 2, %v1153
        %v1155 = vrot.slane %v1142, %v1154
        %v1156 = vlaneseq
        %v1157 = vshrl.u32 %v1156, 7
        %v1158 = vsub.s32 3, %v1157
        %v1159 = vrot.slane %v1142, %v1158
        %v1164 = vmul.f32 %v1054, %v1147
        %v1165 = vmul.f32 %v1055, %v1151
        %v1166 = vmul.f32 %v1056, %v1155
        %v1167 = vmul.f32 %v1057, %v1159
        %v1168 = vmul.f32 %v1058, %v1147
        %v1169 = vmul.f32 %v1059, %v1151
        %v1170 = vmul.f32 %v1060, %v1155
        %v1171 = vmul.f32 %v1061, %v1159
        %v1172 = vadd.f32 %v1133, %v1164
        %v1173 = vadd.f32 %v1134, %v1165
        %v1174 = vadd.f32 %v1135, %v1166
        %v1175 = vadd.f32 %v1136, %v1167
        %v1176 = vadd.f32 %v1137, %v1168
        %v1177 = vadd.f32 %v1138, %v1169
        %v1178 = vadd.f32 %v1139, %v1170
        %v1179 = vadd.f32 %v1140, %v1171
        %s1180 = scalar_lea.vmem [#allocation7], 32
        %v1181 = vld [vmem:[%s1180] ss:$8 sm:$0xf]
        %v1183 = vlaneseq
        %v1184 = vshrl.u32 %v1183, 7
        %v1185 = vsub.s32 0, %v1184
        %v1186 = vrot.slane %v1181, %v1185
        %v1187 = vlaneseq
        %v1188 = vshrl.u32 %v1187, 7
        %v1189 = vsub.s32 1, %v1188
        %v1190 = vrot.slane %v1181, %v1189
        %v1191 = vlaneseq
        %v1192 = vshrl.u32 %v1191, 7
        %v1193 = vsub.s32 2, %v1192
        %v1194 = vrot.slane %v1181, %v1193
        %v1195 = vlaneseq
        %v1196 = vshrl.u32 %v1195, 7
        %v1197 = vsub.s32 3, %v1196
        %v1198 = vrot.slane %v1181, %v1197
        %v1203 = vmul.f32 %v1102, %v1186
        %v1204 = vmul.f32 %v1103, %v1190
        %v1205 = vmul.f32 %v1104, %v1194
        %v1206 = vmul.f32 %v1105, %v1198
        %v1207 = vmul.f32 %v1106, %v1186
        %v1208 = vmul.f32 %v1107, %v1190
        %v1209 = vmul.f32 %v1108, %v1194
        %v1210 = vmul.f32 %v1109, %v1198
        %v1211 = vadd.f32 %v1172, %v1203
        %v1212 = vadd.f32 %v1173, %v1204
        %v1213 = vadd.f32 %v1174, %v1205
        %v1214 = vadd.f32 %v1175, %v1206
        %v1215 = vadd.f32 %v1176, %v1207
        %v1216 = vadd.f32 %v1177, %v1208
        %v1217 = vadd.f32 %v1178, %v1209
        %v1218 = vadd.f32 %v1179, %v1210
        %v1219 = vadd.f32 %v864, %v1021
        %v1220 = vadd.f32 %v865, %v1022
        %v1221 = vadd.f32 %v866, %v1023
        %v1222 = vadd.f32 %v867, %v1024
        %v1223 = vadd.f32 %v868, %v1025
        %v1224 = vadd.f32 %v869, %v1026
        %v1225 = vadd.f32 %v870, %v1027
        %v1226 = vadd.f32 %v871, %v1028
        %v1227 = vadd.f32 %v1219, %v1211
        %v1228 = vadd.f32 %v1220, %v1212
        %v1229 = vadd.f32 %v1221, %v1213
        %v1230 = vadd.f32 %v1222, %v1214
        %v1231 = vadd.f32 %v1223, %v1215
        %v1232 = vadd.f32 %v1224, %v1216
        %v1233 = vadd.f32 %v1225, %v1217
        %v1234 = vadd.f32 %v1226, %v1218
        %v1235 = vld [vmem:[%s4] sm:$0xf]
        %v1237 = vlaneseq
        %v1238 = vshrl.u32 %v1237, 7
        %v1239 = vsub.s32 0, %v1238
        %v1240 = vrot.slane %v1235, %v1239
        %v1241 = vlaneseq
        %v1242 = vshrl.u32 %v1241, 7
        %v1243 = vsub.s32 1, %v1242
        %v1244 = vrot.slane %v1235, %v1243
        %v1245 = vlaneseq
        %v1246 = vshrl.u32 %v1245, 7
        %v1247 = vsub.s32 2, %v1246
        %v1248 = vrot.slane %v1235, %v1247
        %v1249 = vlaneseq
        %v1250 = vshrl.u32 %v1249, 7
        %v1251 = vsub.s32 3, %v1250
        %v1252 = vrot.slane %v1235, %v1251
        %v1257 = vadd.f32 %v1227, %v1240
        %v1258 = vadd.f32 %v1228, %v1244
        %v1259 = vadd.f32 %v1229, %v1248
        %v1260 = vadd.f32 %v1230, %v1252
        %v1261 = vadd.f32 %v1231, %v1240
        %v1262 = vadd.f32 %v1232, %v1244
        %v1263 = vadd.f32 %v1233, %v1248
        %v1264 = vadd.f32 %v1234, %v1252
        %v1265 = vmax.f32 %v1257, 0.0
        %v1266 = vmax.f32 %v1258, 0.0
        %v1267 = vmax.f32 %v1259, 0.0
        %v1268 = vmax.f32 %v1260, 0.0
        %v1269 = vmax.f32 %v1261, 0.0
        %v1270 = vmax.f32 %v1262, 0.0
        %v1271 = vmax.f32 %v1263, 0.0
        %v1272 = vmax.f32 %v1264, 0.0
        %v1273 = vmin.f32 %v1265, 6.0
        %v1274 = vmin.f32 %v1266, 6.0
        %v1275 = vmin.f32 %v1267, 6.0
        %v1276 = vmin.f32 %v1268, 6.0
        %v1277 = vmin.f32 %v1269, 6.0
        %v1278 = vmin.f32 %v1270, 6.0
        %v1279 = vmin.f32 %v1271, 6.0
        %v1280 = vmin.f32 %v1272, 6.0
        %v1281 = vpack.c.bf16 %v1277, %v1273
        %v1282 = vpack.c.bf16 %v1278, %v1274
        %v1283 = vpack.c.bf16 %v1279, %v1275
        %v1284 = vpack.c.bf16 %v1280, %v1276
        %v1285 = vld [vmem:[#allocation8] sm:$0xf]
        %v1286 = vld [vmem:[#allocation8 + $0x4] sm:$0xf]
        %v1287 = vld [vmem:[#allocation8 + $0x8] sm:$0xf]
        %v1288 = vld [vmem:[#allocation8 + $0xc] sm:$0xf]
        %v1289 = vld [vmem:[#allocation8 + $0x10] sm:$0xf]
        %v1290 = vld [vmem:[#allocation8 + $0x14] sm:$0xf]
        %v1291 = vld [vmem:[#allocation8 + $0x18] sm:$0xf]
        %v1292 = vld [vmem:[#allocation8 + $0x1c] sm:$0xf]
        %v1293 = vld [vmem:[#allocation8 + $0x20] sm:$0xf]
        %v1294 = vld [vmem:[#allocation8 + $0x24] sm:$0xf]
        %v1295 = vld [vmem:[#allocation8 + $0x28] sm:$0xf]
        %v1296 = vld [vmem:[#allocation8 + $0x2c] sm:$0xf]
        %v1297 = vld [vmem:[#allocation8 + $0x30] sm:$0xf]
        %v1298 = vld [vmem:[#allocation8 + $0x34] sm:$0xf]
        %v1299 = vld [vmem:[#allocation8 + $0x38] sm:$0xf]
        %v1300 = vld [vmem:[#allocation8 + $0x3c] sm:$0xf]
        %v1301 = vld [vmem:[#allocation8 + $0x40] sm:$0xf]
        %v1302 = vld [vmem:[#allocation8 + $0x44] sm:$0xf]
        %v1303 = vld [vmem:[#allocation8 + $0x48] sm:$0xf]
        %v1304 = vld [vmem:[#allocation8 + $0x4c] sm:$0xf]
        %v1305 = vld [vmem:[#allocation8 + $0x50] sm:$0xf]
        %v1306 = vld [vmem:[#allocation8 + $0x54] sm:$0xf]
        %v1307 = vld [vmem:[#allocation8 + $0x58] sm:$0xf]
        %v1308 = vld [vmem:[#allocation8 + $0x5c] sm:$0xf]
        %v1309 = vld [vmem:[#allocation8 + $0x60] sm:$0xf]
        %v1310 = vld [vmem:[#allocation8 + $0x64] sm:$0xf]
        %v1311 = vld [vmem:[#allocation8 + $0x68] sm:$0xf]
        %v1312 = vld [vmem:[#allocation8 + $0x6c] sm:$0xf]
        %v1313 = vld [vmem:[#allocation8 + $0x70] sm:$0xf]
        %v1314 = vld [vmem:[#allocation8 + $0x74] sm:$0xf]
        %v1315 = vld [vmem:[#allocation8 + $0x78] sm:$0xf]
        %v1316 = vld [vmem:[#allocation8 + $0x7c] sm:$0xf]
        %v1317 = vld [vmem:[#allocation8 + $0x80] sm:$0xf]
        %v1318 = vld [vmem:[#allocation8 + $0x84] sm:$0xf]
        %v1319 = vld [vmem:[#allocation8 + $0x88] sm:$0xf]
        %v1320 = vld [vmem:[#allocation8 + $0x8c] sm:$0xf]
        %v1321 = vld [vmem:[#allocation8 + $0x90] sm:$0xf]
        %v1322 = vld [vmem:[#allocation8 + $0x94] sm:$0xf]
        %v1323 = vld [vmem:[#allocation8 + $0x98] sm:$0xf]
        %v1324 = vld [vmem:[#allocation8 + $0x9c] sm:$0xf]
        %v1325 = vld [vmem:[#allocation8 + $0xa0] sm:$0xf]
        %v1326 = vld [vmem:[#allocation8 + $0xa4] sm:$0xf]
        %v1327 = vld [vmem:[#allocation8 + $0xa8] sm:$0xf]
        %v1328 = vld [vmem:[#allocation8 + $0xac] sm:$0xf]
        %v1329 = vld [vmem:[#allocation8 + $0xb0] sm:$0xf]
        %v1330 = vld [vmem:[#allocation8 + $0xb4] sm:$0xf]
        %v1331 = vld [vmem:[#allocation8 + $0xb8] sm:$0xf]
        %v1332 = vld [vmem:[#allocation8 + $0xbc] sm:$0xf]
        %v1333 = vld [vmem:[#allocation8 + $0xc0] sm:$0xf]
        %v1334 = vld [vmem:[#allocation8 + $0xc4] sm:$0xf]
        %v1335 = vld [vmem:[#allocation8 + $0xc8] sm:$0xf]
        %v1336 = vld [vmem:[#allocation8 + $0xcc] sm:$0xf]
        %v1337 = vld [vmem:[#allocation8 + $0xd0] sm:$0xf]
        %v1338 = vld [vmem:[#allocation8 + $0xd4] sm:$0xf]
        %v1339 = vld [vmem:[#allocation8 + $0xd8] sm:$0xf]
        %v1340 = vld [vmem:[#allocation8 + $0xdc] sm:$0xf]
        %v1341 = vld [vmem:[#allocation8 + $0xe0] sm:$0xf]
        %v1342 = vld [vmem:[#allocation8 + $0xe4] sm:$0xf]
        %v1343 = vld [vmem:[#allocation8 + $0xe8] sm:$0xf]
        %v1344 = vld [vmem:[#allocation8 + $0xec] sm:$0xf]
        %v1345 = vld [vmem:[#allocation8 + $0xf0] sm:$0xf]
        %v1346 = vld [vmem:[#allocation8 + $0xf4] sm:$0xf]
        %v1347 = vld [vmem:[#allocation8 + $0xf8] sm:$0xf]
        %v1348 = vld [vmem:[#allocation8 + $0xfc] sm:$0xf]
        %v1349 = vld [vmem:[%s6] sm:$0x1]
        %v1351 = vlaneseq
        %v1352 = vshrl.u32 %v1351, 7
        %v1353 = vsub.s32 0, %v1352
        %v1354 = vrot.slane %v1349, %v1353
        %v1420 = vunpack.c.l.b16 %v1285
        %v1421 = vunpack.c.l.b16 %v1286
        %v1422 = vunpack.c.l.b16 %v1287
        %v1423 = vunpack.c.l.b16 %v1288
        %v1424 = vunpack.c.l.b16 %v1289
        %v1425 = vunpack.c.l.b16 %v1290
        %v1426 = vunpack.c.l.b16 %v1291
        %v1427 = vunpack.c.l.b16 %v1292
        %v1428 = vunpack.c.l.b16 %v1293
        %v1429 = vunpack.c.l.b16 %v1294
        %v1430 = vunpack.c.l.b16 %v1295
        %v1431 = vunpack.c.l.b16 %v1296
        %v1432 = vunpack.c.l.b16 %v1297
        %v1433 = vunpack.c.l.b16 %v1298
        %v1434 = vunpack.c.l.b16 %v1299
        %v1435 = vunpack.c.l.b16 %v1300
        %v1436 = vunpack.c.l.b16 %v1301
        %v1437 = vunpack.c.l.b16 %v1302
        %v1438 = vunpack.c.l.b16 %v1303
        %v1439 = vunpack.c.l.b16 %v1304
        %v1440 = vunpack.c.l.b16 %v1305
        %v1441 = vunpack.c.l.b16 %v1306
        %v1442 = vunpack.c.l.b16 %v1307
        %v1443 = vunpack.c.l.b16 %v1308
        %v1444 = vunpack.c.l.b16 %v1309
        %v1445 = vunpack.c.l.b16 %v1310
        %v1446 = vunpack.c.l.b16 %v1311
        %v1447 = vunpack.c.l.b16 %v1312
        %v1448 = vunpack.c.l.b16 %v1313
        %v1449 = vunpack.c.l.b16 %v1314
        %v1450 = vunpack.c.l.b16 %v1315
        %v1451 = vunpack.c.l.b16 %v1316
        %v1452 = vunpack.c.l.b16 %v1317
        %v1453 = vunpack.c.l.b16 %v1318
        %v1454 = vunpack.c.l.b16 %v1319
        %v1455 = vunpack.c.l.b16 %v1320
        %v1456 = vunpack.c.l.b16 %v1321
        %v1457 = vunpack.c.l.b16 %v1322
        %v1458 = vunpack.c.l.b16 %v1323
        %v1459 = vunpack.c.l.b16 %v1324
        %v1460 = vunpack.c.l.b16 %v1325
        %v1461 = vunpack.c.l.b16 %v1326
        %v1462 = vunpack.c.l.b16 %v1327
        %v1463 = vunpack.c.l.b16 %v1328
        %v1464 = vunpack.c.l.b16 %v1329
        %v1465 = vunpack.c.l.b16 %v1330
        %v1466 = vunpack.c.l.b16 %v1331
        %v1467 = vunpack.c.l.b16 %v1332
        %v1468 = vunpack.c.l.b16 %v1333
        %v1469 = vunpack.c.l.b16 %v1334
        %v1470 = vunpack.c.l.b16 %v1335
        %v1471 = vunpack.c.l.b16 %v1336
        %v1472 = vunpack.c.l.b16 %v1337
        %v1473 = vunpack.c.l.b16 %v1338
        %v1474 = vunpack.c.l.b16 %v1339
        %v1475 = vunpack.c.l.b16 %v1340
        %v1476 = vunpack.c.l.b16 %v1341
        %v1477 = vunpack.c.l.b16 %v1342
        %v1478 = vunpack.c.l.b16 %v1343
        %v1479 = vunpack.c.l.b16 %v1344
        %v1480 = vunpack.c.l.b16 %v1345
        %v1481 = vunpack.c.l.b16 %v1346
        %v1482 = vunpack.c.l.b16 %v1347
        %v1483 = vunpack.c.l.b16 %v1348
        %v1484 = vpack.c.b16 %v1421, %v1420
        %v1485 = vpack.c.b16 %v1423, %v1422
        %v1486 = vpack.c.b16 %v1425, %v1424
        %v1487 = vpack.c.b16 %v1427, %v1426
        %v1488 = vpack.c.b16 %v1429, %v1428
        %v1489 = vpack.c.b16 %v1431, %v1430
        %v1490 = vpack.c.b16 %v1433, %v1432
        %v1491 = vpack.c.b16 %v1435, %v1434
        %v1492 = vpack.c.b16 %v1437, %v1436
        %v1493 = vpack.c.b16 %v1439, %v1438
        %v1494 = vpack.c.b16 %v1441, %v1440
        %v1495 = vpack.c.b16 %v1443, %v1442
        %v1496 = vpack.c.b16 %v1445, %v1444
        %v1497 = vpack.c.b16 %v1447, %v1446
        %v1498 = vpack.c.b16 %v1449, %v1448
        %v1499 = vpack.c.b16 %v1451, %v1450
        %v1500 = vpack.c.b16 %v1453, %v1452
        %v1501 = vpack.c.b16 %v1455, %v1454
        %v1502 = vpack.c.b16 %v1457, %v1456
        %v1503 = vpack.c.b16 %v1459, %v1458
        %v1504 = vpack.c.b16 %v1461, %v1460
        %v1505 = vpack.c.b16 %v1463, %v1462
        %v1506 = vpack.c.b16 %v1465, %v1464
        %v1507 = vpack.c.b16 %v1467, %v1466
        %v1508 = vpack.c.b16 %v1469, %v1468
        %v1509 = vpack.c.b16 %v1471, %v1470
        %v1510 = vpack.c.b16 %v1473, %v1472
        %v1511 = vpack.c.b16 %v1475, %v1474
        %v1512 = vpack.c.b16 %v1477, %v1476
        %v1513 = vpack.c.b16 %v1479, %v1478
        %v1514 = vpack.c.b16 %v1481, %v1480
        %v1515 = vpack.c.b16 %v1483, %v1482
        %1548 = vmatprep.subr.bf16.mxu0 0
        %1549 = vmatpush1.bf16.msra.mxu0 %v1484
        %1550 = vmatprep.subr.bf16.mxu0 0
        %1551 = vmatpush1.bf16.msra.mxu0 %v1485
        %1552 = vmatprep.subr.bf16.mxu0 0
        %1553 = vmatpush1.bf16.msra.mxu0 %v1486
        %1554 = vmatprep.subr.bf16.mxu0 0
        %1555 = vmatpush1.bf16.msra.mxu0 %v1487
        %1556 = vmatprep.subr.bf16.mxu0 0
        %1557 = vmatpush1.bf16.msra.mxu0 %v1488
        %1558 = vmatprep.subr.bf16.mxu0 0
        %1559 = vmatpush1.bf16.msra.mxu0 %v1489
        %1560 = vmatprep.subr.bf16.mxu0 0
        %1561 = vmatpush1.bf16.msra.mxu0 %v1490
        %1562 = vmatprep.subr.bf16.mxu0 0
        %1563 = vmatpush1.bf16.msra.mxu0 %v1491
        %1564 = vmatprep.subr.bf16.mxu0 0
        %1565 = vmatpush1.bf16.msra.mxu0 %v1492
        %1566 = vmatprep.subr.bf16.mxu0 0
        %1567 = vmatpush1.bf16.msra.mxu0 %v1493
        %1568 = vmatprep.subr.bf16.mxu0 0
        %1569 = vmatpush1.bf16.msra.mxu0 %v1494
        %1570 = vmatprep.subr.bf16.mxu0 0
        %1571 = vmatpush1.bf16.msra.mxu0 %v1495
        %1572 = vmatprep.subr.bf16.mxu0 0
        %1573 = vmatpush1.bf16.msra.mxu0 %v1496
        %1574 = vmatprep.subr.bf16.mxu0 0
        %1575 = vmatpush1.bf16.msra.mxu0 %v1497
        %1576 = vmatprep.subr.bf16.mxu0 0
        %1577 = vmatpush1.bf16.msra.mxu0 %v1498
        %1578 = vmatprep.subr.bf16.mxu0 0
        %1579 = vmatpush1.bf16.msra.mxu0 %v1499
        %1580 = vmatprep.mubr.bf16.mxu0 %v1282
        %1581 = vmatmul.mubr.bf16.gmra.mrb[0].mxu0 %v1281
        %v1582 = vpop.f32.mrb[0].mxu0
        %v1583 = vadd.f32 %v1354, %v1582
        %v1584 = vpop.f32.mrb[0].mxu0
        %v1585 = vpop.f32.mrb[0].mxu0
        %v1586 = vadd.f32 %v1354, %v1585
        %v1587 = vpop.f32.mrb[0].mxu0
        %1588 = vdwg.mxu0
        %1589 = vmatprep.subr.bf16.mxu0 0
        %1590 = vmatpush1.bf16.msra.mxu0 %v1500
        %1591 = vmatprep.subr.bf16.mxu0 0
        %1592 = vmatpush1.bf16.msra.mxu0 %v1501
        %1593 = vmatprep.subr.bf16.mxu0 0
        %1594 = vmatpush1.bf16.msra.mxu0 %v1502
        %1595 = vmatprep.subr.bf16.mxu0 0
        %1596 = vmatpush1.bf16.msra.mxu0 %v1503
        %1597 = vmatprep.subr.bf16.mxu0 0
        %1598 = vmatpush1.bf16.msra.mxu0 %v1504
        %1599 = vmatprep.subr.bf16.mxu0 0
        %1600 = vmatpush1.bf16.msra.mxu0 %v1505
        %1601 = vmatprep.subr.bf16.mxu0 0
        %1602 = vmatpush1.bf16.msra.mxu0 %v1506
        %1603 = vmatprep.subr.bf16.mxu0 0
        %1604 = vmatpush1.bf16.msra.mxu0 %v1507
        %1605 = vmatprep.subr.bf16.mxu0 0
        %1606 = vmatpush1.bf16.msra.mxu0 %v1508
        %1607 = vmatprep.subr.bf16.mxu0 0
        %1608 = vmatpush1.bf16.msra.mxu0 %v1509
        %1609 = vmatprep.subr.bf16.mxu0 0
        %1610 = vmatpush1.bf16.msra.mxu0 %v1510
        %1611 = vmatprep.subr.bf16.mxu0 0
        %1612 = vmatpush1.bf16.msra.mxu0 %v1511
        %1613 = vmatprep.subr.bf16.mxu0 0
        %1614 = vmatpush1.bf16.msra.mxu0 %v1512
        %1615 = vmatprep.subr.bf16.mxu0 0
        %1616 = vmatpush1.bf16.msra.mxu0 %v1513
        %1617 = vmatprep.subr.bf16.mxu0 0
        %1618 = vmatpush1.bf16.msra.mxu0 %v1514
        %1619 = vmatprep.subr.bf16.mxu0 0
        %1620 = vmatpush1.bf16.msra.mxu0 %v1515
        %1621 = vmatprep.mubr.bf16.mxu0 %v1284
        %1622 = vmatmul.mubr.bf16.gmra.mrb[0].mxu0 %v1283
        %v1623 = vpop.f32.mrb[0].mxu0
        %v1624 = vadd.f32 %v1583, %v1623
        %v1625 = vpop.f32.mrb[0].mxu0
        %v1626 = vpop.f32.mrb[0].mxu0
        %v1627 = vadd.f32 %v1586, %v1626
        %v1628 = vpop.f32.mrb[0].mxu0
        %1629 = vdwg.mxu0
        %v1630 = vadd.f32 %v1624, %v342
        %v1631 = vadd.f32 %v1627, %v343
        %1632 = vst [vmem:[%s340] sm:$0xff] %v1630
        %1633 = vst [vmem:[%s340 + $0x8] sm:$0xff] %v1631
        %s1634 = sand.u32 %s186, 1
        %s1635 = scalar_lea.sflag [#allocation4], %s1634
        %s1636 = sand.u32 %s186, 1
        %s1637 = smul.addr %s1636, 16
        %s1638 = scalar_lea.vmem [#allocation10], %s1637
        // Predicated region
        $region65: #{tpu_custom_call.1} parent=47 // pred_check
          %p1639 = pneg %p196
        $region66: #{tpu_custom_call.1} parent=47 // pred_check_branch
          %1641 = sbr.rel (%p1639) target = $region68
        $region67: #{tpu_custom_call.1} parent=47 // pred_region
          %s1643 = ssub.s32 256, 256
          %1644 = vsyncadd %s1635, %s1643
          %s1645 = smul.addr %s26, 2
          %s1646 = smul.addr %s1645, 128
          %s1647 = scalar_lea.hbm %s7, %s1646
          %s1648 = sshll.u32 %s1638, 4
          %s1649 = int_to_ptr.vmem [resolvable:$true] %s1648
          %1654 = dma.vmem_to_hbm [thread:$0]  %s1649, 256, %s1647, %s1635, 128, 128, 8
        $region68: #{tpu_custom_call.1} parent=47 // pred_fallthru
          _
      $region48: #{tpu_custom_call.1} parent=5 // pred_fallthru
        _
      %p1655 = scmp.le.s32.totalorder 2, %s21
      // Predicated region
      $region69: #{tpu_custom_call.1} parent=5 // pred_check
        %p1656 = pneg %p1655
      $region70: #{tpu_custom_call.1} parent=5 // pred_check_branch
        %1658 = sbr.rel (%p1656) target = $region72
      $region71: #{tpu_custom_call.1} parent=5 // pred_region
        %s1659 = ssub.s32 %s21, 2
        // Predicated region
        $region73: #{tpu_custom_call.1} parent=71 // pred_check
          %p1660 = pneg %p202
        $region74: #{tpu_custom_call.1} parent=71 // pred_check_branch
          %1662 = sbr.rel (%p1660) target = $region76
        $region75: #{tpu_custom_call.1} parent=71 // pred_region
          %s1663 = sand.u32 %s187, 1
          %s1664 = scalar_lea.sflag [#allocation4], %s1663
          %s1665 = sand.u32 %s187, 1
          %s1666 = smul.addr %s1665, 16
          %s1667 = scalar_lea.vmem [#allocation10], %s1666
          %1668 = dma.done %s1664, 256
        $region76: #{tpu_custom_call.1} parent=71 // pred_fallthru
          _
      $region72: #{tpu_custom_call.1} parent=5 // pred_fallthru
        _
    $region6: #{tpu_custom_call.1} parent=1 // loop_footer
      %s25 = sadd.s32 1, %s21
    $region7: #{tpu_custom_call.1} parent=1 // loop_footer_branch
      %20 = sbr.rel target = $region3
    $region8: #{tpu_custom_call.1} parent=1 // loop_exit
      _
    %1669 = vsyncpa [#allocation3], 1
    %s1670 = scalar_lea.sflag [#allocation3], 1
    %1671 = vsyncpa %s1670, 1
    %1672 = vsyncpa [#allocation6], 1
    %1673 = vsyncpa [#allocation9], 1
    %1674 = vsyncpa [#allocation4], 1
    %s1675 = scalar_lea.sflag [#allocation4], 1
    %1676 = vsyncpa %s1675, 1

// kernel: tpu_custom_call.1
$region0: #{tpu_custom_call.1}
  #allocation0 [shape = 'u32[]', space=smem, size = 0x4, offset = 0x4, fixed_abs, tag = 'smem constant byte address 0x4 - core index']
  #allocation1 [shape = 'u32[144,128]{1,0:T(1,128)}', space=vmem, size = 0x12000, scoped, tag = 'internal scratch']
  %s0 = inlined_call_operand.hbm [shape: f32[2,16,128], index: 0, kind: input, shape index: {}]
  %s1 = inlined_call_operand.hbm [shape: bf16[128,512], index: 1, kind: input, shape index: {}]
  %s2 = inlined_call_operand.vmem [shape: f32[1,512], index: 2, kind: input, shape index: {}]
  %s3 = inlined_call_operand.hbm [shape: f32[9,512], index: 3, kind: input, shape index: {}]
  %s4 = inlined_call_operand.vmem [shape: f32[1,512], index: 4, kind: input, shape index: {}]
  %s5 = inlined_call_operand.hbm [shape: bf16[512,128], index: 5, kind: input, shape index: {}]
  %s6 = inlined_call_operand.vmem [shape: f32[1,128], index: 6, kind: input, shape index: {}]
  %s7 = inlined_call_operand.hbm [shape: f32[2,16,128], index: 7, kind: output, shape index: {}]
  %s8 = sld [smem:[#allocation0]]
  $region77: #{tpu_custom_call.1} parent=0
    _
  %s10 = ssub.s32 1, %s8
  %s11 = scalar_select 0, %s10, %s8
  $region1: #{tpu_custom_call.1} parent=0
    #allocation2 [shape = 'u8[16384]{0}', space=vmem, size = 0x4000, scoped, tag = 'input window, operand 0']
    #allocation3 [shape = 's32[2]{0}', space=sflag, size = 0x8, scoped, tag = 'scoped memory for tpu_custom_call.1']
    #allocation4 [shape = 's32[2]{0}', space=sflag, size = 0x8, scoped, tag = 'scoped memory for tpu_custom_call.1']
    #allocation5 [shape = 'u8[131072]{0}', space=vmem, size = 0x20000, scoped, tag = 'input window, operand 1, single buffered']
    #allocation6 [shape = 's32[1]{0}', space=sflag, size = 0x4, scoped, tag = 'scoped memory for tpu_custom_call.1']
    #allocation7 [shape = 'u8[32768]{0}', space=vmem, size = 0x8000, scoped, tag = 'input window, operand 3, single buffered']
    #allocation8 [shape = 'u8[131072]{0}', space=vmem, size = 0x20000, scoped, tag = 'input window, operand 5, single buffered']
    #allocation9 [shape = 's32[1]{0}', space=sflag, size = 0x4, scoped, tag = 'scoped memory for tpu_custom_call.1']
    #allocation10 [shape = 'u8[16384]{0}', space=vmem, size = 0x4000, scoped, tag = 'output window, operand 0']
    %12 = vsyncpa [#allocation3], 0
    %s13 = scalar_lea.sflag [#allocation3], 1
    %14 = vsyncpa %s13, 0
    %15 = vsyncpa [#allocation6], 0
    %16 = vsyncpa [#allocation9], 0
    %17 = vsyncpa [#allocation4], 0
    %s18 = scalar_lea.sflag [#allocation4], 1
    %19 = vsyncpa %s18, 0
    loop: start=0, step=1, limit=4
    $region2: #{tpu_custom_call.1} parent=1 // loop_pre_header
      _
    $region3: #{tpu_custom_call.1} parent=1 // loop_header
      %s21 = sphi 0, %s25
      %p22 = scmp.ge.s32.totalorder %s21, 4
      %s31 = sphi 0, %s33
      %s34 = sphi 0, %s31
      %s35 = sphi 0, %s34
      %s51 = sphi 0, %s35
      %s55 = sphi 0, %s55
      %s57 = sphi 0, %s55
      %s58 = sphi 0, %s57
      %s72 = sphi 0, %s58
      %s76 = sphi 0, %s76
      %s78 = sphi 0, %s76
      %s79 = sphi 0, %s78
      %s93 = sphi 0, %s79
      %s97 = sphi 0, %s97
      %s99 = sphi 0, %s97
      %s100 = sphi 0, %s99
      %s114 = sphi 0, %s100
      %s118 = sphi 0, %s118
      %s120 = sphi 0, %s118
      %s121 = sphi 0, %s120
      %s135 = sphi 0, %s121
      %s139 = sphi 0, %s139
      %s141 = sphi 0, %s139
      %s142 = sphi 0, %s141
      %s156 = sphi 0, %s142
      %s160 = sphi 0, %s160
      %s162 = sphi 0, %s160
      %s163 = sphi 0, %s162
      %s177 = sphi 0, %s163
      %s183 = sphi 0, %s185
      %s186 = sphi 0, %s183
      %s187 = sphi 0, %s186
      %s203 = sphi 0, %s187
    $region4: #{tpu_custom_call.1} parent=1 // loop_header_branch
      %24 = sbr.rel (%p22) target = $region8
    $region5: #{tpu_custom_call.1} parent=1 // loop_body
      %s26 = ssub.s32 %s21, 1
      %s27 = ssub.s32 %s21, 2
      %s28 = sadd.s32 %s21, 1
      %s29 = ssub.s32 %s21, %s28
      %p30 = scmp.eq.s32.totalorder %s29, 0
      %s32 = sadd.s32 %s31, 1
      %s33 = scalar_select %p30, %s31, %s32
      %p36 = pneg %p30
      %p37 = scmp.eq.s32.totalorder %s21, 1
      %p38 = por %p36, %p37
      %p39 = scmp.ne.s32.totalorder %s31, %s34
      %p40 = scmp.eq.s32.totalorder %s21, 0
      %p41 = por %p39, %p40
      %p42 = scmp.ne.s32.totalorder %s31, %s34
      %p43 = scmp.eq.s32.totalorder %s26, 1
      %p44 = por %p42, %p43
      %p45 = scmp.ne.s32.totalorder %s34, %s35
      %p46 = scmp.eq.s32.totalorder %s26, 0
      %p47 = por %p45, %p46
      %p48 = scmp.ne.s32.totalorder %s34, %s35
      %p49 = scmp.eq.s32.totalorder %s27, 1
      %p50 = por %p48, %p49
      %p52 = scmp.ne.s32.totalorder %s35, %s51
      %p53 = scmp.eq.s32.totalorder %s27, 0
      %p54 = por %p52, %p53
      %s56 = sadd.s32 %s55, 1
      %p59 = scmp.eq.s32.totalorder %s21, 1
      %p60 = scmp.ne.s32.totalorder %s55, %s57
      %p61 = scmp.eq.s32.totalorder %s21, 0
      %p62 = por %p60, %p61
      %p63 = scmp.ne.s32.totalorder %s55, %s57
      %p64 = scmp.eq.s32.totalorder %s26, 1
      %p65 = por %p63, %p64
      %p66 = scmp.ne.s32.totalorder %s57, %s58
      %p67 = scmp.eq.s32.totalorder %s26, 0
      %p68 = por %p66, %p67
      %p69 = scmp.ne.s32.totalorder %s57, %s58
      %p70 = scmp.eq.s32.totalorder %s27, 1
      %p71 = por %p69, %p70
      %p73 = scmp.ne.s32.totalorder %s58, %s72
      %p74 = scmp.eq.s32.totalorder %s27, 0
      %p75 = por %p73, %p74
      %s77 = sadd.s32 %s76, 1
      %p80 = scmp.eq.s32.totalorder %s21, 1
      %p81 = scmp.ne.s32.totalorder %s76, %s78
      %p82 = scmp.eq.s32.totalorder %s21, 0
      %p83 = por %p81, %p82
      %p84 = scmp.ne.s32.totalorder %s76, %s78
      %p85 = scmp.eq.s32.totalorder %s26, 1
      %p86 = por %p84, %p85
      %p87 = scmp.ne.s32.totalorder %s78, %s79
      %p88 = scmp.eq.s32.totalorder %s26, 0
      %p89 = por %p87, %p88
      %p90 = scmp.ne.s32.totalorder %s78, %s79
      %p91 = scmp.eq.s32.totalorder %s27, 1
      %p92 = por %p90, %p91
      %p94 = scmp.ne.s32.totalorder %s79, %s93
      %p95 = scmp.eq.s32.totalorder %s27, 0
      %p96 = por %p94, %p95
      %s98 = sadd.s32 %s97, 1
      %p101 = scmp.eq.s32.totalorder %s21, 1
      %p102 = scmp.ne.s32.totalorder %s97, %s99
      %p103 = scmp.eq.s32.totalorder %s21, 0
      %p104 = por %p102, %p103
      %p105 = scmp.ne.s32.totalorder %s97, %s99
      %p106 = scmp.eq.s32.totalorder %s26, 1
      %p107 = por %p105, %p106
      %p108 = scmp.ne.s32.totalorder %s99, %s100
      %p109 = scmp.eq.s32.totalorder %s26, 0
      %p110 = por %p108, %p109
      %p111 = scmp.ne.s32.totalorder %s99, %s100
      %p112 = scmp.eq.s32.totalorder %s27, 1
      %p113 = por %p111, %p112
      %p115 = scmp.ne.s32.totalorder %s100, %s114
      %p116 = scmp.eq.s32.totalorder %s27, 0
      %p117 = por %p115, %p116
      %s119 = sadd.s32 %s118, 1
      %p122 = scmp.eq.s32.totalorder %s21, 1
      %p123 = scmp.ne.s32.totalorder %s118, %s120
      %p124 = scmp.eq.s32.totalorder %s21, 0
      %p125 = por %p123, %p124
      %p126 = scmp.ne.s32.totalorder %s118, %s120
      %p127 = scmp.eq.s32.totalorder %s26, 1
      %p128 = por %p126, %p127
      %p129 = scmp.ne.s32.totalorder %s120, %s121
      %p130 = scmp.eq.s32.totalorder %s26, 0
      %p131 = por %p129, %p130
      %p132 = scmp.ne.s32.totalorder %s120, %s121
      %p133 = scmp.eq.s32.totalorder %s27, 1
      %p134 = por %p132, %p133
      %p136 = scmp.ne.s32.totalorder %s121, %s135
      %p137 = scmp.eq.s32.totalorder %s27, 0
      %p138 = por %p136, %p137
      %s140 = sadd.s32 %s139, 1
      %p143 = scmp.eq.s32.totalorder %s21, 1
      %p144 = scmp.ne.s32.totalorder %s139, %s141
      %p145 = scmp.eq.s32.totalorder %s21, 0
      %p146 = por %p144, %p145
      %p147 = scmp.ne.s32.totalorder %s139, %s141
      %p148 = scmp.eq.s32.totalorder %s26, 1
      %p149 = por %p147, %p148
      %p150 = scmp.ne.s32.totalorder %s141, %s142
      %p151 = scmp.eq.s32.totalorder %s26, 0
      %p152 = por %p150, %p151
      %p153 = scmp.ne.s32.totalorder %s141, %s142
      %p154 = scmp.eq.s32.totalorder %s27, 1
      %p155 = por %p153, %p154
      %p157 = scmp.ne.s32.totalorder %s142, %s156
      %p158 = scmp.eq.s32.totalorder %s27, 0
      %p159 = por %p157, %p158
      %s161 = sadd.s32 %s160, 1
      %p164 = scmp.eq.s32.totalorder %s21, 1
      %p165 = scmp.ne.s32.totalorder %s160, %s162
      %p166 = scmp.eq.s32.totalorder %s21, 0
      %p167 = por %p165, %p166
      %p168 = scmp.ne.s32.totalorder %s160, %s162
      %p169 = scmp.eq.s32.totalorder %s26, 1
      %p170 = por %p168, %p169
      %p171 = scmp.ne.s32.totalorder %s162, %s163
      %p172 = scmp.eq.s32.totalorder %s26, 0
      %p173 = por %p171, %p172
      %p174 = scmp.ne.s32.totalorder %s162, %s163
      %p175 = scmp.eq.s32.totalorder %s27, 1
      %p176 = por %p174, %p175
      %p178 = scmp.ne.s32.totalorder %s163, %s177
      %p179 = scmp.eq.s32.totalorder %s27, 0
      %p180 = por %p178, %p179
      %s181 = ssub.s32 %s21, %s28
      %p182 = scmp.eq.s32.totalorder %s181, 0
      %s184 = sadd.s32 %s183, 1
      %s185 = scalar_select %p182, %s183, %s184
      %p188 = pneg %p182
      %p189 = scmp.eq.s32.totalorder %s21, 1
      %p190 = por %p188, %p189
      %p191 = scmp.ne.s32.totalorder %s183, %s186
      %p192 = scmp.eq.s32.totalorder %s21, 0
      %p193 = por %p191, %p192
      %p194 = scmp.ne.s32.totalorder %s183, %s186
      %p195 = scmp.eq.s32.totalorder %s26, 1
      %p196 = por %p194, %p195
      %p197 = scmp.ne.s32.totalorder %s186, %s187
      %p198 = scmp.eq.s32.totalorder %s26, 0
      %p199 = por %p197, %p198
      %p200 = scmp.ne.s32.totalorder %s186, %s187
      %p201 = scmp.eq.s32.totalorder %s27, 1
      %p202 = por %p200, %p201
      %p204 = scmp.ne.s32.totalorder %s187, %s203
      %p205 = scmp.eq.s32.totalorder %s27, 0
      %p206 = por %p204, %p205
      %p207 = scmp.le.s32.totalorder 1, %s21
      %p208 = scmp.lt.s32.totalorder %s21, 3
      %p209 = pnand %p207, %p208
      %p210 = pneg %p209
      // Predicated region
      $region9: #{tpu_custom_call.1} parent=5 // pred_check
        _
      $region10: #{tpu_custom_call.1} parent=5 // pred_check_branch
        %212 = sbr.rel (%p209) target = $region12
      $region11: #{tpu_custom_call.1} parent=5 // pred_region
        %s213 = ssub.s32 %s21, 1
        // Predicated region
        $region13: #{tpu_custom_call.1} parent=11 // pred_check
          %p214 = pneg %p68
        $region14: #{tpu_custom_call.1} parent=11 // pred_check_branch
          %216 = sbr.rel (%p214) target = $region16
        $region15: #{tpu_custom_call.1} parent=11 // pred_region
          %s218 = ssub.s32 4096, 4096
          %219 = vsyncadd [#allocation6], %s218
          %s220 = sshll.u32 [#allocation5], 4
          %s221 = int_to_ptr.vmem [resolvable:$true] %s220
          %226 = dma.hbm_to_vmem [thread:$0]  %s1, 4096, %s221, [#allocation6], 256, 256, 16
        $region16: #{tpu_custom_call.1} parent=11 // pred_fallthru
          _
        // Predicated region
        $region17: #{tpu_custom_call.1} parent=11 // pred_check
          %p227 = pneg %p89
        $region18: #{tpu_custom_call.1} parent=11 // pred_check_branch
          %229 = sbr.rel (%p227) target = $region20
        $region19: #{tpu_custom_call.1} parent=11 // pred_region
          _
        $region20: #{tpu_custom_call.1} parent=11 // pred_fallthru
          _
        // Predicated region
        $region21: #{tpu_custom_call.1} parent=11 // pred_check
          %p230 = pneg %p110
        $region22: #{tpu_custom_call.1} parent=11 // pred_check_branch
          %232 = sbr.rel (%p230) target = $region24
        $region23: #{tpu_custom_call.1} parent=11 // pred_region
          %s234 = ssub.s32 1024, 1024
          %235 = vsyncadd [#allocation6], %s234
          %s236 = sshll.u32 [#allocation7], 4
          %s237 = int_to_ptr.vmem [resolvable:$true] %s236
          %242 = dma.hbm_to_vmem [thread:$0]  %s3, 1024, %s237, [#allocation6], 512, 512, 32
        $region24: #{tpu_custom_call.1} parent=11 // pred_fallthru
          _
        // Predicated region
        $region25: #{tpu_custom_call.1} parent=11 // pred_check
          %p243 = pneg %p131
        $region26: #{tpu_custom_call.1} parent=11 // pred_check_branch
          %245 = sbr.rel (%p243) target = $region28
        $region27: #{tpu_custom_call.1} parent=11 // pred_region
          _
        $region28: #{tpu_custom_call.1} parent=11 // pred_fallthru
          _
        // Predicated region
        $region29: #{tpu_custom_call.1} parent=11 // pred_check
          %p246 = pneg %p152
        $region30: #{tpu_custom_call.1} parent=11 // pred_check_branch
          %248 = sbr.rel (%p246) target = $region32
        $region31: #{tpu_custom_call.1} parent=11 // pred_region
          %s250 = ssub.s32 4096, 4096
          %251 = vsyncadd [#allocation9], %s250
          %s252 = sshll.u32 [#allocation8], 4
          %s253 = int_to_ptr.vmem [resolvable:$true] %s252
          %258 = dma.hbm_to_vmem [thread:$0]  %s5, 4096, %s253, [#allocation9], 64, 64, 4
        $region32: #{tpu_custom_call.1} parent=11 // pred_fallthru
          _
        // Predicated region
        $region33: #{tpu_custom_call.1} parent=11 // pred_check
          %p259 = pneg %p173
        $region34: #{tpu_custom_call.1} parent=11 // pred_check_branch
          %261 = sbr.rel (%p259) target = $region36
        $region35: #{tpu_custom_call.1} parent=11 // pred_region
          _
        $region36: #{tpu_custom_call.1} parent=11 // pred_fallthru
          _
      $region12: #{tpu_custom_call.1} parent=5 // pred_fallthru
        _
      %p262 = scmp.lt.s32.totalorder %s21, 2
      // Predicated region
      $region37: #{tpu_custom_call.1} parent=5 // pred_check
        %p263 = pneg %p262
      $region38: #{tpu_custom_call.1} parent=5 // pred_check_branch
        %265 = sbr.rel (%p263) target = $region40
      $region39: #{tpu_custom_call.1} parent=5 // pred_region
        // Predicated region
        $region41: #{tpu_custom_call.1} parent=39 // pred_check
          %p266 = pneg %p41
        $region42: #{tpu_custom_call.1} parent=39 // pred_check_branch
          %268 = sbr.rel (%p266) target = $region44
        $region43: #{tpu_custom_call.1} parent=39 // pred_region
          %s269 = sand.u32 %s31, 1
          %s270 = scalar_lea.sflag [#allocation3], %s269
          %s271 = sand.u32 %s31, 1
          %s272 = smul.addr %s271, 16
          %s273 = scalar_lea.vmem [#allocation2], %s272
          %s275 = ssub.s32 256, 256
          %276 = vsyncadd %s270, %s275
          %s277 = smul.addr %s21, 2
          %s278 = smul.addr %s277, 128
          %s279 = scalar_lea.hbm %s0, %s278
          %s280 = sshll.u32 %s273, 4
          %s281 = int_to_ptr.vmem [resolvable:$true] %s280
          %286 = dma.hbm_to_vmem [thread:$0]  %s279, 256, %s281, %s270, 128, 128, 8
        $region44: #{tpu_custom_call.1} parent=39 // pred_fallthru
          _
      $region40: #{tpu_custom_call.1} parent=5 // pred_fallthru
        _
      %p287 = scmp.le.s32.totalorder 1, %s21
      %p288 = scmp.lt.s32.totalorder %s21, 3
      %p289 = pnand %p287, %p288
      %p290 = pneg %p289
      // Predicated region
      $region45: #{tpu_custom_call.1} parent=5 // pred_check
        _
      $region46: #{tpu_custom_call.1} parent=5 // pred_check_branch
        %292 = sbr.rel (%p289) target = $region48
      $region47: #{tpu_custom_call.1} parent=5 // pred_region
        %s293 = ssub.s32 %s21, 1
        %s294 = sand.u32 %s34, 1
        %s295 = scalar_lea.sflag [#allocation3], %s294
        %s296 = sand.u32 %s34, 1
        %s297 = smul.addr %s296, 16
        %s298 = scalar_lea.vmem [#allocation2], %s297
        // Predicated region
        $region49: #{tpu_custom_call.1} parent=47 // pred_check
          %p299 = pneg %p47
        $region50: #{tpu_custom_call.1} parent=47 // pred_check_branch
          %301 = sbr.rel (%p299) target = $region52
        $region51: #{tpu_custom_call.1} parent=47 // pred_region
          %302 = dma.done %s295, 256
        $region52: #{tpu_custom_call.1} parent=47 // pred_fallthru
          _
        // Predicated region
        $region53: #{tpu_custom_call.1} parent=47 // pred_check
          %p303 = pneg %p68
        $region54: #{tpu_custom_call.1} parent=47 // pred_check_branch
          %305 = sbr.rel (%p303) target = $region56
        $region55: #{tpu_custom_call.1} parent=47 // pred_region
          %306 = dma.done [#allocation6], 4096
        $region56: #{tpu_custom_call.1} parent=47 // pred_fallthru
          _
        // Predicated region
        $region57: #{tpu_custom_call.1} parent=47 // pred_check
          %p307 = pneg %p110
        $region58: #{tpu_custom_call.1} parent=47 // pred_check_branch
          %309 = sbr.rel (%p307) target = $region60
        $region59: #{tpu_custom_call.1} parent=47 // pred_region
          %310 = dma.done [#allocation6], 1024
        $region60: #{tpu_custom_call.1} parent=47 // pred_fallthru
          _
        // Predicated region
        $region61: #{tpu_custom_call.1} parent=47 // pred_check
          %p311 = pneg %p152
        $region62: #{tpu_custom_call.1} parent=47 // pred_check_branch
          %313 = sbr.rel (%p311) target = $region64
        $region63: #{tpu_custom_call.1} parent=47 // pred_region
          %314 = dma.done [#allocation9], 4096
        $region64: #{tpu_custom_call.1} parent=47 // pred_fallthru
          _
        %s315 = sand.u32 %s34, 1
        %s316 = scalar_lea.sflag [#allocation3], %s315
        %s317 = sand.u32 %s34, 1
        %s318 = smul.addr %s317, 16
        %s319 = scalar_lea.vmem [#allocation2], %s318
        %p320 = pneg %p47
        %p321 = pneg %p44
        %p322 = pneg %p68
        %p323 = pneg %p65
        %p324 = pneg %p89
        %p325 = pneg %p86
        %p326 = pneg %p110
        %p327 = pneg %p107
        %p328 = pneg %p131
        %p329 = pneg %p128
        %p330 = pneg %p152
        %p331 = pneg %p149
        %p332 = pneg %p173
        %p333 = pneg %p170
        %p334 = pneg %p199
        %p335 = pneg %p196
        %s336 = sand.u32 %s186, 1
        %s337 = scalar_lea.sflag [#allocation4], %s336
        %s338 = sand.u32 %s186, 1
        %s339 = smul.addr %s338, 16
        %s340 = scalar_lea.vmem [#allocation10], %s339
        %v342 = vld [vmem:[%s298] sm:$0xff]
        %v343 = vld [vmem:[%s298 + $0x8] sm:$0xff]
        %v344 = vpack.c.bf16 %v343, %v342
        %v345 = vld [vmem:[#allocation5] sm:$0xff]
        %v346 = vld [vmem:[#allocation5 + $0x8] sm:$0xff]
        %v347 = vld [vmem:[#allocation5 + $0x10] sm:$0xff]
        %v348 = vld [vmem:[#allocation5 + $0x18] sm:$0xff]
        %v349 = vld [vmem:[#allocation5 + $0x20] sm:$0xff]
        %v350 = vld [vmem:[#allocation5 + $0x28] sm:$0xff]
        %v351 = vld [vmem:[#allocation5 + $0x30] sm:$0xff]
        %v352 = vld [vmem:[#allocation5 + $0x38] sm:$0xff]
        %v353 = vld [vmem:[#allocation5 + $0x40] sm:$0xff]
        %v354 = vld [vmem:[#allocation5 + $0x48] sm:$0xff]
        %v355 = vld [vmem:[#allocation5 + $0x50] sm:$0xff]
        %v356 = vld [vmem:[#allocation5 + $0x58] sm:$0xff]
        %v357 = vld [vmem:[#allocation5 + $0x60] sm:$0xff]
        %v358 = vld [vmem:[#allocation5 + $0x68] sm:$0xff]
        %v359 = vld [vmem:[#allocation5 + $0x70] sm:$0xff]
        %v360 = vld [vmem:[#allocation5 + $0x78] sm:$0xff]
        %v361 = vld [vmem:[#allocation5 + $0x80] sm:$0xff]
        %v362 = vld [vmem:[#allocation5 + $0x88] sm:$0xff]
        %v363 = vld [vmem:[#allocation5 + $0x90] sm:$0xff]
        %v364 = vld [vmem:[#allocation5 + $0x98] sm:$0xff]
        %v365 = vld [vmem:[#allocation5 + $0xa0] sm:$0xff]
        %v366 = vld [vmem:[#allocation5 + $0xa8] sm:$0xff]
        %v367 = vld [vmem:[#allocation5 + $0xb0] sm:$0xff]
        %v368 = vld [vmem:[#allocation5 + $0xb8] sm:$0xff]
        %v369 = vld [vmem:[#allocation5 + $0xc0] sm:$0xff]
        %v370 = vld [vmem:[#allocation5 + $0xc8] sm:$0xff]
        %v371 = vld [vmem:[#allocation5 + $0xd0] sm:$0xff]
        %v372 = vld [vmem:[#allocation5 + $0xd8] sm:$0xff]
        %v373 = vld [vmem:[#allocation5 + $0xe0] sm:$0xff]
        %v374 = vld [vmem:[#allocation5 + $0xe8] sm:$0xff]
        %v375 = vld [vmem:[#allocation5 + $0xf0] sm:$0xff]
        %v376 = vld [vmem:[#allocation5 + $0xf8] sm:$0xff]
        %v377 = vld [vmem:[%s2] sm:$0xf]
        %v379 = vlaneseq
        %v380 = vshrl.u32 %v379, 7
        %v381 = vsub.s32 0, %v380
        %v382 = vrot.slane %v377, %v381
        %v383 = vlaneseq
        %v384 = vshrl.u32 %v383, 7
        %v385 = vsub.s32 1, %v384
        %v386 = vrot.slane %v377, %v385
        %v387 = vlaneseq
        %v388 = vshrl.u32 %v387, 7
        %v389 = vsub.s32 2, %v388
        %v390 = vrot.slane %v377, %v389
        %v391 = vlaneseq
        %v392 = vshrl.u32 %v391, 7
        %v393 = vsub.s32 3, %v392
        %v394 = vrot.slane %v377, %v393
        %v431 = vunpack.c.l.b16 %v345
        %v432 = vunpack.c.h.b16 %v345
        %v433 = vunpack.c.l.b16 %v346
        %v434 = vunpack.c.h.b16 %v346
        %v435 = vunpack.c.l.b16 %v347
        %v436 = vunpack.c.h.b16 %v347
        %v437 = vunpack.c.l.b16 %v348
        %v438 = vunpack.c.h.b16 %v348
        %v439 = vunpack.c.l.b16 %v349
        %v440 = vunpack.c.h.b16 %v349
        %v441 = vunpack.c.l.b16 %v350
        %v442 = vunpack.c.h.b16 %v350
        %v443 = vunpack.c.l.b16 %v351
        %v444 = vunpack.c.h.b16 %v351
        %v445 = vunpack.c.l.b16 %v352
        %v446 = vunpack.c.h.b16 %v352
        %v447 = vunpack.c.l.b16 %v353
        %v448 = vunpack.c.h.b16 %v353
        %v449 = vunpack.c.l.b16 %v354
        %v450 = vunpack.c.h.b16 %v354
        %v451 = vunpack.c.l.b16 %v355
        %v452 = vunpack.c.h.b16 %v355
        %v453 = vunpack.c.l.b16 %v356
        %v454 = vunpack.c.h.b16 %v356
        %v455 = vunpack.c.l.b16 %v357
        %v456 = vunpack.c.h.b16 %v357
        %v457 = vunpack.c.l.b16 %v358
        %v458 = vunpack.c.h.b16 %v358
        %v459 = vunpack.c.l.b16 %v359
        %v460 = vunpack.c.h.b16 %v359
        %v461 = vunpack.c.l.b16 %v360
        %v462 = vunpack.c.h.b16 %v360
        %v463 = vunpack.c.l.b16 %v361
        %v464 = vunpack.c.h.b16 %v361
        %v465 = vunpack.c.l.b16 %v362
        %v466 = vunpack.c.h.b16 %v362
        %v467 = vunpack.c.l.b16 %v363
        %v468 = vunpack.c.h.b16 %v363
        %v469 = vunpack.c.l.b16 %v364
        %v470 = vunpack.c.h.b16 %v364
        %v471 = vunpack.c.l.b16 %v365
        %v472 = vunpack.c.h.b16 %v365
        %v473 = vunpack.c.l.b16 %v366
        %v474 = vunpack.c.h.b16 %v366
        %v475 = vunpack.c.l.b16 %v367
        %v476 = vunpack.c.h.b16 %v367
        %v477 = vunpack.c.l.b16 %v368
        %v478 = vunpack.c.h.b16 %v368
        %v479 = vunpack.c.l.b16 %v369
        %v480 = vunpack.c.h.b16 %v369
        %v481 = vunpack.c.l.b16 %v370
        %v482 = vunpack.c.h.b16 %v370
        %v483 = vunpack.c.l.b16 %v371
        %v484 = vunpack.c.h.b16 %v371
        %v485 = vunpack.c.l.b16 %v372
        %v486 = vunpack.c.h.b16 %v372
        %v487 = vunpack.c.l.b16 %v373
        %v488 = vunpack.c.h.b16 %v373
        %v489 = vunpack.c.l.b16 %v374
        %v490 = vunpack.c.h.b16 %v374
        %v491 = vunpack.c.l.b16 %v375
        %v492 = vunpack.c.h.b16 %v375
        %v493 = vunpack.c.l.b16 %v376
        %v494 = vunpack.c.h.b16 %v376
        %v495 = vpack.c.b16 %v435, %v431
        %v496 = vpack.c.b16 %v436, %v432
        %v497 = vpack.c.b16 %v437, %v433
        %v498 = vpack.c.b16 %v438, %v434
        %v499 = vpack.c.b16 %v443, %v439
        %v500 = vpack.c.b16 %v444, %v440
        %v501 = vpack.c.b16 %v445, %v441
        %v502 = vpack.c.b16 %v446, %v442
        %v503 = vpack.c.b16 %v451, %v447
        %v504 = vpack.c.b16 %v452, %v448
        %v505 = vpack.c.b16 %v453, %v449
        %v506 = vpack.c.b16 %v454, %v450
        %v507 = vpack.c.b16 %v459, %v455
        %v508 = vpack.c.b16 %v460, %v456
        %v509 = vpack.c.b16 %v461, %v457
        %v510 = vpack.c.b16 %v462, %v458
        %v511 = vpack.c.b16 %v467, %v463
        %v512 = vpack.c.b16 %v468, %v464
        %v513 = vpack.c.b16 %v469, %v465
        %v514 = vpack.c.b16 %v470, %v466
        %v515 = vpack.c.b16 %v475, %v471
        %v516 = vpack.c.b16 %v476, %v472
        %v517 = vpack.c.b16 %v477, %v473
        %v518 = vpack.c.b16 %v478, %v474
        %v519 = vpack.c.b16 %v483, %v479
        %v520 = vpack.c.b16 %v484, %v480
        %v521 = vpack.c.b16 %v485, %v481
        %v522 = vpack.c.b16 %v486, %v482
        %v523 = vpack.c.b16 %v491, %v487
        %v524 = vpack.c.b16 %v492, %v488
        %v525 = vpack.c.b16 %v493, %v489
        %v526 = vpack.c.b16 %v494, %v490
        %559 = vmatprep.subr.bf16.mxu0 %v496
        %560 = vmatpush1.bf16.msra.mxu0 %v495
        %561 = vmatprep.subr.bf16.mxu0 %v500
        %562 = vmatpush1.bf16.msra.mxu0 %v499
        %563 = vmatprep.subr.bf16.mxu0 %v504
        %564 = vmatpush1.bf16.msra.mxu0 %v503
        %565 = vmatprep.subr.bf16.mxu0 %v508
        %566 = vmatpush1.bf16.msra.mxu0 %v507
        %567 = vmatprep.subr.bf16.mxu0 %v512
        %568 = vmatpush1.bf16.msra.mxu0 %v511
        %569 = vmatprep.subr.bf16.mxu0 %v516
        %570 = vmatpush1.bf16.msra.mxu0 %v515
        %571 = vmatprep.subr.bf16.mxu0 %v520
        %572 = vmatpush1.bf16.msra.mxu0 %v519
        %573 = vmatprep.subr.bf16.mxu0 %v524
        %574 = vmatpush1.bf16.msra.mxu0 %v523
        %575 = vmatprep.subr.bf16.mxu0 0
        %576 = vmatpush1.bf16.msra.mxu0 0
        %577 = vmatprep.subr.bf16.mxu0 0
        %578 = vmatpush1.bf16.msra.mxu0 0
        %579 = vmatprep.subr.bf16.mxu0 0
        %580 = vmatpush1.bf16.msra.mxu0 0
        %581 = vmatprep.subr.bf16.mxu0 0
        %582 = vmatpush1.bf16.msra.mxu0 0
        %583 = vmatprep.subr.bf16.mxu0 0
        %584 = vmatpush1.bf16.msra.mxu0 0
        %585 = vmatprep.subr.bf16.mxu0 0
        %586 = vmatpush1.bf16.msra.mxu0 0
        %587 = vmatprep.subr.bf16.mxu0 0
        %588 = vmatpush1.bf16.msra.mxu0 0
        %589 = vmatprep.subr.bf16.mxu0 0
        %590 = vmatpush1.bf16.msra.mxu0 0
        %591 = vmatprep.mubr.bf16.mxu0 0
        %592 = vmatmul.mubr.bf16.gmra.mrb[0].mxu0 %v344
        %v593 = vpop.f32.mrb[0].mxu0
        %v594 = vadd.f32 %v382, %v593
        %v595 = vpop.f32.mrb[0].mxu0
        %v596 = vadd.f32 %v386, %v595
        %v597 = vpop.f32.mrb[0].mxu0
        %v598 = vadd.f32 %v382, %v597
        %v599 = vpop.f32.mrb[0].mxu0
        %v600 = vadd.f32 %v386, %v599
        %601 = vdwg.mxu0
        %602 = vmatprep.subr.bf16.mxu0 %v498
        %603 = vmatpush1.bf16.msra.mxu0 %v497
        %604 = vmatprep.subr.bf16.mxu0 %v502
        %605 = vmatpush1.bf16.msra.mxu0 %v501
        %606 = vmatprep.subr.bf16.mxu0 %v506
        %607 = vmatpush1.bf16.msra.mxu0 %v505
        %608 = vmatprep.subr.bf16.mxu0 %v510
        %609 = vmatpush1.bf16.msra.mxu0 %v509
        %610 = vmatprep.subr.bf16.mxu0 %v514
        %611 = vmatpush1.bf16.msra.mxu0 %v513
        %612 = vmatprep.subr.bf16.mxu0 %v518
        %613 = vmatpush1.bf16.msra.mxu0 %v517
        %614 = vmatprep.subr.bf16.mxu0 %v522
        %615 = vmatpush1.bf16.msra.mxu0 %v521
        %616 = vmatprep.subr.bf16.mxu0 %v526
        %617 = vmatpush1.bf16.msra.mxu0 %v525
        %618 = vmatprep.subr.bf16.mxu0 0
        %619 = vmatpush1.bf16.msra.mxu0 0
        %620 = vmatprep.subr.bf16.mxu0 0
        %621 = vmatpush1.bf16.msra.mxu0 0
        %622 = vmatprep.subr.bf16.mxu0 0
        %623 = vmatpush1.bf16.msra.mxu0 0
        %624 = vmatprep.subr.bf16.mxu0 0
        %625 = vmatpush1.bf16.msra.mxu0 0
        %626 = vmatprep.subr.bf16.mxu0 0
        %627 = vmatpush1.bf16.msra.mxu0 0
        %628 = vmatprep.subr.bf16.mxu0 0
        %629 = vmatpush1.bf16.msra.mxu0 0
        %630 = vmatprep.subr.bf16.mxu0 0
        %631 = vmatpush1.bf16.msra.mxu0 0
        %632 = vmatprep.subr.bf16.mxu0 0
        %633 = vmatpush1.bf16.msra.mxu0 0
        %634 = vmatprep.mubr.bf16.mxu0 0
        %635 = vmatmul.mubr.bf16.gmra.mrb[0].mxu0 %v344
        %v636 = vpop.f32.mrb[0].mxu0
        %v637 = vadd.f32 %v390, %v636
        %v638 = vpop.f32.mrb[0].mxu0
        %v639 = vadd.f32 %v394, %v638
        %v640 = vpop.f32.mrb[0].mxu0
        %v641 = vadd.f32 %v390, %v640
        %v642 = vpop.f32.mrb[0].mxu0
        %v643 = vadd.f32 %v394, %v642
        %644 = vdwg.mxu0
        %v645 = vmax.f32 %v594, 0.0
        %v646 = vmax.f32 %v596, 0.0
        %v647 = vmax.f32 %v637, 0.0
        %v648 = vmax.f32 %v639, 0.0
        %v649 = vmax.f32 %v598, 0.0
        %v650 = vmax.f32 %v600, 0.0
        %v651 = vmax.f32 %v641, 0.0
        %v652 = vmax.f32 %v643, 0.0
        %v653 = vmin.f32 %v645, 6.0
        %v654 = vmin.f32 %v646, 6.0
        %v655 = vmin.f32 %v647, 6.0
        %v656 = vmin.f32 %v648, 6.0
        %v657 = vmin.f32 %v649, 6.0
        %v658 = vmin.f32 %v650, 6.0
        %v659 = vmin.f32 %v651, 6.0
        %v660 = vmin.f32 %v652, 6.0
        %v661 = vlaneseq
        %v662 = vshrl.u32 %v661, 7
        %v663 = vadd.s32 %v662, 8
        %v664 = vlaneseq
        %v665 = vand.u32 %v664, 127
        %v666 = vadd.s32 %v665, 128
        %v667 = vadd.s32 %v665, 256
        %v668 = vadd.s32 %v665, 384
        %vm669 = vcmp.ge.s32.totalorder %v665, 32
        %vm670 = vcmp.ge.s32.totalorder %v666, 32
        %vm671 = vcmp.ge.s32.totalorder %v667, 32
        %vm672 = vcmp.ge.s32.totalorder %v668, 32
        %vm673 = vcmp.lt.s32.totalorder %v665, 480
        %vm674 = vcmp.lt.s32.totalorder %v666, 480
        %vm675 = vcmp.lt.s32.totalorder %v667, 480
        %vm676 = vcmp.lt.s32.totalorder %v668, 480
        %vm677 = vcmp.ge.s32.totalorder %v662, 1
        %vm678 = vcmp.ge.s32.totalorder %v663, 1
        %vm679 = vcmp.le.s32.totalorder %v662, 14
        %vm680 = vcmp.le.s32.totalorder %v663, 14
        %683 = vrot.lane.b32.xlu0 %v656, 32
        %v684 = vpop.permute.xlu0 %683
        %685 = vrot.lane.b32.xlu0 %v660, 32
        %v686 = vpop.permute.xlu0 %685
        %695 = vrot.lane.b32.xlu0 %v653, 32
        %v696 = vpop.permute.xlu0 %695
        %697 = vrot.lane.b32.xlu0 %v654, 32
        %v698 = vpop.permute.xlu0 %697
        %699 = vrot.lane.b32.xlu0 %v655, 32
        %v700 = vpop.permute.xlu0 %699
        %701 = vrot.lane.b32.xlu0 %v657, 32
        %v702 = vpop.permute.xlu0 %701
        %703 = vrot.lane.b32.xlu0 %v658, 32
        %v704 = vpop.permute.xlu0 %703
        %705 = vrot.lane.b32.xlu0 %v659, 32
        %v706 = vpop.permute.xlu0 %705
        %vm707 = vcmask 261120
        %v708 = vsel %vm707, %v696, %v698
        %v709 = vsel %vm707, %v698, %v700
        %v710 = vsel %vm707, %v700, %v684
        %v711 = vsel %vm707, %v702, %v704
        %v712 = vsel %vm707, %v704, %v706
        %v713 = vsel %vm707, %v706, %v686
        %v722 = vsel %vm707, %v684, %v696
        %v723 = vsel %vm707, %v686, %v702
        %v724 = vsel %vm669, %v722, 0.0
        %v725 = vsel %vm670, %v708, 0.0
        %v726 = vsel %vm671, %v709, 0.0
        %v727 = vsel %vm672, %v710, 0.0
        %v728 = vsel %vm669, %v723, 0.0
        %v729 = vsel %vm670, %v711, 0.0
        %v730 = vsel %vm671, %v712, 0.0
        %v731 = vsel %vm672, %v713, 0.0
        %v736 = vrot.slane %v728, 7
        %v737 = vrot.slane %v729, 7
        %v738 = vrot.slane %v730, 7
        %v739 = vrot.slane %v731, 7
        %vm748 = vcmask 1040384
        %v749 = vrot.slane %v724, 7
        %v750 = vrot.slane %v725, 7
        %v751 = vrot.slane %v726, 7
        %v752 = vrot.slane %v727, 7
        %v753 = vsel %vm748, %v749, %v736
        %v754 = vsel %vm748, %v750, %v737
        %v755 = vsel %vm748, %v751, %v738
        %v756 = vsel %vm748, %v752, %v739
        %v765 = vsel %vm748, %v736, %v749
        %v766 = vsel %vm748, %v737, %v750
        %v767 = vsel %vm748, %v738, %v751
        %v768 = vsel %vm748, %v739, %v752
        %v769 = vsel %vm677, %v765, 0.0
        %v770 = vsel %vm677, %v766, 0.0
        %v771 = vsel %vm677, %v767, 0.0
        %v772 = vsel %vm677, %v768, 0.0
        %v773 = vsel %vm678, %v753, 0.0
        %v774 = vsel %vm678, %v754, 0.0
        %v775 = vsel %vm678, %v755, 0.0
        %v776 = vsel %vm678, %v756, 0.0
        %vm777 = vcmask 1046528
        %v778 = vrot.slane %v724, 1
        %v779 = vrot.slane %v728, 1
        %v780 = vsel %vm777, %v778, %v779
        %v781 = vrot.slane %v725, 1
        %v782 = vrot.slane %v729, 1
        %v783 = vsel %vm777, %v781, %v782
        %v784 = vrot.slane %v726, 1
        %v785 = vrot.slane %v730, 1
        %v786 = vsel %vm777, %v784, %v785
        %v787 = vrot.slane %v727, 1
        %v788 = vrot.slane %v731, 1
        %v789 = vsel %vm777, %v787, %v788
        %v802 = vsel %vm777, %v779, %v778
        %v803 = vsel %vm777, %v782, %v781
        %v804 = vsel %vm777, %v785, %v784
        %v805 = vsel %vm777, %v788, %v787
        %v806 = vsel %vm679, %v780, 0.0
        %v807 = vsel %vm679, %v783, 0.0
        %v808 = vsel %vm679, %v786, 0.0
        %v809 = vsel %vm679, %v789, 0.0
        %v810 = vsel %vm680, %v802, 0.0
        %v811 = vsel %vm680, %v803, 0.0
        %v812 = vsel %vm680, %v804, 0.0
        %v813 = vsel %vm680, %v805, 0.0
        %v814 = vld [vmem:[#allocation7] ss:$8 sm:$0xf]
        %v816 = vlaneseq
        %v817 = vshrl.u32 %v816, 7
        %v818 = vsub.s32 0, %v817
        %v819 = vrot.slane %v814, %v818
        %v820 = vlaneseq
        %v821 = vshrl.u32 %v820, 7
        %v822 = vsub.s32 1, %v821
        %v823 = vrot.slane %v814, %v822
        %v824 = vlaneseq
        %v825 = vshrl.u32 %v824, 7
        %v826 = vsub.s32 2, %v825
        %v827 = vrot.slane %v814, %v826
        %v828 = vlaneseq
        %v829 = vshrl.u32 %v828, 7
        %v830 = vsub.s32 3, %v829
        %v831 = vrot.slane %v814, %v830
        %v836 = vmul.f32 %v769, %v819
        %v837 = vmul.f32 %v770, %v823
        %v838 = vmul.f32 %v771, %v827
        %v839 = vmul.f32 %v772, %v831
        %v840 = vmul.f32 %v773, %v819
        %v841 = vmul.f32 %v774, %v823
        %v842 = vmul.f32 %v775, %v827
        %v843 = vmul.f32 %v776, %v831
        %s844 = scalar_lea.vmem [#allocation7], 3
        %v845 = vld [vmem:[%s844] ss:$8 sm:$0xf]
        %v847 = vlaneseq
        %v848 = vshrl.u32 %v847, 7
        %v849 = vsub.s32 0, %v848
        %v850 = vrot.slane %v845, %v849
        %v851 = vlaneseq
        %v852 = vshrl.u32 %v851, 7
        %v853 = vsub.s32 1, %v852
        %v854 = vrot.slane %v845, %v853
        %v855 = vlaneseq
        %v856 = vshrl.u32 %v855, 7
        %v857 = vsub.s32 2, %v856
        %v858 = vrot.slane %v845, %v857
        %v859 = vlaneseq
        %v860 = vshrl.u32 %v859, 7
        %v861 = vsub.s32 3, %v860
        %v862 = vrot.slane %v845, %v861
        %v867 = vmul.f32 %v724, %v850
        %v868 = vmul.f32 %v725, %v854
        %v869 = vmul.f32 %v726, %v858
        %v870 = vmul.f32 %v727, %v862
        %v871 = vmul.f32 %v728, %v850
        %v872 = vmul.f32 %v729, %v854
        %v873 = vmul.f32 %v730, %v858
        %v874 = vmul.f32 %v731, %v862
        %v875 = vadd.f32 %v836, %v867
        %v876 = vadd.f32 %v837, %v868
        %v877 = vadd.f32 %v838, %v869
        %v878 = vadd.f32 %v839, %v870
        %v879 = vadd.f32 %v840, %v871
        %v880 = vadd.f32 %v841, %v872
        %v881 = vadd.f32 %v842, %v873
        %v882 = vadd.f32 %v843, %v874
        %s883 = scalar_lea.vmem [#allocation7], 6
        %v884 = vld [vmem:[%s883] ss:$8 sm:$0xf]
        %v886 = vlaneseq
        %v887 = vshrl.u32 %v886, 7
        %v888 = vsub.s32 0, %v887
        %v889 = vrot.slane %v884, %v888
        %v890 = vlaneseq
        %v891 = vshrl.u32 %v890, 7
        %v892 = vsub.s32 1, %v891
        %v893 = vrot.slane %v884, %v892
        %v894 = vlaneseq
        %v895 = vshrl.u32 %v894, 7
        %v896 = vsub.s32 2, %v895
        %v897 = vrot.slane %v884, %v896
        %v898 = vlaneseq
        %v899 = vshrl.u32 %v898, 7
        %v900 = vsub.s32 3, %v899
        %v901 = vrot.slane %v884, %v900
        %v906 = vmul.f32 %v806, %v889
        %v907 = vmul.f32 %v807, %v893
        %v908 = vmul.f32 %v808, %v897
        %v909 = vmul.f32 %v809, %v901
        %v910 = vmul.f32 %v810, %v889
        %v911 = vmul.f32 %v811, %v893
        %v912 = vmul.f32 %v812, %v897
        %v913 = vmul.f32 %v813, %v901
        %v914 = vadd.f32 %v875, %v906
        %v915 = vadd.f32 %v876, %v907
        %v916 = vadd.f32 %v877, %v908
        %v917 = vadd.f32 %v878, %v909
        %v918 = vadd.f32 %v879, %v910
        %v919 = vadd.f32 %v880, %v911
        %v920 = vadd.f32 %v881, %v912
        %v921 = vadd.f32 %v882, %v913
        %v922 = vrot.slane %v657, 7
        %v923 = vrot.slane %v658, 7
        %v924 = vrot.slane %v659, 7
        %v925 = vrot.slane %v660, 7
        %v930 = vrot.slane %v653, 7
        %v931 = vrot.slane %v654, 7
        %v932 = vrot.slane %v655, 7
        %v933 = vrot.slane %v656, 7
        %v934 = vsel %vm748, %v930, %v922
        %v935 = vsel %vm748, %v931, %v923
        %v936 = vsel %vm748, %v932, %v924
        %v937 = vsel %vm748, %v933, %v925
        %v946 = vsel %vm748, %v922, %v930
        %v947 = vsel %vm748, %v923, %v931
        %v948 = vsel %vm748, %v924, %v932
        %v949 = vsel %vm748, %v925, %v933
        %v950 = vsel %vm677, %v946, 0.0
        %v951 = vsel %vm677, %v947, 0.0
        %v952 = vsel %vm677, %v948, 0.0
        %v953 = vsel %vm677, %v949, 0.0
        %v954 = vsel %vm678, %v934, 0.0
        %v955 = vsel %vm678, %v935, 0.0
        %v956 = vsel %vm678, %v936, 0.0
        %v957 = vsel %vm678, %v937, 0.0
        %v958 = vrot.slane %v653, 1
        %v959 = vrot.slane %v657, 1
        %v960 = vsel %vm777, %v958, %v959
        %v961 = vrot.slane %v654, 1
        %v962 = vrot.slane %v658, 1
        %v963 = vsel %vm777, %v961, %v962
        %v964 = vrot.slane %v655, 1
        %v965 = vrot.slane %v659, 1
        %v966 = vsel %vm777, %v964, %v965
        %v967 = vrot.slane %v656, 1
        %v968 = vrot.slane %v660, 1
        %v969 = vsel %vm777, %v967, %v968
        %v982 = vsel %vm777, %v959, %v958
        %v983 = vsel %vm777, %v962, %v961
        %v984 = vsel %vm777, %v965, %v964
        %v985 = vsel %vm777, %v968, %v967
        %v986 = vsel %vm679, %v960, 0.0
        %v987 = vsel %vm679, %v963, 0.0
        %v988 = vsel %vm679, %v966, 0.0
        %v989 = vsel %vm679, %v969, 0.0
        %v990 = vsel %vm680, %v982, 0.0
        %v991 = vsel %vm680, %v983, 0.0
        %v992 = vsel %vm680, %v984, 0.0
        %v993 = vsel %vm680, %v985, 0.0
        %s994 = scalar_lea.vmem [#allocation7], 1
        %v995 = vld [vmem:[%s994] ss:$8 sm:$0xf]
        %v997 = vlaneseq
        %v998 = vshrl.u32 %v997, 7
        %v999 = vsub.s32 0, %v998
        %v1000 = vrot.slane %v995, %v999
        %v1001 = vlaneseq
        %v1002 = vshrl.u32 %v1001, 7
        %v1003 = vsub.s32 1, %v1002
        %v1004 = vrot.slane %v995, %v1003
        %v1005 = vlaneseq
        %v1006 = vshrl.u32 %v1005, 7
        %v1007 = vsub.s32 2, %v1006
        %v1008 = vrot.slane %v995, %v1007
        %v1009 = vlaneseq
        %v1010 = vshrl.u32 %v1009, 7
        %v1011 = vsub.s32 3, %v1010
        %v1012 = vrot.slane %v995, %v1011
        %v1017 = vmul.f32 %v950, %v1000
        %v1018 = vmul.f32 %v951, %v1004
        %v1019 = vmul.f32 %v952, %v1008
        %v1020 = vmul.f32 %v953, %v1012
        %v1021 = vmul.f32 %v954, %v1000
        %v1022 = vmul.f32 %v955, %v1004
        %v1023 = vmul.f32 %v956, %v1008
        %v1024 = vmul.f32 %v957, %v1012
        %s1025 = scalar_lea.vmem [#allocation7], 4
        %v1026 = vld [vmem:[%s1025] ss:$8 sm:$0xf]
        %v1028 = vlaneseq
        %v1029 = vshrl.u32 %v1028, 7
        %v1030 = vsub.s32 0, %v1029
        %v1031 = vrot.slane %v1026, %v1030
        %v1032 = vlaneseq
        %v1033 = vshrl.u32 %v1032, 7
        %v1034 = vsub.s32 1, %v1033
        %v1035 = vrot.slane %v1026, %v1034
        %v1036 = vlaneseq
        %v1037 = vshrl.u32 %v1036, 7
        %v1038 = vsub.s32 2, %v1037
        %v1039 = vrot.slane %v1026, %v1038
        %v1040 = vlaneseq
        %v1041 = vshrl.u32 %v1040, 7
        %v1042 = vsub.s32 3, %v1041
        %v1043 = vrot.slane %v1026, %v1042
        %v1048 = vmul.f32 %v653, %v1031
        %v1049 = vmul.f32 %v654, %v1035
        %v1050 = vmul.f32 %v655, %v1039
        %v1051 = vmul.f32 %v656, %v1043
        %v1052 = vmul.f32 %v657, %v1031
        %v1053 = vmul.f32 %v658, %v1035
        %v1054 = vmul.f32 %v659, %v1039
        %v1055 = vmul.f32 %v660, %v1043
        %v1056 = vadd.f32 %v1017, %v1048
        %v1057 = vadd.f32 %v1018, %v1049
        %v1058 = vadd.f32 %v1019, %v1050
        %v1059 = vadd.f32 %v1020, %v1051
        %v1060 = vadd.f32 %v1021, %v1052
        %v1061 = vadd.f32 %v1022, %v1053
        %v1062 = vadd.f32 %v1023, %v1054
        %v1063 = vadd.f32 %v1024, %v1055
        %s1064 = scalar_lea.vmem [#allocation7], 7
        %v1065 = vld [vmem:[%s1064] ss:$8 sm:$0xf]
        %v1067 = vlaneseq
        %v1068 = vshrl.u32 %v1067, 7
        %v1069 = vsub.s32 0, %v1068
        %v1070 = vrot.slane %v1065, %v1069
        %v1071 = vlaneseq
        %v1072 = vshrl.u32 %v1071, 7
        %v1073 = vsub.s32 1, %v1072
        %v1074 = vrot.slane %v1065, %v1073
        %v1075 = vlaneseq
        %v1076 = vshrl.u32 %v1075, 7
        %v1077 = vsub.s32 2, %v1076
        %v1078 = vrot.slane %v1065, %v1077
        %v1079 = vlaneseq
        %v1080 = vshrl.u32 %v1079, 7
        %v1081 = vsub.s32 3, %v1080
        %v1082 = vrot.slane %v1065, %v1081
        %v1087 = vmul.f32 %v986, %v1070
        %v1088 = vmul.f32 %v987, %v1074
        %v1089 = vmul.f32 %v988, %v1078
        %v1090 = vmul.f32 %v989, %v1082
        %v1091 = vmul.f32 %v990, %v1070
        %v1092 = vmul.f32 %v991, %v1074
        %v1093 = vmul.f32 %v992, %v1078
        %v1094 = vmul.f32 %v993, %v1082
        %v1095 = vadd.f32 %v1056, %v1087
        %v1096 = vadd.f32 %v1057, %v1088
        %v1097 = vadd.f32 %v1058, %v1089
        %v1098 = vadd.f32 %v1059, %v1090
        %v1099 = vadd.f32 %v1060, %v1091
        %v1100 = vadd.f32 %v1061, %v1092
        %v1101 = vadd.f32 %v1062, %v1093
        %v1102 = vadd.f32 %v1063, %v1094
        %1103 = vrot.lane.b32.xlu0 %v653, 96
        %v1104 = vpop.permute.xlu0 %1103
        %1105 = vrot.lane.b32.xlu0 %v654, 96
        %v1106 = vpop.permute.xlu0 %1105
        %1107 = vrot.lane.b32.xlu0 %v655, 96
        %v1108 = vpop.permute.xlu0 %1107
        %1109 = vrot.lane.b32.xlu0 %v656, 96
        %v1110 = vpop.permute.xlu0 %1109
        %1111 = vrot.lane.b32.xlu0 %v657, 96
        %v1112 = vpop.permute.xlu0 %1111
        %1113 = vrot.lane.b32.xlu0 %v658, 96
        %v1114 = vpop.permute.xlu0 %1113
        %1115 = vrot.lane.b32.xlu0 %v659, 96
        %v1116 = vpop.permute.xlu0 %1115
        %1117 = vrot.lane.b32.xlu0 %v660, 96
        %v1118 = vpop.permute.xlu0 %1117
        %vm1119 = vcmask 785408
        %v1120 = vsel %vm1119, %v1104, %v1106
        %v1121 = vsel %vm1119, %v1106, %v1108
        %v1122 = vsel %vm1119, %v1108, %v1110
        %v1123 = vsel %vm1119, %v1112, %v1114
        %v1124 = vsel %vm1119, %v1114, %v1116
        %v1125 = vsel %vm1119, %v1116, %v1118
        %v1136 = vsel %vm1119, %v1110, %v1104
        %v1137 = vsel %vm1119, %v1118, %v1112
        %v1138 = vsel %vm673, %v1120, 0.0
        %v1139 = vsel %vm674, %v1121, 0.0
        %v1140 = vsel %vm675, %v1122, 0.0
        %v1141 = vsel %vm676, %v1136, 0.0
        %v1142 = vsel %vm673, %v1123, 0.0
        %v1143 = vsel %vm674, %v1124, 0.0
        %v1144 = vsel %vm675, %v1125, 0.0
        %v1145 = vsel %vm676, %v1137, 0.0
        %v1150 = vrot.slane %v1142, 7
        %v1151 = vrot.slane %v1143, 7
        %v1152 = vrot.slane %v1144, 7
        %v1153 = vrot.slane %v1145, 7
        %v1162 = vrot.slane %v1138, 7
        %v1163 = vrot.slane %v1139, 7
        %v1164 = vrot.slane %v1140, 7
        %v1165 = vrot.slane %v1141, 7
        %v1166 = vsel %vm748, %v1162, %v1150
        %v1167 = vsel %vm748, %v1163, %v1151
        %v1168 = vsel %vm748, %v1164, %v1152
        %v1169 = vsel %vm748, %v1165, %v1153
        %v1178 = vsel %vm748, %v1150, %v1162
        %v1179 = vsel %vm748, %v1151, %v1163
        %v1180 = vsel %vm748, %v1152, %v1164
        %v1181 = vsel %vm748, %v1153, %v1165
        %v1182 = vsel %vm677, %v1178, 0.0
        %v1183 = vsel %vm677, %v1179, 0.0
        %v1184 = vsel %vm677, %v1180, 0.0
        %v1185 = vsel %vm677, %v1181, 0.0
        %v1186 = vsel %vm678, %v1166, 0.0
        %v1187 = vsel %vm678, %v1167, 0.0
        %v1188 = vsel %vm678, %v1168, 0.0
        %v1189 = vsel %vm678, %v1169, 0.0
        %v1190 = vrot.slane %v1138, 1
        %v1191 = vrot.slane %v1142, 1
        %v1192 = vsel %vm777, %v1190, %v1191
        %v1193 = vrot.slane %v1139, 1
        %v1194 = vrot.slane %v1143, 1
        %v1195 = vsel %vm777, %v1193, %v1194
        %v1196 = vrot.slane %v1140, 1
        %v1197 = vrot.slane %v1144, 1
        %v1198 = vsel %vm777, %v1196, %v1197
        %v1199 = vrot.slane %v1141, 1
        %v1200 = vrot.slane %v1145, 1
        %v1201 = vsel %vm777, %v1199, %v1200
        %v1214 = vsel %vm777, %v1191, %v1190
        %v1215 = vsel %vm777, %v1194, %v1193
        %v1216 = vsel %vm777, %v1197, %v1196
        %v1217 = vsel %vm777, %v1200, %v1199
        %v1218 = vsel %vm679, %v1192, 0.0
        %v1219 = vsel %vm679, %v1195, 0.0
        %v1220 = vsel %vm679, %v1198, 0.0
        %v1221 = vsel %vm679, %v1201, 0.0
        %v1222 = vsel %vm680, %v1214, 0.0
        %v1223 = vsel %vm680, %v1215, 0.0
        %v1224 = vsel %vm680, %v1216, 0.0
        %v1225 = vsel %vm680, %v1217, 0.0
        %s1226 = scalar_lea.vmem [#allocation7], 2
        %v1227 = vld [vmem:[%s1226] ss:$8 sm:$0xf]
        %v1229 = vlaneseq
        %v1230 = vshrl.u32 %v1229, 7
        %v1231 = vsub.s32 0, %v1230
        %v1232 = vrot.slane %v1227, %v1231
        %v1233 = vlaneseq
        %v1234 = vshrl.u32 %v1233, 7
        %v1235 = vsub.s32 1, %v1234
        %v1236 = vrot.slane %v1227, %v1235
        %v1237 = vlaneseq
        %v1238 = vshrl.u32 %v1237, 7
        %v1239 = vsub.s32 2, %v1238
        %v1240 = vrot.slane %v1227, %v1239
        %v1241 = vlaneseq
        %v1242 = vshrl.u32 %v1241, 7
        %v1243 = vsub.s32 3, %v1242
        %v1244 = vrot.slane %v1227, %v1243
        %v1249 = vmul.f32 %v1182, %v1232
        %v1250 = vmul.f32 %v1183, %v1236
        %v1251 = vmul.f32 %v1184, %v1240
        %v1252 = vmul.f32 %v1185, %v1244
        %v1253 = vmul.f32 %v1186, %v1232
        %v1254 = vmul.f32 %v1187, %v1236
        %v1255 = vmul.f32 %v1188, %v1240
        %v1256 = vmul.f32 %v1189, %v1244
        %s1257 = scalar_lea.vmem [#allocation7], 5
        %v1258 = vld [vmem:[%s1257] ss:$8 sm:$0xf]
        %v1260 = vlaneseq
        %v1261 = vshrl.u32 %v1260, 7
        %v1262 = vsub.s32 0, %v1261
        %v1263 = vrot.slane %v1258, %v1262
        %v1264 = vlaneseq
        %v1265 = vshrl.u32 %v1264, 7
        %v1266 = vsub.s32 1, %v1265
        %v1267 = vrot.slane %v1258, %v1266
        %v1268 = vlaneseq
        %v1269 = vshrl.u32 %v1268, 7
        %v1270 = vsub.s32 2, %v1269
        %v1271 = vrot.slane %v1258, %v1270
        %v1272 = vlaneseq
        %v1273 = vshrl.u32 %v1272, 7
        %v1274 = vsub.s32 3, %v1273
        %v1275 = vrot.slane %v1258, %v1274
        %v1280 = vmul.f32 %v1138, %v1263
        %v1281 = vmul.f32 %v1139, %v1267
        %v1282 = vmul.f32 %v1140, %v1271
        %v1283 = vmul.f32 %v1141, %v1275
        %v1284 = vmul.f32 %v1142, %v1263
        %v1285 = vmul.f32 %v1143, %v1267
        %v1286 = vmul.f32 %v1144, %v1271
        %v1287 = vmul.f32 %v1145, %v1275
        %v1288 = vadd.f32 %v1249, %v1280
        %v1289 = vadd.f32 %v1250, %v1281
        %v1290 = vadd.f32 %v1251, %v1282
        %v1291 = vadd.f32 %v1252, %v1283
        %v1292 = vadd.f32 %v1253, %v1284
        %v1293 = vadd.f32 %v1254, %v1285
        %v1294 = vadd.f32 %v1255, %v1286
        %v1295 = vadd.f32 %v1256, %v1287
        %s1296 = scalar_lea.vmem [#allocation7], 32
        %v1297 = vld [vmem:[%s1296] ss:$8 sm:$0xf]
        %v1299 = vlaneseq
        %v1300 = vshrl.u32 %v1299, 7
        %v1301 = vsub.s32 0, %v1300
        %v1302 = vrot.slane %v1297, %v1301
        %v1303 = vlaneseq
        %v1304 = vshrl.u32 %v1303, 7
        %v1305 = vsub.s32 1, %v1304
        %v1306 = vrot.slane %v1297, %v1305
        %v1307 = vlaneseq
        %v1308 = vshrl.u32 %v1307, 7
        %v1309 = vsub.s32 2, %v1308
        %v1310 = vrot.slane %v1297, %v1309
        %v1311 = vlaneseq
        %v1312 = vshrl.u32 %v1311, 7
        %v1313 = vsub.s32 3, %v1312
        %v1314 = vrot.slane %v1297, %v1313
        %v1319 = vmul.f32 %v1218, %v1302
        %v1320 = vmul.f32 %v1219, %v1306
        %v1321 = vmul.f32 %v1220, %v1310
        %v1322 = vmul.f32 %v1221, %v1314
        %v1323 = vmul.f32 %v1222, %v1302
        %v1324 = vmul.f32 %v1223, %v1306
        %v1325 = vmul.f32 %v1224, %v1310
        %v1326 = vmul.f32 %v1225, %v1314
        %v1327 = vadd.f32 %v1288, %v1319
        %v1328 = vadd.f32 %v1289, %v1320
        %v1329 = vadd.f32 %v1290, %v1321
        %v1330 = vadd.f32 %v1291, %v1322
        %v1331 = vadd.f32 %v1292, %v1323
        %v1332 = vadd.f32 %v1293, %v1324
        %v1333 = vadd.f32 %v1294, %v1325
        %v1334 = vadd.f32 %v1295, %v1326
        %v1335 = vadd.f32 %v914, %v1095
        %v1336 = vadd.f32 %v915, %v1096
        %v1337 = vadd.f32 %v916, %v1097
        %v1338 = vadd.f32 %v917, %v1098
        %v1339 = vadd.f32 %v918, %v1099
        %v1340 = vadd.f32 %v919, %v1100
        %v1341 = vadd.f32 %v920, %v1101
        %v1342 = vadd.f32 %v921, %v1102
        %v1343 = vadd.f32 %v1335, %v1327
        %v1344 = vadd.f32 %v1336, %v1328
        %v1345 = vadd.f32 %v1337, %v1329
        %v1346 = vadd.f32 %v1338, %v1330
        %v1347 = vadd.f32 %v1339, %v1331
        %v1348 = vadd.f32 %v1340, %v1332
        %v1349 = vadd.f32 %v1341, %v1333
        %v1350 = vadd.f32 %v1342, %v1334
        %v1351 = vld [vmem:[%s4] sm:$0xf]
        %v1353 = vlaneseq
        %v1354 = vshrl.u32 %v1353, 7
        %v1355 = vsub.s32 0, %v1354
        %v1356 = vrot.slane %v1351, %v1355
        %v1357 = vlaneseq
        %v1358 = vshrl.u32 %v1357, 7
        %v1359 = vsub.s32 1, %v1358
        %v1360 = vrot.slane %v1351, %v1359
        %v1361 = vlaneseq
        %v1362 = vshrl.u32 %v1361, 7
        %v1363 = vsub.s32 2, %v1362
        %v1364 = vrot.slane %v1351, %v1363
        %v1365 = vlaneseq
        %v1366 = vshrl.u32 %v1365, 7
        %v1367 = vsub.s32 3, %v1366
        %v1368 = vrot.slane %v1351, %v1367
        %v1373 = vadd.f32 %v1343, %v1356
        %v1374 = vadd.f32 %v1344, %v1360
        %v1375 = vadd.f32 %v1345, %v1364
        %v1376 = vadd.f32 %v1346, %v1368
        %v1377 = vadd.f32 %v1347, %v1356
        %v1378 = vadd.f32 %v1348, %v1360
        %v1379 = vadd.f32 %v1349, %v1364
        %v1380 = vadd.f32 %v1350, %v1368
        %v1381 = vmax.f32 %v1373, 0.0
        %v1382 = vmax.f32 %v1374, 0.0
        %v1383 = vmax.f32 %v1375, 0.0
        %v1384 = vmax.f32 %v1376, 0.0
        %v1385 = vmax.f32 %v1377, 0.0
        %v1386 = vmax.f32 %v1378, 0.0
        %v1387 = vmax.f32 %v1379, 0.0
        %v1388 = vmax.f32 %v1380, 0.0
        %v1389 = vmin.f32 %v1381, 6.0
        %v1390 = vmin.f32 %v1382, 6.0
        %v1391 = vmin.f32 %v1383, 6.0
        %v1392 = vmin.f32 %v1384, 6.0
        %v1393 = vmin.f32 %v1385, 6.0
        %v1394 = vmin.f32 %v1386, 6.0
        %v1395 = vmin.f32 %v1387, 6.0
        %v1396 = vmin.f32 %v1388, 6.0
        %v1397 = vpack.c.bf16 %v1393, %v1389
        %v1398 = vpack.c.bf16 %v1394, %v1390
        %v1399 = vpack.c.bf16 %v1395, %v1391
        %v1400 = vpack.c.bf16 %v1396, %v1392
        %v1401 = vld [vmem:[#allocation8] sm:$0xf]
        %v1402 = vld [vmem:[#allocation8 + $0x4] sm:$0xf]
        %v1403 = vld [vmem:[#allocation8 + $0x8] sm:$0xf]
        %v1404 = vld [vmem:[#allocation8 + $0xc] sm:$0xf]
        %v1405 = vld [vmem:[#allocation8 + $0x10] sm:$0xf]
        %v1406 = vld [vmem:[#allocation8 + $0x14] sm:$0xf]
        %v1407 = vld [vmem:[#allocation8 + $0x18] sm:$0xf]
        %v1408 = vld [vmem:[#allocation8 + $0x1c] sm:$0xf]
        %v1409 = vld [vmem:[#allocation8 + $0x20] sm:$0xf]
        %v1410 = vld [vmem:[#allocation8 + $0x24] sm:$0xf]
        %v1411 = vld [vmem:[#allocation8 + $0x28] sm:$0xf]
        %v1412 = vld [vmem:[#allocation8 + $0x2c] sm:$0xf]
        %v1413 = vld [vmem:[#allocation8 + $0x30] sm:$0xf]
        %v1414 = vld [vmem:[#allocation8 + $0x34] sm:$0xf]
        %v1415 = vld [vmem:[#allocation8 + $0x38] sm:$0xf]
        %v1416 = vld [vmem:[#allocation8 + $0x3c] sm:$0xf]
        %v1417 = vld [vmem:[#allocation8 + $0x40] sm:$0xf]
        %v1418 = vld [vmem:[#allocation8 + $0x44] sm:$0xf]
        %v1419 = vld [vmem:[#allocation8 + $0x48] sm:$0xf]
        %v1420 = vld [vmem:[#allocation8 + $0x4c] sm:$0xf]
        %v1421 = vld [vmem:[#allocation8 + $0x50] sm:$0xf]
        %v1422 = vld [vmem:[#allocation8 + $0x54] sm:$0xf]
        %v1423 = vld [vmem:[#allocation8 + $0x58] sm:$0xf]
        %v1424 = vld [vmem:[#allocation8 + $0x5c] sm:$0xf]
        %v1425 = vld [vmem:[#allocation8 + $0x60] sm:$0xf]
        %v1426 = vld [vmem:[#allocation8 + $0x64] sm:$0xf]
        %v1427 = vld [vmem:[#allocation8 + $0x68] sm:$0xf]
        %v1428 = vld [vmem:[#allocation8 + $0x6c] sm:$0xf]
        %v1429 = vld [vmem:[#allocation8 + $0x70] sm:$0xf]
        %v1430 = vld [vmem:[#allocation8 + $0x74] sm:$0xf]
        %v1431 = vld [vmem:[#allocation8 + $0x78] sm:$0xf]
        %v1432 = vld [vmem:[#allocation8 + $0x7c] sm:$0xf]
        %v1433 = vld [vmem:[#allocation8 + $0x80] sm:$0xf]
        %v1434 = vld [vmem:[#allocation8 + $0x84] sm:$0xf]
        %v1435 = vld [vmem:[#allocation8 + $0x88] sm:$0xf]
        %v1436 = vld [vmem:[#allocation8 + $0x8c] sm:$0xf]
        %v1437 = vld [vmem:[#allocation8 + $0x90] sm:$0xf]
        %v1438 = vld [vmem:[#allocation8 + $0x94] sm:$0xf]
        %v1439 = vld [vmem:[#allocation8 + $0x98] sm:$0xf]
        %v1440 = vld [vmem:[#allocation8 + $0x9c] sm:$0xf]
        %v1441 = vld [vmem:[#allocation8 + $0xa0] sm:$0xf]
        %v1442 = vld [vmem:[#allocation8 + $0xa4] sm:$0xf]
        %v1443 = vld [vmem:[#allocation8 + $0xa8] sm:$0xf]
        %v1444 = vld [vmem:[#allocation8 + $0xac] sm:$0xf]
        %v1445 = vld [vmem:[#allocation8 + $0xb0] sm:$0xf]
        %v1446 = vld [vmem:[#allocation8 + $0xb4] sm:$0xf]
        %v1447 = vld [vmem:[#allocation8 + $0xb8] sm:$0xf]
        %v1448 = vld [vmem:[#allocation8 + $0xbc] sm:$0xf]
        %v1449 = vld [vmem:[#allocation8 + $0xc0] sm:$0xf]
        %v1450 = vld [vmem:[#allocation8 + $0xc4] sm:$0xf]
        %v1451 = vld [vmem:[#allocation8 + $0xc8] sm:$0xf]
        %v1452 = vld [vmem:[#allocation8 + $0xcc] sm:$0xf]
        %v1453 = vld [vmem:[#allocation8 + $0xd0] sm:$0xf]
        %v1454 = vld [vmem:[#allocation8 + $0xd4] sm:$0xf]
        %v1455 = vld [vmem:[#allocation8 + $0xd8] sm:$0xf]
        %v1456 = vld [vmem:[#allocation8 + $0xdc] sm:$0xf]
        %v1457 = vld [vmem:[#allocation8 + $0xe0] sm:$0xf]
        %v1458 = vld [vmem:[#allocation8 + $0xe4] sm:$0xf]
        %v1459 = vld [vmem:[#allocation8 + $0xe8] sm:$0xf]
        %v1460 = vld [vmem:[#allocation8 + $0xec] sm:$0xf]
        %v1461 = vld [vmem:[#allocation8 + $0xf0] sm:$0xf]
        %v1462 = vld [vmem:[#allocation8 + $0xf4] sm:$0xf]
        %v1463 = vld [vmem:[#allocation8 + $0xf8] sm:$0xf]
        %v1464 = vld [vmem:[#allocation8 + $0xfc] sm:$0xf]
        %v1465 = vld [vmem:[%s6] sm:$0x1]
        %v1467 = vlaneseq
        %v1468 = vshrl.u32 %v1467, 7
        %v1469 = vsub.s32 0, %v1468
        %v1470 = vrot.slane %v1465, %v1469
        %v1536 = vunpack.c.l.b16 %v1401
        %v1537 = vunpack.c.l.b16 %v1402
        %v1538 = vunpack.c.l.b16 %v1403
        %v1539 = vunpack.c.l.b16 %v1404
        %v1540 = vunpack.c.l.b16 %v1405
        %v1541 = vunpack.c.l.b16 %v1406
        %v1542 = vunpack.c.l.b16 %v1407
        %v1543 = vunpack.c.l.b16 %v1408
        %v1544 = vunpack.c.l.b16 %v1409
        %v1545 = vunpack.c.l.b16 %v1410
        %v1546 = vunpack.c.l.b16 %v1411
        %v1547 = vunpack.c.l.b16 %v1412
        %v1548 = vunpack.c.l.b16 %v1413
        %v1549 = vunpack.c.l.b16 %v1414
        %v1550 = vunpack.c.l.b16 %v1415
        %v1551 = vunpack.c.l.b16 %v1416
        %v1552 = vunpack.c.l.b16 %v1417
        %v1553 = vunpack.c.l.b16 %v1418
        %v1554 = vunpack.c.l.b16 %v1419
        %v1555 = vunpack.c.l.b16 %v1420
        %v1556 = vunpack.c.l.b16 %v1421
        %v1557 = vunpack.c.l.b16 %v1422
        %v1558 = vunpack.c.l.b16 %v1423
        %v1559 = vunpack.c.l.b16 %v1424
        %v1560 = vunpack.c.l.b16 %v1425
        %v1561 = vunpack.c.l.b16 %v1426
        %v1562 = vunpack.c.l.b16 %v1427
        %v1563 = vunpack.c.l.b16 %v1428
        %v1564 = vunpack.c.l.b16 %v1429
        %v1565 = vunpack.c.l.b16 %v1430
        %v1566 = vunpack.c.l.b16 %v1431
        %v1567 = vunpack.c.l.b16 %v1432
        %v1568 = vunpack.c.l.b16 %v1433
        %v1569 = vunpack.c.l.b16 %v1434
        %v1570 = vunpack.c.l.b16 %v1435
        %v1571 = vunpack.c.l.b16 %v1436
        %v1572 = vunpack.c.l.b16 %v1437
        %v1573 = vunpack.c.l.b16 %v1438
        %v1574 = vunpack.c.l.b16 %v1439
        %v1575 = vunpack.c.l.b16 %v1440
        %v1576 = vunpack.c.l.b16 %v1441
        %v1577 = vunpack.c.l.b16 %v1442
        %v1578 = vunpack.c.l.b16 %v1443
        %v1579 = vunpack.c.l.b16 %v1444
        %v1580 = vunpack.c.l.b16 %v1445
        %v1581 = vunpack.c.l.b16 %v1446
        %v1582 = vunpack.c.l.b16 %v1447
        %v1583 = vunpack.c.l.b16 %v1448
        %v1584 = vunpack.c.l.b16 %v1449
        %v1585 = vunpack.c.l.b16 %v1450
        %v1586 = vunpack.c.l.b16 %v1451
        %v1587 = vunpack.c.l.b16 %v1452
        %v1588 = vunpack.c.l.b16 %v1453
        %v1589 = vunpack.c.l.b16 %v1454
        %v1590 = vunpack.c.l.b16 %v1455
        %v1591 = vunpack.c.l.b16 %v1456
        %v1592 = vunpack.c.l.b16 %v1457
        %v1593 = vunpack.c.l.b16 %v1458
        %v1594 = vunpack.c.l.b16 %v1459
        %v1595 = vunpack.c.l.b16 %v1460
        %v1596 = vunpack.c.l.b16 %v1461
        %v1597 = vunpack.c.l.b16 %v1462
        %v1598 = vunpack.c.l.b16 %v1463
        %v1599 = vunpack.c.l.b16 %v1464
        %v1600 = vpack.c.b16 %v1537, %v1536
        %v1601 = vpack.c.b16 %v1539, %v1538
        %v1602 = vpack.c.b16 %v1541, %v1540
        %v1603 = vpack.c.b16 %v1543, %v1542
        %v1604 = vpack.c.b16 %v1545, %v1544
        %v1605 = vpack.c.b16 %v1547, %v1546
        %v1606 = vpack.c.b16 %v1549, %v1548
        %v1607 = vpack.c.b16 %v1551, %v1550
        %v1608 = vpack.c.b16 %v1553, %v1552
        %v1609 = vpack.c.b16 %v1555, %v1554
        %v1610 = vpack.c.b16 %v1557, %v1556
        %v1611 = vpack.c.b16 %v1559, %v1558
        %v1612 = vpack.c.b16 %v1561, %v1560
        %v1613 = vpack.c.b16 %v1563, %v1562
        %v1614 = vpack.c.b16 %v1565, %v1564
        %v1615 = vpack.c.b16 %v1567, %v1566
        %v1616 = vpack.c.b16 %v1569, %v1568
        %v1617 = vpack.c.b16 %v1571, %v1570
        %v1618 = vpack.c.b16 %v1573, %v1572
        %v1619 = vpack.c.b16 %v1575, %v1574
        %v1620 = vpack.c.b16 %v1577, %v1576
        %v1621 = vpack.c.b16 %v1579, %v1578
        %v1622 = vpack.c.b16 %v1581, %v1580
        %v1623 = vpack.c.b16 %v1583, %v1582
        %v1624 = vpack.c.b16 %v1585, %v1584
        %v1625 = vpack.c.b16 %v1587, %v1586
        %v1626 = vpack.c.b16 %v1589, %v1588
        %v1627 = vpack.c.b16 %v1591, %v1590
        %v1628 = vpack.c.b16 %v1593, %v1592
        %v1629 = vpack.c.b16 %v1595, %v1594
        %v1630 = vpack.c.b16 %v1597, %v1596
        %v1631 = vpack.c.b16 %v1599, %v1598
        %1664 = vmatprep.subr.bf16.mxu0 0
        %1665 = vmatpush1.bf16.msra.mxu0 %v1600
        %1666 = vmatprep.subr.bf16.mxu0 0
        %1667 = vmatpush1.bf16.msra.mxu0 %v1601
        %1668 = vmatprep.subr.bf16.mxu0 0
        %1669 = vmatpush1.bf16.msra.mxu0 %v1602
        %1670 = vmatprep.subr.bf16.mxu0 0
        %1671 = vmatpush1.bf16.msra.mxu0 %v1603
        %1672 = vmatprep.subr.bf16.mxu0 0
        %1673 = vmatpush1.bf16.msra.mxu0 %v1604
        %1674 = vmatprep.subr.bf16.mxu0 0
        %1675 = vmatpush1.bf16.msra.mxu0 %v1605
        %1676 = vmatprep.subr.bf16.mxu0 0
        %1677 = vmatpush1.bf16.msra.mxu0 %v1606
        %1678 = vmatprep.subr.bf16.mxu0 0
        %1679 = vmatpush1.bf16.msra.mxu0 %v1607
        %1680 = vmatprep.subr.bf16.mxu0 0
        %1681 = vmatpush1.bf16.msra.mxu0 %v1608
        %1682 = vmatprep.subr.bf16.mxu0 0
        %1683 = vmatpush1.bf16.msra.mxu0 %v1609
        %1684 = vmatprep.subr.bf16.mxu0 0
        %1685 = vmatpush1.bf16.msra.mxu0 %v1610
        %1686 = vmatprep.subr.bf16.mxu0 0
        %1687 = vmatpush1.bf16.msra.mxu0 %v1611
        %1688 = vmatprep.subr.bf16.mxu0 0
        %1689 = vmatpush1.bf16.msra.mxu0 %v1612
        %1690 = vmatprep.subr.bf16.mxu0 0
        %1691 = vmatpush1.bf16.msra.mxu0 %v1613
        %1692 = vmatprep.subr.bf16.mxu0 0
        %1693 = vmatpush1.bf16.msra.mxu0 %v1614
        %1694 = vmatprep.subr.bf16.mxu0 0
        %1695 = vmatpush1.bf16.msra.mxu0 %v1615
        %1696 = vmatprep.mubr.bf16.mxu0 %v1398
        %1697 = vmatmul.mubr.bf16.gmra.mrb[0].mxu0 %v1397
        %v1698 = vpop.f32.mrb[0].mxu0
        %v1699 = vadd.f32 %v1470, %v1698
        %v1700 = vpop.f32.mrb[0].mxu0
        %v1701 = vpop.f32.mrb[0].mxu0
        %v1702 = vadd.f32 %v1470, %v1701
        %v1703 = vpop.f32.mrb[0].mxu0
        %1704 = vdwg.mxu0
        %1705 = vmatprep.subr.bf16.mxu0 0
        %1706 = vmatpush1.bf16.msra.mxu0 %v1616
        %1707 = vmatprep.subr.bf16.mxu0 0
        %1708 = vmatpush1.bf16.msra.mxu0 %v1617
        %1709 = vmatprep.subr.bf16.mxu0 0
        %1710 = vmatpush1.bf16.msra.mxu0 %v1618
        %1711 = vmatprep.subr.bf16.mxu0 0
        %1712 = vmatpush1.bf16.msra.mxu0 %v1619
        %1713 = vmatprep.subr.bf16.mxu0 0
        %1714 = vmatpush1.bf16.msra.mxu0 %v1620
        %1715 = vmatprep.subr.bf16.mxu0 0
        %1716 = vmatpush1.bf16.msra.mxu0 %v1621
        %1717 = vmatprep.subr.bf16.mxu0 0
        %1718 = vmatpush1.bf16.msra.mxu0 %v1622
        %1719 = vmatprep.subr.bf16.mxu0 0
        %1720 = vmatpush1.bf16.msra.mxu0 %v1623
        %1721 = vmatprep.subr.bf16.mxu0 0
        %1722 = vmatpush1.bf16.msra.mxu0 %v1624
        %1723 = vmatprep.subr.bf16.mxu0 0
        %1724 = vmatpush1.bf16.msra.mxu0 %v1625
        %1725 = vmatprep.subr.bf16.mxu0 0
        %1726 = vmatpush1.bf16.msra.mxu0 %v1626
        %1727 = vmatprep.subr.bf16.mxu0 0
        %1728 = vmatpush1.bf16.msra.mxu0 %v1627
        %1729 = vmatprep.subr.bf16.mxu0 0
        %1730 = vmatpush1.bf16.msra.mxu0 %v1628
        %1731 = vmatprep.subr.bf16.mxu0 0
        %1732 = vmatpush1.bf16.msra.mxu0 %v1629
        %1733 = vmatprep.subr.bf16.mxu0 0
        %1734 = vmatpush1.bf16.msra.mxu0 %v1630
        %1735 = vmatprep.subr.bf16.mxu0 0
        %1736 = vmatpush1.bf16.msra.mxu0 %v1631
        %1737 = vmatprep.mubr.bf16.mxu0 %v1400
        %1738 = vmatmul.mubr.bf16.gmra.mrb[0].mxu0 %v1399
        %v1739 = vpop.f32.mrb[0].mxu0
        %v1740 = vadd.f32 %v1699, %v1739
        %v1741 = vpop.f32.mrb[0].mxu0
        %v1742 = vpop.f32.mrb[0].mxu0
        %v1743 = vadd.f32 %v1702, %v1742
        %v1744 = vpop.f32.mrb[0].mxu0
        %1745 = vdwg.mxu0
        %v1746 = vadd.f32 %v1740, %v342
        %v1747 = vadd.f32 %v1743, %v343
        %1748 = vst [vmem:[%s340] sm:$0xff] %v1746
        %1749 = vst [vmem:[%s340 + $0x8] sm:$0xff] %v1747
        %s1750 = sand.u32 %s186, 1
        %s1751 = scalar_lea.sflag [#allocation4], %s1750
        %s1752 = sand.u32 %s186, 1
        %s1753 = smul.addr %s1752, 16
        %s1754 = scalar_lea.vmem [#allocation10], %s1753
        // Predicated region
        $region65: #{tpu_custom_call.1} parent=47 // pred_check
          %p1755 = pneg %p196
        $region66: #{tpu_custom_call.1} parent=47 // pred_check_branch
          %1757 = sbr.rel (%p1755) target = $region68
        $region67: #{tpu_custom_call.1} parent=47 // pred_region
          %s1759 = ssub.s32 256, 256
          %1760 = vsyncadd %s1751, %s1759
          %s1761 = smul.addr %s26, 2
          %s1762 = smul.addr %s1761, 128
          %s1763 = scalar_lea.hbm %s7, %s1762
          %s1764 = sshll.u32 %s1754, 4
          %s1765 = int_to_ptr.vmem [resolvable:$true] %s1764
          %1770 = dma.vmem_to_hbm [thread:$0]  %s1765, 256, %s1763, %s1751, 128, 128, 8
        $region68: #{tpu_custom_call.1} parent=47 // pred_fallthru
          _
      $region48: #{tpu_custom_call.1} parent=5 // pred_fallthru
        _
      %p1771 = scmp.le.s32.totalorder 2, %s21
      // Predicated region
      $region69: #{tpu_custom_call.1} parent=5 // pred_check
        %p1772 = pneg %p1771
      $region70: #{tpu_custom_call.1} parent=5 // pred_check_branch
        %1774 = sbr.rel (%p1772) target = $region72
      $region71: #{tpu_custom_call.1} parent=5 // pred_region
        %s1775 = ssub.s32 %s21, 2
        // Predicated region
        $region73: #{tpu_custom_call.1} parent=71 // pred_check
          %p1776 = pneg %p202
        $region74: #{tpu_custom_call.1} parent=71 // pred_check_branch
          %1778 = sbr.rel (%p1776) target = $region76
        $region75: #{tpu_custom_call.1} parent=71 // pred_region
          %s1779 = sand.u32 %s187, 1
          %s1780 = scalar_lea.sflag [#allocation4], %s1779
          %s1781 = sand.u32 %s187, 1
          %s1782 = smul.addr %s1781, 16
          %s1783 = scalar_lea.vmem [#allocation10], %s1782
          %1784 = dma.done %s1780, 256
        $region76: #{tpu_custom_call.1} parent=71 // pred_fallthru
          _
      $region72: #{tpu_custom_call.1} parent=5 // pred_fallthru
        _
    $region6: #{tpu_custom_call.1} parent=1 // loop_footer
      %s25 = sadd.s32 1, %s21
    $region7: #{tpu_custom_call.1} parent=1 // loop_footer_branch
      %20 = sbr.rel target = $region3
    $region8: #{tpu_custom_call.1} parent=1 // loop_exit
      _
    %1785 = vsyncpa [#allocation3], 1
    %s1786 = scalar_lea.sflag [#allocation3], 1
    %1787 = vsyncpa %s1786, 1
    %1788 = vsyncpa [#allocation6], 1
    %1789 = vsyncpa [#allocation9], 1
    %1790 = vsyncpa [#allocation4], 1
    %s1791 = scalar_lea.sflag [#allocation4], 1
    %1792 = vsyncpa %s1791, 1

</llo_original>
